<compile_context>
chip_gen: v7x
topology: tpu7x:2x2x1
jax: 0.10.0
libtpu: 0.0.40
codegen_flags: <defaults>
</compile_context>

<pallas_src>
import functools
import math

import jax
import jax.numpy as jnp
from jax import lax
from jax.experimental import pallas as pl
from jax.experimental.pallas import tpu as pltpu

BF16 = jnp.bfloat16
F32 = jnp.float32

VMEM_LIMIT = 48 * 1024 * 1024  # explicit scoped-VMEM limit (headroom on v7x)


# ----------------------------------------------------------------------------
# Small helpers
# ----------------------------------------------------------------------------
def _full_spec(shape):
    """BlockSpec covering the whole array, resident across all grid steps."""
    nd = len(shape)
    return pl.BlockSpec(shape, lambda i, _nd=nd: (0,) * _nd)


def _round_up(x, m):
    return ((x + m - 1) // m) * m


def _pad_cols(a, width):
    if a.shape[-1] >= width:
        return a
    pad = [(0, 0)] * (a.ndim - 1) + [(0, width - a.shape[-1])]
    return jnp.pad(a, pad)


def _pad_rows_w(w, rows):
    if w.shape[0] >= rows:
        return w
    return jnp.pad(w, [(0, rows - w.shape[0])] + [(0, 0)] * (w.ndim - 1))


def _pad_rows_to(a, rows):
    if a.shape[0] == rows:
        return a
    return jnp.pad(a, [(0, rows - a.shape[0])] + [(0, 0)] * (a.ndim - 1))


# ----------------------------------------------------------------------------
# Kernel 1: fused modality embedding + PMA (num_seeds=1, set of 2 modalities)
# ----------------------------------------------------------------------------
def _pma_embed_kernel(x_ref, ak0_ref, ak1_ref, av0_ref, av1_ref,
                      ck0_ref, ck1_ref, cv0_ref, cv1_ref,
                      q_ref, wo_ref, bo_ref, msum_ref, mexp_ref,
                      o_ref, *, scale):
    x = x_ref[...]                                               # (tile, dim_x) bf16
    k0 = jnp.dot(x, ak0_ref[...], preferred_element_type=F32) + ck0_ref[...]
    k1 = jnp.dot(x, ak1_ref[...], preferred_element_type=F32) + ck1_ref[...]
    v0 = jnp.dot(x, av0_ref[...], preferred_element_type=F32) + cv0_ref[...]
    v1 = jnp.dot(x, av1_ref[...], preferred_element_type=F32) + cv1_ref[...]

    q = q_ref[...]                                               # (1, D) seed @ Wq + bq

    # Per-head score difference s0 - s1 (softmax over 2 items == sigmoid(diff)),
    # using host-precomputed head-sum / head-broadcast indicator matrices.
    diff = jnp.dot(((k0 - k1) * q).astype(BF16), msum_ref[...],
                   preferred_element_type=F32) * scale           # (tile, Hp)
    p0 = pl.reciprocal(
        1.0 + jnp.exp(-jnp.dot(diff.astype(BF16), mexp_ref[...],
                               preferred_element_type=F32)),
        approx=True)                                             # (tile, D)
    att = v1 + p0 * (v0 - v1)

    o = q + att
    o = o + jnp.maximum(
        jnp.dot(o.astype(BF16), wo_ref[...], preferred_element_type=F32)
        + bo_ref[...], 0.0)
    o_ref[...] = o.astype(o_ref.dtype)


def pma_set_embed(kp, x_rows):
    """x_rows: (M, dim_x) bf16 -> pooled set embedding (M, dim_set) bf16."""
    m, dim_x = x_rows.shape
    d = kp["pma_q"].shape[-1]
    m8 = _round_up(m, 8)
    x_rows = _pad_rows_to(x_rows, m8)
    tile = min(m8, 4096)                       # large row tiles; tiny VMEM use
    grid = (pl.cdiv(m8, tile),)                # ragged last block handled by Pallas
    weights = [kp["pma_ak0"], kp["pma_ak1"], kp["pma_av0"], kp["pma_av1"],
               kp["pma_ck0"], kp["pma_ck1"], kp["pma_cv0"], kp["pma_cv1"],
               kp["pma_q"], kp["pma_wo"], kp["pma_bo"],
               kp["pma_msum"], kp["pma_mexp"]]
    out = pl.pallas_call(
        functools.partial(_pma_embed_kernel, scale=1.0 / math.sqrt(d)),
        out_shape=jax.ShapeDtypeStruct((m8, d), BF16),
        grid=grid,
        in_specs=[pl.BlockSpec((tile, dim_x), lambda i: (i, 0))]
        + [_full_spec(w.shape) for w in weights],
        out_specs=pl.BlockSpec((tile, d), lambda i: (i, 0)),
        compiler_params=pltpu.CompilerParams(
            dimension_semantics=("parallel",),
            vmem_limit_bytes=VMEM_LIMIT),
    )(x_rows, *weights)
    return out[:m]


# ----------------------------------------------------------------------------
# Kernel 2: latent encoder(s) (prior + posterior), gridded over batch blocks
# ----------------------------------------------------------------------------
def _latent_branch(x, y, mavg, inv_n,
                   w1x, w1y, b1, w2, b2, wmu, bmu, wsig, bsig):
    h = (jnp.dot(x, w1x, preferred_element_type=F32)
         + jnp.dot(y, w1y, preferred_element_type=F32) + b1)
    h = jnp.maximum(h, 0.0)
    h = jnp.maximum(
        jnp.dot(h.astype(BF16), w2, preferred_element_type=F32) + b2, 0.0)
    # mean over points: tiny per-block block-diagonal ones matmul (bf16) * 1/n
    s = jnp.dot(mavg, h.astype(BF16), preferred_element_type=F32) * inv_n
    mu = jnp.dot(s.astype(BF16), wmu, preferred_element_type=F32) + bmu
    ls = jnp.dot(s.astype(BF16), wsig, preferred_element_type=F32) + bsig
    return mu, 0.1 + 0.9 / (1.0 + jnp.exp(-ls))


def _latent_both_kernel(cx_ref, cy_ref, tx_ref, ty_ref, mavgc_ref, mavgt_ref,
                        w1x_ref, w1y_ref, b1_ref, w2_ref, b2_ref,
                        wmu_ref, bmu_ref, wsig_ref, bsig_ref,
                        pmu_ref, psig_ref, qmu_ref, qsig_ref,
                        *, n_ctx, n_tgt):
    ws = (w1x_ref[...], w1y_ref[...], b1_ref[...], w2_ref[...], b2_ref[...],
          wmu_ref[...], bmu_ref[...], wsig_ref[...], bsig_ref[...])
    pmu, psig = _latent_branch(cx_ref[...], cy_ref[...], mavgc_ref[...],
                               1.0 / n_ctx, *ws)
    qmu, qsig = _latent_branch(tx_ref[...], ty_ref[...], mavgt_ref[...],
                               1.0 / n_tgt, *ws)
    pmu_ref[...] = pmu
    psig_ref[...] = psig
    qmu_ref[...] = qmu
    qsig_ref[...] = qsig


def _latent_prior_kernel(cx_ref, cy_ref, mavgc_ref,
                         w1x_ref, w1y_ref, b1_ref, w2_ref, b2_ref,
                         wmu_ref, bmu_ref, wsig_ref, bsig_ref,
                         pmu_ref, psig_ref, *, n_ctx):
    ws = (w1x_ref[...], w1y_ref[...], b1_ref[...], w2_ref[...], b2_ref[...],
          wmu_ref[...], bmu_ref[...], wsig_ref[...], bsig_ref[...])
    pmu, psig = _latent_branch(cx_ref[...], cy_ref[...], mavgc_ref[...],
                               1.0 / n_ctx, *ws)
    pmu_ref[...] = pmu
    psig_ref[...] = psig


def latent_encode(kp, cx2, cy2, tx2=None, ty2=None, *, batch, n_ctx, n_tgt=None):
    dim_set = cx2.shape[-1]
    ypad = cy2.shape[-1]
    dim_h = kp["lat_w2"].shape[1]
    bt = min(batch, 8)
    b_pad = _round_up(batch, bt)
    grid = (b_pad // bt,)

    cxp = _pad_rows_to(cx2, b_pad * n_ctx)
    cyp = _pad_rows_to(cy2, b_pad * n_ctx)
    mavgc = (jnp.arange(bt)[:, None]
             == jnp.arange(bt * n_ctx)[None, :] // n_ctx).astype(BF16)

    weights = [kp["lat_w1x"], kp["lat_w1y"], kp["lat_b1"], kp["lat_w2"],
               kp["lat_b2"], kp["lat_wmu"], kp["lat_bmu"], kp["lat_wsig"],
               kp["lat_bsig"]]
    out_sds = jax.ShapeDtypeStruct((b_pad, dim_h), F32)
    cparams = pltpu.CompilerParams(dimension_semantics=("parallel",),
                                   vmem_limit_bytes=VMEM_LIMIT)

    if tx2 is None:
        data = [cxp, cyp, mavgc]
        in_specs = [pl.BlockSpec((bt * n_ctx, dim_set), lambda i: (i, 0)),
                    pl.BlockSpec((bt * n_ctx, ypad), lambda i: (i, 0)),
                    _full_spec(mavgc.shape)]
        kern = functools.partial(_latent_prior_kernel, n_ctx=n_ctx)
        n_out = 2
    else:
        txp = _pad_rows_to(tx2, b_pad * n_tgt)
        typ = _pad_rows_to(ty2, b_pad * n_tgt)
        mavgt = (jnp.arange(bt)[:, None]
                 == jnp.arange(bt * n_tgt)[None, :] // n_tgt).astype(BF16)
        data = [cxp, cyp, txp, typ, mavgc, mavgt]
        in_specs = [pl.BlockSpec((bt * n_ctx, dim_set), lambda i: (i, 0)),
                    pl.BlockSpec((bt * n_ctx, ypad), lambda i: (i, 0)),
                    pl.BlockSpec((bt * n_tgt, dim_set), lambda i: (i, 0)),
                    pl.BlockSpec((bt * n_tgt, ypad), lambda i: (i, 0)),
                    _full_spec(mavgc.shape), _full_spec(mavgt.shape)]
        kern = functools.partial(_latent_both_kernel, n_ctx=n_ctx, n_tgt=n_tgt)
        n_out = 4

    outs = pl.pallas_call(
        kern,
        out_shape=tuple(out_sds for _ in range(n_out)),
        grid=grid,
        in_specs=in_specs + [_full_spec(w.shape) for w in weights],
        out_specs=tuple(pl.BlockSpec((bt, dim_h), lambda i: (i, 0))
                        for _ in range(n_out)),
        compiler_params=cparams,
    )(*data, *weights)
    return tuple(o[:batch] for o in outs)


# ----------------------------------------------------------------------------
# Kernel 3: deterministic path + multi-head cross attention + decoder
#           (Bt batch elements per grid step, fully 2-D / block-diagonal)
# ----------------------------------------------------------------------------
def _cross_decode_kernel(cx_ref, cy_ref, tx_ref, zp_ref,
                         hmask_ref, bbias_ref, zexp_ref,
                         wd1x_ref, wd1y_ref, bd1_ref, wd2_ref, bd2_ref,
                         wq_ref, bq_ref, wk_ref, bk_ref, wv_ref, bv_ref,
                         wo_ref, bo_ref,
                         wdx_ref, wdr_ref, bdec1_ref,
                         wdec2_ref, bdec2_ref, wdeco_ref, bdeco_ref,
                         out_ref, *, num_heads, scale):
    cx = cx_ref[...]                                  # (Bt*Nc, dim_set) bf16
    cy = cy_ref[...]                                  # (Bt*Nc, ypad)    bf16
    tx = tx_ref[...]                                  # (Bt*Nt, dim_set) bf16

    # Deterministic encoder on [cx, cy] (concat folded into row-split matmuls).
    r = jnp.maximum(
        jnp.dot(cx, wd1x_ref[...], preferred_element_type=F32)
        + jnp.dot(cy, wd1y_ref[...], preferred_element_type=F32)
        + bd1_ref[...], 0.0)
    r = jnp.maximum(
        jnp.dot(r.astype(BF16), wd2_ref[...], preferred_element_type=F32)
        + bd2_ref[...], 0.0)

    # Cross attention: target_x attends context_x, values come from r.
    q = jnp.dot(tx, wq_ref[...], preferred_element_type=F32) + bq_ref[...]
    k = (jnp.dot(cx, wk_ref[...], preferred_element_type=F32)
         + bk_ref[...]).astype(BF16)
    v = (jnp.dot(r.astype(BF16), wv_ref[...], preferred_element_type=F32)
         + bv_ref[...]).astype(BF16)
    bbias = bbias_ref[...]                            # block-diag batch bias (0 / -1e30)
    dims = (((1,), (1,)), ((), ()))                   # contract last dims (no k.T)
    att = jnp.zeros_like(q)
    for h in range(num_heads):                        # static unroll over heads
        m = hmask_ref[h]                              # (1, dim_h) host-constant lane mask
        s = lax.dot_general((q * m).astype(BF16), k, dims,
                            preferred_element_type=F32) * scale + bbias
        s = s - jnp.max(s, axis=-1, keepdims=True)
        p = jnp.exp(s)
        p = p * pl.reciprocal(jnp.sum(p, axis=-1, keepdims=True), approx=True)
        att = att + jnp.dot(p.astype(BF16), v, preferred_element_type=F32) * m
    r_star = jnp.dot(att.astype(BF16), wo_ref[...],
                     preferred_element_type=F32) + bo_ref[...]

    # Decoder on [tx, r_star, z]; z already projected in the wrapper and
    # expanded per-target with a tiny constant matmul.
    zexp = jnp.dot(zexp_ref[...], zp_ref[...], preferred_element_type=F32)
    h1 = jnp.maximum(
        jnp.dot(tx, wdx_ref[...], preferred_element_type=F32)
        + jnp.dot(r_star.astype(BF16), wdr_ref[...], preferred_element_type=F32)
        + zexp + bdec1_ref[...], 0.0)
    h2 = jnp.maximum(
        jnp.dot(h1.astype(BF16), wdec2_ref[...], preferred_element_type=F32)
        + bdec2_ref[...], 0.0)
    out = jnp.dot(h2.astype(BF16), wdeco_ref[...],
                  preferred_element_type=F32) + bdeco_ref[...]
    out_ref[...] = out.astype(out_ref.dtype)


def cross_attend_decode(kp, cx2, cy2, tx2, zp, *, batch, n_ctx, n_tgt,
                        num_heads):
    dim_set = cx2.shape[-1]
    ypad = cy2.shape[-1]
    dim_h = kp["att_wo"].shape[1]
    two_y = kp["dec_wo"].shape[1]
    bt = min(batch, 8)
    b_pad = _round_up(batch, bt)
    grid = (b_pad // bt,)

    cxp = _pad_rows_to(cx2, b_pad * n_ctx)
    cyp = _pad_rows_to(cy2, b_pad * n_ctx)
    txp = _pad_rows_to(tx2, b_pad * n_tgt)
    zpp = _pad_rows_to(zp, b_pad).astype(BF16)

    tb = jnp.arange(bt * n_tgt)[:, None] // n_tgt
    cb = jnp.arange(bt * n_ctx)[None, :] // n_ctx
    bbias = jnp.where(tb == cb, 0.0, -1e30).astype(F32)          # (Bt*Nt, Bt*Nc)
    zexp = (tb == jnp.arange(bt)[None, :]).astype(BF16)          # (Bt*Nt, Bt)

    weights = [kp["det_w1x"], kp["det_w1y"], kp["det_b1"], kp["det_w2"],
               kp["det_b2"],
               kp["att_wq"], kp["att_bq"], kp["att_wk"], kp["att_bk"],
               kp["att_wv"], kp["att_bv"], kp["att_wo"], kp["att_bo"],
               kp["dec_w1x"], kp["dec_w1r"], kp["dec_b1"],
               kp["dec_w2"], kp["dec_b2"], kp["dec_wo"], kp["dec_bo"]]
    # TODO(synk): stage-3 output stays (rows, 2*dim_y) (lane-sparse store);
    # packing it lane-dense is a v5e-only micro-opt skipped here.
    out = pl.pallas_call(
        functools.partial(_cross_decode_kernel, num_heads=num_heads,
                          scale=1.0 / math.sqrt(dim_h // num_heads)),
        out_shape=jax.ShapeDtypeStruct((b_pad * n_tgt, two_y), F32),
        grid=grid,
        in_specs=[pl.BlockSpec((bt * n_ctx, dim_set), lambda i: (i, 0)),
                  pl.BlockSpec((bt * n_ctx, ypad), lambda i: (i, 0)),
                  pl.BlockSpec((bt * n_tgt, dim_set), lambda i: (i, 0)),
                  pl.BlockSpec((bt, dim_h), lambda i: (i, 0)),
                  _full_spec(kp["att_hmask"].shape),
                  _full_spec(bbias.shape),
                  _full_spec(zexp.shape)]
        + [_full_spec(w.shape) for w in weights],
        out_specs=pl.BlockSpec((bt * n_tgt, two_y), lambda i: (i, 0)),
        compiler_params=pltpu.CompilerParams(
            dimension_semantics=("parallel",),
            vmem_limit_bytes=VMEM_LIMIT),
    )(cxp, cyp, txp, zpp, kp["att_hmask"], bbias, zexp, *weights)
    return out[:batch * n_tgt]


# ----------------------------------------------------------------------------
# Parameter init (PyTorch-Linear-style) and kernel-ready preparation
# ----------------------------------------------------------------------------
def init_linear(key, d_in, d_out):
    k1, k2 = jax.random.split(key)
    lim = 1.0 / math.sqrt(d_in)
    w = jax.random.uniform(k1, (d_in, d_out), F32, -lim, lim)
    b = jax.random.uniform(k2, (d_out,), F32, -lim, lim)
    return w, b


def init_params(key, dim_h, dim_emr, dim_txt, dim_pos, dim_set, dim_y):
    keys = jax.random.split(key, 20)
    p = {}
    p["fc_emr_w"], p["fc_emr_b"] = init_linear(keys[0], dim_emr + dim_pos, dim_set)
    p["fc_txt_w"], p["fc_txt_b"] = init_linear(keys[1], dim_txt + dim_pos, dim_set)

    # PMA_shared (Set Transformer, num_seeds=1)
    lim = math.sqrt(6.0 / (1 + dim_set))
    p["pma_S"] = jax.random.uniform(keys[2], (1, 1, dim_set), F32, -lim, lim)
    p["pma_wq"], p["pma_bq"] = init_linear(keys[3], dim_set, dim_set)
    p["pma_wk"], p["pma_bk"] = init_linear(keys[4], dim_set, dim_set)
    p["pma_wv"], p["pma_bv"] = init_linear(keys[5], dim_set, dim_set)
    p["pma_wo"], p["pma_bo"] = init_linear(keys[6], dim_set, dim_set)

    # ANP_Model(dim_h, dim_modal=dim_set)
    d_xy = dim_set + dim_y
    p["lat_w1"], p["lat_b1"] = init_linear(keys[7], d_xy, dim_h)
    p["lat_w2"], p["lat_b2"] = init_linear(keys[8], dim_h, dim_h)
    p["lat_wmu"], p["lat_bmu"] = init_linear(keys[9], dim_h, dim_h)
    p["lat_wsig"], p["lat_bsig"] = init_linear(keys[10], dim_h, dim_h)
    p["det_w1"], p["det_b1"] = init_linear(keys[11], d_xy, dim_h)
    p["det_w2"], p["det_b2"] = init_linear(keys[12], dim_h, dim_h)
    p["att_wq"], p["att_bq"] = init_linear(keys[13], dim_set, dim_h)
    p["att_wk"], p["att_bk"] = init_linear(keys[14], dim_set, dim_h)
    p["att_wv"], p["att_bv"] = init_linear(keys[15], dim_h, dim_h)
    p["att_wo"], p["att_bo"] = init_linear(keys[16], dim_h, dim_h)
    p["dec_w1"], p["dec_b1"] = init_linear(keys[17], dim_set + dim_h + dim_h, dim_h)
    p["dec_w2"], p["dec_b2"] = init_linear(keys[18], dim_h, dim_h)
    p["dec_wo"], p["dec_bo"] = init_linear(keys[19], dim_h, 2 * dim_y)
    return p


def prepare_params(p, dim_emr, dim_txt, dim_pos, num_heads):
    """One-time composition / splitting / bf16 casting of weights for kernels."""
    dim_set = p["pma_wq"].shape[0]
    dim_h = p["lat_w2"].shape[0]
    dim_y = p["lat_w1"].shape[0] - dim_set
    dim_x = dim_emr + dim_txt + dim_pos
    ypad = max(dim_y, 8)           # keep matmul contraction dims >= 8

    # Zero-padded modality Linears acting on the full (dim_x,) row (replaces
    # the slice+concat in the reference forward).
    w_emr_pad = jnp.zeros((dim_x, dim_set), F32)
    w_emr_pad = w_emr_pad.at[:dim_emr].set(p["fc_emr_w"][:dim_emr])
    w_emr_pad = w_emr_pad.at[dim_emr + dim_txt:].set(p["fc_emr_w"][dim_emr:])
    w_txt_pad = jnp.zeros((dim_x, dim_set), F32).at[dim_emr:].set(p["fc_txt_w"])

    kp = {}
    # PMA: modality Linear composed with K/V projections; seed query projected once.
    kp["pma_ak0"] = (w_emr_pad @ p["pma_wk"]).astype(BF16)
    kp["pma_ak1"] = (w_txt_pad @ p["pma_wk"]).astype(BF16)
    kp["pma_av0"] = (w_emr_pad @ p["pma_wv"]).astype(BF16)
    kp["pma_av1"] = (w_txt_pad @ p["pma_wv"]).astype(BF16)
    kp["pma_ck0"] = (p["fc_emr_b"] @ p["pma_wk"] + p["pma_bk"]).reshape(1, dim_set)
    kp["pma_ck1"] = (p["fc_txt_b"] @ p["pma_wk"] + p["pma_bk"]).reshape(1, dim_set)
    kp["pma_cv0"] = (p["fc_emr_b"] @ p["pma_wv"] + p["pma_bv"]).reshape(1, dim_set)
    kp["pma_cv1"] = (p["fc_txt_b"] @ p["pma_wv"] + p["pma_bv"]).reshape(1, dim_set)
    kp["pma_q"] = (p["pma_S"].reshape(1, dim_set) @ p["pma_wq"]
                   + p["pma_bq"]).reshape(1, dim_set)
    kp["pma_wo"] = p["pma_wo"].astype(BF16)
    kp["pma_bo"] = p["pma_bo"].reshape(1, dim_set)

    # Host-precomputed PMA head indicator matrices (head-sum / head-broadcast).
    dh = dim_set // num_heads
    hp = max(num_heads, 8)
    dcol = jnp.arange(dim_set)[:, None]
    hcol = jnp.arange(hp)[None, :]
    kp["pma_msum"] = (dcol // dh == hcol).astype(BF16)           # (dim_set, hp)
    hrow = jnp.arange(hp)[:, None]
    drow = jnp.arange(dim_set)[None, :]
    kp["pma_mexp"] = (drow // dh == hrow).astype(BF16)           # (hp, dim_set)

    # Latent encoder (concat([x, y]) folded into a row-split of lat_w1).
    kp["lat_w1x"] = p["lat_w1"][:dim_set].astype(BF16)
    kp["lat_w1y"] = _pad_rows_w(p["lat_w1"][dim_set:], ypad).astype(BF16)
    kp["lat_b1"] = p["lat_b1"].reshape(1, dim_h)
    kp["lat_w2"] = p["lat_w2"].astype(BF16)
    kp["lat_b2"] = p["lat_b2"].reshape(1, dim_h)
    kp["lat_wmu"] = p["lat_wmu"].astype(BF16)
    kp["lat_bmu"] = p["lat_bmu"].reshape(1, dim_h)
    kp["lat_wsig"] = p["lat_wsig"].astype(BF16)
    kp["lat_bsig"] = p["lat_bsig"].reshape(1, dim_h)

    # Deterministic encoder.
    kp["det_w1x"] = p["det_w1"][:dim_set].astype(BF16)
    kp["det_w1y"] = _pad_rows_w(p["det_w1"][dim_set:], ypad).astype(BF16)
    kp["det_b1"] = p["det_b1"].reshape(1, dim_h)
    kp["det_w2"] = p["det_w2"].astype(BF16)
    kp["det_b2"] = p["det_b2"].reshape(1, dim_h)

    # Cross attention.
    kp["att_wq"] = p["att_wq"].astype(BF16)
    kp["att_bq"] = p["att_bq"].reshape(1, dim_h)
    kp["att_wk"] = p["att_wk"].astype(BF16)
    kp["att_bk"] = p["att_bk"].reshape(1, dim_h)
    kp["att_wv"] = p["att_wv"].astype(BF16)
    kp["att_bv"] = p["att_bv"].reshape(1, dim_h)
    kp["att_wo"] = p["att_wo"].astype(BF16)
    kp["att_bo"] = p["att_bo"].reshape(1, dim_h)
    # Host-precomputed per-head lane masks (num_heads, 1, dim_h).
    dha = dim_h // num_heads
    lane = jnp.arange(dim_h)[None, :]
    kp["att_hmask"] = jnp.stack(
        [((lane >= h * dha) & (lane < (h + 1) * dha)).astype(F32)
         for h in range(num_heads)], axis=0)

    # Decoder (concat([tx, r_star, z]) folded into a row-split of dec_w1).
    kp["dec_w1x"] = p["dec_w1"][:dim_set].astype(BF16)
    kp["dec_w1r"] = p["dec_w1"][dim_set:dim_set + dim_h].astype(BF16)
    kp["dec_w1z"] = p["dec_w1"][dim_set + dim_h:]                # f32, wrapper matmul
    kp["dec_b1"] = p["dec_b1"].reshape(1, dim_h)
    kp["dec_w2"] = p["dec_w2"].astype(BF16)
    kp["dec_b2"] = p["dec_b2"].reshape(1, dim_h)
    kp["dec_wo"] = p["dec_wo"].astype(BF16)
    kp["dec_bo"] = p["dec_bo"].reshape(1, 2 * dim_y)
    return kp


# ----------------------------------------------------------------------------
# Forward pass
# ----------------------------------------------------------------------------
def set_np_forward(kp, context_x, context_y, target_x, target_y=None, *,
                   num_heads):
    b, n_ctx, dim_x = context_x.shape
    n_tgt = target_x.shape[1]
    dim_y = context_y.shape[-1]

    # Stage 1: fused modality embedding + PMA pooling for ALL points (bf16 I/O).
    x_rows = jnp.concatenate(
        [context_x.reshape(b * n_ctx, dim_x),
         target_x.reshape(b * n_tgt, dim_x)], axis=0).astype(BF16)
    pooled = pma_set_embed(kp, x_rows)               # (rows, dim_set) bf16
    cx2 = pooled[:b * n_ctx]
    tx2 = pooled[b * n_ctx:]

    # Zero-pad y to the width the (pre-padded) y-weights expect; bf16 for matmuls.
    ypad = kp["lat_w1y"].shape[0]
    cy2 = _pad_cols(context_y, ypad).reshape(b * n_ctx, ypad).astype(BF16)

    # Stage 2: latent encoders (batch-gridded).
    if target_y is not None:
        ty2 = _pad_cols(target_y, ypad).reshape(b * n_tgt, ypad).astype(BF16)
        prior_mu, prior_sigma, post_mu, post_sigma = latent_encode(
            kp, cx2, cy2, tx2, ty2, batch=b, n_ctx=n_ctx, n_tgt=n_tgt)
        # TODO(synk): posterior mean used instead of a reparameterized sample.
        z = post_mu
        kl = jnp.sum(
            jnp.log(prior_sigma / post_sigma)
            + (post_sigma ** 2 + (post_mu - prior_mu) ** 2)
            / (2.0 * prior_sigma ** 2)
            - 0.5, axis=-1)
    else:
        prior_mu, prior_sigma = latent_encode(kp, cx2, cy2, batch=b,
                                              n_ctx=n_ctx)
        z = prior_mu
        kl = None

    # z projection through dec_w1z hoisted to a single tiny wrapper matmul.
    zp = jnp.dot(z, kp["dec_w1z"])                   # (b, dim_h) f32

    # Stage 3: deterministic path + cross attention + decoder.
    raw = cross_attend_decode(kp, cx2, cy2, tx2, zp, batch=b, n_ctx=n_ctx,
                              n_tgt=n_tgt, num_heads=num_heads)
    raw = raw.reshape(b, n_tgt, -1)
    mu_y = raw[..., :dim_y]
    log_sigma_y = raw[..., dim_y:]
    sigma_y = 0.1 + 0.9 * jax.nn.softplus(log_sigma_y)

    if target_y is not None:
        log_p = (-0.5 * math.log(2.0 * math.pi) - jnp.log(sigma_y)
                 - 0.5 * ((target_y - mu_y) / sigma_y) ** 2)
        loss = -jnp.mean(jnp.sum(log_p, axis=-1)) + jnp.mean(kl)
    else:
        loss = None
    return mu_y, kl, loss


set_np_forward_jit = jax.jit(set_np_forward, static_argnames=("num_heads",))


# ----------------------------------------------------------------------------
# Demo
# ----------------------------------------------------------------------------
if __name__ == "__main__":
    B, Nc, Nt = 2, 8, 8
    dim_h, dim_emr, dim_txt, dim_pos, dim_set, num_heads = 32, 6, 10, 4, 32, 4
    dim_y = 1
    dim_x = dim_emr + dim_txt + dim_pos  # 20

    key = jax.random.PRNGKey(0)
    kkey, kcx, kcy, ktx, kty = jax.random.split(key, 5)
    params = init_params(kkey, dim_h, dim_emr, dim_txt, dim_pos, dim_set, dim_y)
    kparams = prepare_params(params, dim_emr, dim_txt, dim_pos, num_heads)

    context_x = jax.random.normal(kcx, (B, Nc, dim_x), F32)
    context_y = jax.random.normal(kcy, (B, Nc, dim_y), F32)
    target_x = jax.random.normal(ktx, (B, Nt, dim_x), F32)
    target_y = jax.random.normal(kty, (B, Nt, dim_y), F32)

    y_pred, kl, loss = set_np_forward_jit(
        kparams, context_x, context_y, target_x, target_y,
        num_heads=num_heads)

    jax.block_until_ready(y_pred)
    jax.block_until_ready(kl)
    jax.block_until_ready(loss)
    assert y_pred.shape == (B, Nt, dim_y)
    assert kl.shape == (B,)
    assert bool(jnp.isfinite(loss))
    print("KERNEL_OK")
</pallas_src>

<mosaic_0001>
module attributes {stable_mosaic.version = 11 : i64} {
  func.func @_pma_embed_kernel(%arg0: i32, %arg1: memref<32x20xbf16, #tpu.memory_space<vmem>>, %arg2: memref<20x32xbf16, #tpu.memory_space<vmem>>, %arg3: memref<20x32xbf16, #tpu.memory_space<vmem>>, %arg4: memref<20x32xbf16, #tpu.memory_space<vmem>>, %arg5: memref<20x32xbf16, #tpu.memory_space<vmem>>, %arg6: memref<1x32xf32, #tpu.memory_space<vmem>>, %arg7: memref<1x32xf32, #tpu.memory_space<vmem>>, %arg8: memref<1x32xf32, #tpu.memory_space<vmem>>, %arg9: memref<1x32xf32, #tpu.memory_space<vmem>>, %arg10: memref<1x32xf32, #tpu.memory_space<vmem>>, %arg11: memref<32x32xbf16, #tpu.memory_space<vmem>>, %arg12: memref<1x32xf32, #tpu.memory_space<vmem>>, %arg13: memref<32x8xbf16, #tpu.memory_space<vmem>>, %arg14: memref<8x32xbf16, #tpu.memory_space<vmem>>, %arg15: memref<32x32xbf16, #tpu.memory_space<vmem>>) attributes {dimension_semantics = [#tpu.dimension_semantics<parallel>], iteration_bounds = array<i64: 1>, scalar_prefetch = 0 : i64, scratch_operands = 0 : i64, tpu.core_type = #tpu.core_type<tc>, window_params = [{transform_indices = @transform_0, window_bounds = array<i64: 32, 20>}, {pipeline_mode = #tpu.pipeline_mode<synchronous>, transform_indices = @transform_1, window_bounds = array<i64: 20, 32>}, {pipeline_mode = #tpu.pipeline_mode<synchronous>, transform_indices = @transform_2, window_bounds = array<i64: 20, 32>}, {pipeline_mode = #tpu.pipeline_mode<synchronous>, transform_indices = @transform_3, window_bounds = array<i64: 20, 32>}, {pipeline_mode = #tpu.pipeline_mode<synchronous>, transform_indices = @transform_4, window_bounds = array<i64: 20, 32>}, {pipeline_mode = #tpu.pipeline_mode<synchronous>, transform_indices = @transform_5, window_bounds = array<i64: 1, 32>}, {pipeline_mode = #tpu.pipeline_mode<synchronous>, transform_indices = @transform_6, window_bounds = array<i64: 1, 32>}, {pipeline_mode = #tpu.pipeline_mode<synchronous>, transform_indices = @transform_7, window_bounds = array<i64: 1, 32>}, {pipeline_mode = #tpu.pipeline_mode<synchronous>, transform_indices = @transform_8, window_bounds = array<i64: 1, 32>}, {pipeline_mode = #tpu.pipeline_mode<synchronous>, transform_indices = @transform_9, window_bounds = array<i64: 1, 32>}, {pipeline_mode = #tpu.pipeline_mode<synchronous>, transform_indices = @transform_10, window_bounds = array<i64: 32, 32>}, {pipeline_mode = #tpu.pipeline_mode<synchronous>, transform_indices = @transform_11, window_bounds = array<i64: 1, 32>}, {pipeline_mode = #tpu.pipeline_mode<synchronous>, transform_indices = @transform_12, window_bounds = array<i64: 32, 8>}, {pipeline_mode = #tpu.pipeline_mode<synchronous>, transform_indices = @transform_13, window_bounds = array<i64: 8, 32>}, {transform_indices = @transform_14, window_bounds = array<i64: 32, 32>}]} {
    %c0 = arith.constant 0 : index
    %c0_0 = arith.constant 0 : index
    %0 = vector.load %arg1[%c0, %c0_0] : memref<32x20xbf16, #tpu.memory_space<vmem>>, vector<32x20xbf16>
    %c0_1 = arith.constant 0 : index
    %c0_2 = arith.constant 0 : index
    %1 = vector.load %arg2[%c0_1, %c0_2] : memref<20x32xbf16, #tpu.memory_space<vmem>>, vector<20x32xbf16>
    %cst = arith.constant dense<0.000000e+00> : vector<32x32xf32>
    %2 = tpu.matmul %0, %1, %cst {dimension_numbers = #tpu.dot_dimension_numbers<[1], [0], [0], [1], [0, 0, 1, 1], [], []>} : vector<32x20xbf16>, vector<20x32xbf16>, vector<32x32xf32> -> vector<32x32xf32>
    %c0_3 = arith.constant 0 : index
    %c0_4 = arith.constant 0 : index
    %3 = vector.load %arg6[%c0_3, %c0_4] : memref<1x32xf32, #tpu.memory_space<vmem>>, vector<1x32xf32>
    %4 = vector.broadcast %3 : vector<1x32xf32> to vector<32x32xf32>
    %5 = arith.addf %2, %4 : vector<32x32xf32>
    %c0_5 = arith.constant 0 : index
    %c0_6 = arith.constant 0 : index
    %6 = vector.load %arg3[%c0_5, %c0_6] : memref<20x32xbf16, #tpu.memory_space<vmem>>, vector<20x32xbf16>
    %cst_7 = arith.constant dense<0.000000e+00> : vector<32x32xf32>
    %7 = tpu.matmul %0, %6, %cst_7 {dimension_numbers = #tpu.dot_dimension_numbers<[1], [0], [0], [1], [0, 0, 1, 1], [], []>} : vector<32x20xbf16>, vector<20x32xbf16>, vector<32x32xf32> -> vector<32x32xf32>
    %c0_8 = arith.constant 0 : index
    %c0_9 = arith.constant 0 : index
    %8 = vector.load %arg7[%c0_8, %c0_9] : memref<1x32xf32, #tpu.memory_space<vmem>>, vector<1x32xf32>
    %9 = vector.broadcast %8 : vector<1x32xf32> to vector<32x32xf32>
    %10 = arith.addf %7, %9 : vector<32x32xf32>
    %c0_10 = arith.constant 0 : index
    %c0_11 = arith.constant 0 : index
    %11 = vector.load %arg4[%c0_10, %c0_11] : memref<20x32xbf16, #tpu.memory_space<vmem>>, vector<20x32xbf16>
    %cst_12 = arith.constant dense<0.000000e+00> : vector<32x32xf32>
    %12 = tpu.matmul %0, %11, %cst_12 {dimension_numbers = #tpu.dot_dimension_numbers<[1], [0], [0], [1], [0, 0, 1, 1], [], []>} : vector<32x20xbf16>, vector<20x32xbf16>, vector<32x32xf32> -> vector<32x32xf32>
    %c0_13 = arith.constant 0 : index
    %c0_14 = arith.constant 0 : index
    %13 = vector.load %arg8[%c0_13, %c0_14] : memref<1x32xf32, #tpu.memory_space<vmem>>, vector<1x32xf32>
    %14 = vector.broadcast %13 : vector<1x32xf32> to vector<32x32xf32>
    %15 = arith.addf %12, %14 : vector<32x32xf32>
    %c0_15 = arith.constant 0 : index
    %c0_16 = arith.constant 0 : index
    %16 = vector.load %arg5[%c0_15, %c0_16] : memref<20x32xbf16, #tpu.memory_space<vmem>>, vector<20x32xbf16>
    %cst_17 = arith.constant dense<0.000000e+00> : vector<32x32xf32>
    %17 = tpu.matmul %0, %16, %cst_17 {dimension_numbers = #tpu.dot_dimension_numbers<[1], [0], [0], [1], [0, 0, 1, 1], [], []>} : vector<32x20xbf16>, vector<20x32xbf16>, vector<32x32xf32> -> vector<32x32xf32>
    %c0_18 = arith.constant 0 : index
    %c0_19 = arith.constant 0 : index
    %18 = vector.load %arg9[%c0_18, %c0_19] : memref<1x32xf32, #tpu.memory_space<vmem>>, vector<1x32xf32>
    %19 = vector.broadcast %18 : vector<1x32xf32> to vector<32x32xf32>
    %20 = arith.addf %17, %19 : vector<32x32xf32>
    %c0_20 = arith.constant 0 : index
    %c0_21 = arith.constant 0 : index
    %21 = vector.load %arg10[%c0_20, %c0_21] : memref<1x32xf32, #tpu.memory_space<vmem>>, vector<1x32xf32>
    %22 = arith.subf %5, %10 : vector<32x32xf32>
    %23 = vector.broadcast %21 : vector<1x32xf32> to vector<32x32xf32>
    %24 = arith.mulf %22, %23 : vector<32x32xf32>
    %25 = arith.truncf %24 : vector<32x32xf32> to vector<32x32xbf16>
    %c0_22 = arith.constant 0 : index
    %c0_23 = arith.constant 0 : index
    %26 = vector.load %arg13[%c0_22, %c0_23] : memref<32x8xbf16, #tpu.memory_space<vmem>>, vector<32x8xbf16>
    %cst_24 = arith.constant dense<0.000000e+00> : vector<32x8xf32>
    %27 = tpu.matmul %25, %26, %cst_24 {dimension_numbers = #tpu.dot_dimension_numbers<[1], [0], [0], [1], [0, 0, 1, 1], [], []>} : vector<32x32xbf16>, vector<32x8xbf16>, vector<32x8xf32> -> vector<32x8xf32>
    %cst_25 = arith.constant 0.176776692 : f32
    %28 = vector.broadcast %cst_25 : f32 to vector<32x8xf32>
    %29 = arith.mulf %27, %28 : vector<32x8xf32>
    %30 = arith.truncf %29 : vector<32x8xf32> to vector<32x8xbf16>
    %c0_26 = arith.constant 0 : index
    %c0_27 = arith.constant 0 : index
    %31 = vector.load %arg14[%c0_26, %c0_27] : memref<8x32xbf16, #tpu.memory_space<vmem>>, vector<8x32xbf16>
    %cst_28 = arith.constant dense<0.000000e+00> : vector<32x32xf32>
    %32 = tpu.matmul %30, %31, %cst_28 {dimension_numbers = #tpu.dot_dimension_numbers<[1], [0], [0], [1], [0, 0, 1, 1], [], []>} : vector<32x8xbf16>, vector<8x32xbf16>, vector<32x32xf32> -> vector<32x32xf32>
    %cst_29 = arith.constant 0.000000e+00 : f32
    %33 = vector.broadcast %cst_29 : f32 to vector<32x32xf32>
    %34 = arith.subf %33, %32 : vector<32x32xf32>
    %35 = math.exp %34 : vector<32x32xf32>
    %cst_30 = arith.constant 1.000000e+00 : f32
    %36 = vector.broadcast %cst_30 : f32 to vector<32x32xf32>
    %37 = arith.addf %36, %35 : vector<32x32xf32>
    %38 = tpu.reciprocal %37 {approx = true} : vector<32x32xf32> -> vector<32x32xf32>
    %39 = arith.subf %15, %20 : vector<32x32xf32>
    %40 = arith.mulf %38, %39 : vector<32x32xf32>
    %41 = arith.addf %20, %40 : vector<32x32xf32>
    %42 = vector.broadcast %21 : vector<1x32xf32> to vector<32x32xf32>
    %43 = arith.addf %42, %41 : vector<32x32xf32>
    %44 = arith.truncf %43 : vector<32x32xf32> to vector<32x32xbf16>
    %c0_31 = arith.constant 0 : index
    %c0_32 = arith.constant 0 : index
    %45 = vector.load %arg11[%c0_31, %c0_32] : memref<32x32xbf16, #tpu.memory_space<vmem>>, vector<32x32xbf16>
    %cst_33 = arith.constant dense<0.000000e+00> : vector<32x32xf32>
    %46 = tpu.matmul %44, %45, %cst_33 {dimension_numbers = #tpu.dot_dimension_numbers<[1], [0], [0], [1], [0, 0, 1, 1], [], []>} : vector<32x32xbf16>, vector<32x32xbf16>, vector<32x32xf32> -> vector<32x32xf32>
    %c0_34 = arith.constant 0 : index
    %c0_35 = arith.constant 0 : index
    %47 = vector.load %arg12[%c0_34, %c0_35] : memref<1x32xf32, #tpu.memory_space<vmem>>, vector<1x32xf32>
    %48 = vector.broadcast %47 : vector<1x32xf32> to vector<32x32xf32>
    %49 = arith.addf %46, %48 : vector<32x32xf32>
    %cst_36 = arith.constant 0.000000e+00 : f32
    %50 = vector.broadcast %cst_36 : f32 to vector<32x32xf32>
    %51 = arith.maximumf %49, %50 : vector<32x32xf32>
    %52 = arith.addf %43, %51 : vector<32x32xf32>
    %53 = arith.truncf %52 : vector<32x32xf32> to vector<32x32xbf16>
    %c0_37 = arith.constant 0 : index
    %c0_38 = arith.constant 0 : index
    %54 = vector.load %arg15[%c0_37, %c0_38] : memref<32x32xbf16, #tpu.memory_space<vmem>>, vector<32x32xbf16>
    tpu.vector_store %arg15[%c0_37, %c0_38], %53 {strides = array<i32>} : memref<32x32xbf16, #tpu.memory_space<vmem>>, vector<32x32xbf16>,
    return
  }
  func.func @transform_0(%arg0: i32) -> (i32, i32) {
    %c0_i32 = arith.constant 0 : i32
    %c0_i32_0 = arith.constant 0 : i32
    return %arg0, %c0_i32 : i32, i32
  }
  func.func @transform_1(%arg0: i32) -> (i32, i32) {
    %c0_i32 = arith.constant 0 : i32
    %c0_i32_0 = arith.constant 0 : i32
    %c0_i32_1 = arith.constant 0 : i32
    return %c0_i32, %c0_i32_0 : i32, i32
  }
  func.func @transform_2(%arg0: i32) -> (i32, i32) {
    %c0_i32 = arith.constant 0 : i32
    %c0_i32_0 = arith.constant 0 : i32
    %c0_i32_1 = arith.constant 0 : i32
    return %c0_i32, %c0_i32_0 : i32, i32
  }
  func.func @transform_3(%arg0: i32) -> (i32, i32) {
    %c0_i32 = arith.constant 0 : i32
    %c0_i32_0 = arith.constant 0 : i32
    %c0_i32_1 = arith.constant 0 : i32
    return %c0_i32, %c0_i32_0 : i32, i32
  }
  func.func @transform_4(%arg0: i32) -> (i32, i32) {
    %c0_i32 = arith.constant 0 : i32
    %c0_i32_0 = arith.constant 0 : i32
    %c0_i32_1 = arith.constant 0 : i32
    return %c0_i32, %c0_i32_0 : i32, i32
  }
  func.func @transform_5(%arg0: i32) -> (i32, i32) {
    %c0_i32 = arith.constant 0 : i32
    %c0_i32_0 = arith.constant 0 : i32
    %c0_i32_1 = arith.constant 0 : i32
    return %c0_i32, %c0_i32_0 : i32, i32
  }
  func.func @transform_6(%arg0: i32) -> (i32, i32) {
    %c0_i32 = arith.constant 0 : i32
    %c0_i32_0 = arith.constant 0 : i32
    %c0_i32_1 = arith.constant 0 : i32
    return %c0_i32, %c0_i32_0 : i32, i32
  }
  func.func @transform_7(%arg0: i32) -> (i32, i32) {
    %c0_i32 = arith.constant 0 : i32
    %c0_i32_0 = arith.constant 0 : i32
    %c0_i32_1 = arith.constant 0 : i32
    return %c0_i32, %c0_i32_0 : i32, i32
  }
  func.func @transform_8(%arg0: i32) -> (i32, i32) {
    %c0_i32 = arith.constant 0 : i32
    %c0_i32_0 = arith.constant 0 : i32
    %c0_i32_1 = arith.constant 0 : i32
    return %c0_i32, %c0_i32_0 : i32, i32
  }
  func.func @transform_9(%arg0: i32) -> (i32, i32) {
    %c0_i32 = arith.constant 0 : i32
    %c0_i32_0 = arith.constant 0 : i32
    %c0_i32_1 = arith.constant 0 : i32
    return %c0_i32, %c0_i32_0 : i32, i32
  }
  func.func @transform_10(%arg0: i32) -> (i32, i32) {
    %c0_i32 = arith.constant 0 : i32
    %c0_i32_0 = arith.constant 0 : i32
    %c0_i32_1 = arith.constant 0 : i32
    return %c0_i32, %c0_i32_0 : i32, i32
  }
  func.func @transform_11(%arg0: i32) -> (i32, i32) {
    %c0_i32 = arith.constant 0 : i32
    %c0_i32_0 = arith.constant 0 : i32
    %c0_i32_1 = arith.constant 0 : i32
    return %c0_i32, %c0_i32_0 : i32, i32
  }
  func.func @transform_12(%arg0: i32) -> (i32, i32) {
    %c0_i32 = arith.constant 0 : i32
    %c0_i32_0 = arith.constant 0 : i32
    %c0_i32_1 = arith.constant 0 : i32
    return %c0_i32, %c0_i32_0 : i32, i32
  }
  func.func @transform_13(%arg0: i32) -> (i32, i32) {
    %c0_i32 = arith.constant 0 : i32
    %c0_i32_0 = arith.constant 0 : i32
    %c0_i32_1 = arith.constant 0 : i32
    return %c0_i32, %c0_i32_0 : i32, i32
  }
  func.func @transform_14(%arg0: i32) -> (i32, i32) {
    %c0_i32 = arith.constant 0 : i32
    %c0_i32_0 = arith.constant 0 : i32
    return %arg0, %c0_i32 : i32, i32
  }
}

module attributes {stable_mosaic.version = 11 : i64} {
  func.func @_latent_both_kernel(%arg0: i32, %arg1: memref<16x32xbf16, #tpu.memory_space<vmem>>, %arg2: memref<16x8xbf16, #tpu.memory_space<vmem>>, %arg3: memref<16x32xbf16, #tpu.memory_space<vmem>>, %arg4: memref<16x8xbf16, #tpu.memory_space<vmem>>, %arg5: memref<2x16xbf16, #tpu.memory_space<vmem>>, %arg6: memref<2x16xbf16, #tpu.memory_space<vmem>>, %arg7: memref<32x32xbf16, #tpu.memory_space<vmem>>, %arg8: memref<8x32xbf16, #tpu.memory_space<vmem>>, %arg9: memref<1x32xf32, #tpu.memory_space<vmem>>, %arg10: memref<32x32xbf16, #tpu.memory_space<vmem>>, %arg11: memref<1x32xf32, #tpu.memory_space<vmem>>, %arg12: memref<32x32xbf16, #tpu.memory_space<vmem>>, %arg13: memref<1x32xf32, #tpu.memory_space<vmem>>, %arg14: memref<32x32xbf16, #tpu.memory_space<vmem>>, %arg15: memref<1x32xf32, #tpu.memory_space<vmem>>, %arg16: memref<2x32xf32, #tpu.memory_space<vmem>>, %arg17: memref<2x32xf32, #tpu.memory_space<vmem>>, %arg18: memref<2x32xf32, #tpu.memory_space<vmem>>, %arg19: memref<2x32xf32, #tpu.memory_space<vmem>>) attributes {dimension_semantics = [#tpu.dimension_semantics<parallel>], iteration_bounds = array<i64: 1>, scalar_prefetch = 0 : i64, scratch_operands = 0 : i64, tpu.core_type = #tpu.core_type<tc>, window_params = [{transform_indices = @transform_0, window_bounds = array<i64: 16, 32>}, {transform_indices = @transform_1, window_bounds = array<i64: 16, 8>}, {transform_indices = @transform_2, window_bounds = array<i64: 16, 32>}, {transform_indices = @transform_3, window_bounds = array<i64: 16, 8>}, {pipeline_mode = #tpu.pipeline_mode<synchronous>, transform_indices = @transform_4, window_bounds = array<i64: 2, 16>}, {pipeline_mode = #tpu.pipeline_mode<synchronous>, transform_indices = @transform_5, window_bounds = array<i64: 2, 16>}, {pipeline_mode = #tpu.pipeline_mode<synchronous>, transform_indices = @transform_6, window_bounds = array<i64: 32, 32>}, {pipeline_mode = #tpu.pipeline_mode<synchronous>, transform_indices = @transform_7, window_bounds = array<i64: 8, 32>}, {pipeline_mode = #tpu.pipeline_mode<synchronous>, transform_indices = @transform_8, window_bounds = array<i64: 1, 32>}, {pipeline_mode = #tpu.pipeline_mode<synchronous>, transform_indices = @transform_9, window_bounds = array<i64: 32, 32>}, {pipeline_mode = #tpu.pipeline_mode<synchronous>, transform_indices = @transform_10, window_bounds = array<i64: 1, 32>}, {pipeline_mode = #tpu.pipeline_mode<synchronous>, transform_indices = @transform_11, window_bounds = array<i64: 32, 32>}, {pipeline_mode = #tpu.pipeline_mode<synchronous>, transform_indices = @transform_12, window_bounds = array<i64: 1, 32>}, {pipeline_mode = #tpu.pipeline_mode<synchronous>, transform_indices = @transform_13, window_bounds = array<i64: 32, 32>}, {pipeline_mode = #tpu.pipeline_mode<synchronous>, transform_indices = @transform_14, window_bounds = array<i64: 1, 32>}, {transform_indices = @transform_15, window_bounds = array<i64: 2, 32>}, {transform_indices = @transform_16, window_bounds = array<i64: 2, 32>}, {transform_indices = @transform_17, window_bounds = array<i64: 2, 32>}, {transform_indices = @transform_18, window_bounds = array<i64: 2, 32>}]} {
    %c0 = arith.constant 0 : index
    %c0_0 = arith.constant 0 : index
    %0 = vector.load %arg7[%c0, %c0_0] : memref<32x32xbf16, #tpu.memory_space<vmem>>, vector<32x32xbf16>
    %c0_1 = arith.constant 0 : index
    %c0_2 = arith.constant 0 : index
    %1 = vector.load %arg8[%c0_1, %c0_2] : memref<8x32xbf16, #tpu.memory_space<vmem>>, vector<8x32xbf16>
    %c0_3 = arith.constant 0 : index
    %c0_4 = arith.constant 0 : index
    %2 = vector.load %arg9[%c0_3, %c0_4] : memref<1x32xf32, #tpu.memory_space<vmem>>, vector<1x32xf32>
    %c0_5 = arith.constant 0 : index
    %c0_6 = arith.constant 0 : index
    %3 = vector.load %arg10[%c0_5, %c0_6] : memref<32x32xbf16, #tpu.memory_space<vmem>>, vector<32x32xbf16>
    %c0_7 = arith.constant 0 : index
    %c0_8 = arith.constant 0 : index
    %4 = vector.load %arg11[%c0_7, %c0_8] : memref<1x32xf32, #tpu.memory_space<vmem>>, vector<1x32xf32>
    %c0_9 = arith.constant 0 : index
    %c0_10 = arith.constant 0 : index
    %5 = vector.load %arg12[%c0_9, %c0_10] : memref<32x32xbf16, #tpu.memory_space<vmem>>, vector<32x32xbf16>
    %c0_11 = arith.constant 0 : index
    %c0_12 = arith.constant 0 : index
    %6 = vector.load %arg13[%c0_11, %c0_12] : memref<1x32xf32, #tpu.memory_space<vmem>>, vector<1x32xf32>
    %c0_13 = arith.constant 0 : index
    %c0_14 = arith.constant 0 : index
    %7 = vector.load %arg14[%c0_13, %c0_14] : memref<32x32xbf16, #tpu.memory_space<vmem>>, vector<32x32xbf16>
    %c0_15 = arith.constant 0 : index
    %c0_16 = arith.constant 0 : index
    %8 = vector.load %arg15[%c0_15, %c0_16] : memref<1x32xf32, #tpu.memory_space<vmem>>, vector<1x32xf32>
    %c0_17 = arith.constant 0 : index
    %c0_18 = arith.constant 0 : index
    %9 = vector.load %arg1[%c0_17, %c0_18] : memref<16x32xbf16, #tpu.memory_space<vmem>>, vector<16x32xbf16>
    %c0_19 = arith.constant 0 : index
    %c0_20 = arith.constant 0 : index
    %10 = vector.load %arg2[%c0_19, %c0_20] : memref<16x8xbf16, #tpu.memory_space<vmem>>, vector<16x8xbf16>
    %c0_21 = arith.constant 0 : index
    %c0_22 = arith.constant 0 : index
    %11 = vector.load %arg5[%c0_21, %c0_22] : memref<2x16xbf16, #tpu.memory_space<vmem>>, vector<2x16xbf16>
    %cst = arith.constant dense<0.000000e+00> : vector<16x32xf32>
    %12 = tpu.matmul %9, %0, %cst {dimension_numbers = #tpu.dot_dimension_numbers<[1], [0], [0], [1], [0, 0, 1, 1], [], []>} : vector<16x32xbf16>, vector<32x32xbf16>, vector<16x32xf32> -> vector<16x32xf32>
    %cst_23 = arith.constant dense<0.000000e+00> : vector<16x32xf32>
    %13 = tpu.matmul %10, %1, %cst_23 {dimension_numbers = #tpu.dot_dimension_numbers<[1], [0], [0], [1], [0, 0, 1, 1], [], []>} : vector<16x8xbf16>, vector<8x32xbf16>, vector<16x32xf32> -> vector<16x32xf32>
    %14 = arith.addf %12, %13 : vector<16x32xf32>
    %15 = vector.broadcast %2 : vector<1x32xf32> to vector<16x32xf32>
    %16 = arith.addf %14, %15 : vector<16x32xf32>
    %cst_24 = arith.constant 0.000000e+00 : f32
    %17 = vector.broadcast %cst_24 : f32 to vector<16x32xf32>
    %18 = arith.maximumf %16, %17 : vector<16x32xf32>
    %19 = arith.truncf %18 : vector<16x32xf32> to vector<16x32xbf16>
    %cst_25 = arith.constant dense<0.000000e+00> : vector<16x32xf32>
    %20 = tpu.matmul %19, %3, %cst_25 {dimension_numbers = #tpu.dot_dimension_numbers<[1], [0], [0], [1], [0, 0, 1, 1], [], []>} : vector<16x32xbf16>, vector<32x32xbf16>, vector<16x32xf32> -> vector<16x32xf32>
    %21 = vector.broadcast %4 : vector<1x32xf32> to vector<16x32xf32>
    %22 = arith.addf %20, %21 : vector<16x32xf32>
    %cst_26 = arith.constant 0.000000e+00 : f32
    %23 = vector.broadcast %cst_26 : f32 to vector<16x32xf32>
    %24 = arith.maximumf %22, %23 : vector<16x32xf32>
    %25 = arith.truncf %24 : vector<16x32xf32> to vector<16x32xbf16>
    %cst_27 = arith.constant dense<0.000000e+00> : vector<2x32xf32>
    %26 = tpu.matmul %11, %25, %cst_27 {dimension_numbers = #tpu.dot_dimension_numbers<[1], [0], [0], [1], [0, 0, 1, 1], [], []>} : vector<2x16xbf16>, vector<16x32xbf16>, vector<2x32xf32> -> vector<2x32xf32>
    %cst_28 = arith.constant 1.250000e-01 : f32
    %27 = vector.broadcast %cst_28 : f32 to vector<2x32xf32>
    %28 = arith.mulf %26, %27 : vector<2x32xf32>
    %29 = arith.truncf %28 : vector<2x32xf32> to vector<2x32xbf16>
    %cst_29 = arith.constant dense<0.000000e+00> : vector<2x32xf32>
    %30 = tpu.matmul %29, %5, %cst_29 {dimension_numbers = #tpu.dot_dimension_numbers<[1], [0], [0], [1], [0, 0, 1, 1], [], []>} : vector<2x32xbf16>, vector<32x32xbf16>, vector<2x32xf32> -> vector<2x32xf32>
    %31 = vector.broadcast %6 : vector<1x32xf32> to vector<2x32xf32>
    %32 = arith.addf %30, %31 : vector<2x32xf32>
    %33 = arith.truncf %28 : vector<2x32xf32> to vector<2x32xbf16>
    %cst_30 = arith.constant dense<0.000000e+00> : vector<2x32xf32>
    %34 = tpu.matmul %33, %7, %cst_30 {dimension_numbers = #tpu.dot_dimension_numbers<[1], [0], [0], [1], [0, 0, 1, 1], [], []>} : vector<2x32xbf16>, vector<32x32xbf16>, vector<2x32xf32> -> vector<2x32xf32>
    %35 = vector.broadcast %8 : vector<1x32xf32> to vector<2x32xf32>
    %36 = arith.addf %34, %35 : vector<2x32xf32>
    %cst_31 = arith.constant 0.000000e+00 : f32
    %37 = vector.broadcast %cst_31 : f32 to vector<2x32xf32>
    %38 = arith.subf %37, %36 : vector<2x32xf32>
    %39 = math.exp %38 : vector<2x32xf32>
    %cst_32 = arith.constant 1.000000e+00 : f32
    %40 = vector.broadcast %cst_32 : f32 to vector<2x32xf32>
    %41 = arith.addf %40, %39 : vector<2x32xf32>
    %cst_33 = arith.constant 0.899999976 : f32
    %42 = vector.broadcast %cst_33 : f32 to vector<2x32xf32>
    %43 = arith.divf %42, %41 : vector<2x32xf32>
    %cst_34 = arith.constant 1.000000e-01 : f32
    %44 = vector.broadcast %cst_34 : f32 to vector<2x32xf32>
    %45 = arith.addf %44, %43 : vector<2x32xf32>
    %c0_35 = arith.constant 0 : index
    %c0_36 = arith.constant 0 : index
    %46 = vector.load %arg3[%c0_35, %c0_36] : memref<16x32xbf16, #tpu.memory_space<vmem>>, vector<16x32xbf16>
    %c0_37 = arith.constant 0 : index
    %c0_38 = arith.constant 0 : index
    %47 = vector.load %arg4[%c0_37, %c0_38] : memref<16x8xbf16, #tpu.memory_space<vmem>>, vector<16x8xbf16>
    %c0_39 = arith.constant 0 : index
    %c0_40 = arith.constant 0 : index
    %48 = vector.load %arg6[%c0_39, %c0_40] : memref<2x16xbf16, #tpu.memory_space<vmem>>, vector<2x16xbf16>
    %cst_41 = arith.constant dense<0.000000e+00> : vector<16x32xf32>
    %49 = tpu.matmul %46, %0, %cst_41 {dimension_numbers = #tpu.dot_dimension_numbers<[1], [0], [0], [1], [0, 0, 1, 1], [], []>} : vector<16x32xbf16>, vector<32x32xbf16>, vector<16x32xf32> -> vector<16x32xf32>
    %cst_42 = arith.constant dense<0.000000e+00> : vector<16x32xf32>
    %50 = tpu.matmul %47, %1, %cst_42 {dimension_numbers = #tpu.dot_dimension_numbers<[1], [0], [0], [1], [0, 0, 1, 1], [], []>} : vector<16x8xbf16>, vector<8x32xbf16>, vector<16x32xf32> -> vector<16x32xf32>
    %51 = arith.addf %49, %50 : vector<16x32xf32>
    %52 = vector.broadcast %2 : vector<1x32xf32> to vector<16x32xf32>
    %53 = arith.addf %51, %52 : vector<16x32xf32>
    %cst_43 = arith.constant 0.000000e+00 : f32
    %54 = vector.broadcast %cst_43 : f32 to vector<16x32xf32>
    %55 = arith.maximumf %53, %54 : vector<16x32xf32>
    %56 = arith.truncf %55 : vector<16x32xf32> to vector<16x32xbf16>
    %cst_44 = arith.constant dense<0.000000e+00> : vector<16x32xf32>
    %57 = tpu.matmul %56, %3, %cst_44 {dimension_numbers = #tpu.dot_dimension_numbers<[1], [0], [0], [1], [0, 0, 1, 1], [], []>} : vector<16x32xbf16>, vector<32x32xbf16>, vector<16x32xf32> -> vector<16x32xf32>
    %58 = vector.broadcast %4 : vector<1x32xf32> to vector<16x32xf32>
    %59 = arith.addf %57, %58 : vector<16x32xf32>
    %cst_45 = arith.constant 0.000000e+00 : f32
    %60 = vector.broadcast %cst_45 : f32 to vector<16x32xf32>
    %61 = arith.maximumf %59, %60 : vector<16x32xf32>
    %62 = arith.truncf %61 : vector<16x32xf32> to vector<16x32xbf16>
    %cst_46 = arith.constant dense<0.000000e+00> : vector<2x32xf32>
    %63 = tpu.matmul %48, %62, %cst_46 {dimension_numbers = #tpu.dot_dimension_numbers<[1], [0], [0], [1], [0, 0, 1, 1], [], []>} : vector<2x16xbf16>, vector<16x32xbf16>, vector<2x32xf32> -> vector<2x32xf32>
    %cst_47 = arith.constant 1.250000e-01 : f32
    %64 = vector.broadcast %cst_47 : f32 to vector<2x32xf32>
    %65 = arith.mulf %63, %64 : vector<2x32xf32>
    %66 = arith.truncf %65 : vector<2x32xf32> to vector<2x32xbf16>
    %cst_48 = arith.constant dense<0.000000e+00> : vector<2x32xf32>
    %67 = tpu.matmul %66, %5, %cst_48 {dimension_numbers = #tpu.dot_dimension_numbers<[1], [0], [0], [1], [0, 0, 1, 1], [], []>} : vector<2x32xbf16>, vector<32x32xbf16>, vector<2x32xf32> -> vector<2x32xf32>
    %68 = vector.broadcast %6 : vector<1x32xf32> to vector<2x32xf32>
    %69 = arith.addf %67, %68 : vector<2x32xf32>
    %70 = arith.truncf %65 : vector<2x32xf32> to vector<2x32xbf16>
    %cst_49 = arith.constant dense<0.000000e+00> : vector<2x32xf32>
    %71 = tpu.matmul %70, %7, %cst_49 {dimension_numbers = #tpu.dot_dimension_numbers<[1], [0], [0], [1], [0, 0, 1, 1], [], []>} : vector<2x32xbf16>, vector<32x32xbf16>, vector<2x32xf32> -> vector<2x32xf32>
    %72 = vector.broadcast %8 : vector<1x32xf32> to vector<2x32xf32>
    %73 = arith.addf %71, %72 : vector<2x32xf32>
    %cst_50 = arith.constant 0.000000e+00 : f32
    %74 = vector.broadcast %cst_50 : f32 to vector<2x32xf32>
    %75 = arith.subf %74, %73 : vector<2x32xf32>
    %76 = math.exp %75 : vector<2x32xf32>
    %cst_51 = arith.constant 1.000000e+00 : f32
    %77 = vector.broadcast %cst_51 : f32 to vector<2x32xf32>
    %78 = arith.addf %77, %76 : vector<2x32xf32>
    %cst_52 = arith.constant 0.899999976 : f32
    %79 = vector.broadcast %cst_52 : f32 to vector<2x32xf32>
    %80 = arith.divf %79, %78 : vector<2x32xf32>
    %cst_53 = arith.constant 1.000000e-01 : f32
    %81 = vector.broadcast %cst_53 : f32 to vector<2x32xf32>
    %82 = arith.addf %81, %80 : vector<2x32xf32>
    %c0_54 = arith.constant 0 : index
    %c0_55 = arith.constant 0 : index
    %83 = vector.load %arg16[%c0_54, %c0_55] : memref<2x32xf32, #tpu.memory_space<vmem>>, vector<2x32xf32>
    tpu.vector_store %arg16[%c0_54, %c0_55], %32 {strides = array<i32>} : memref<2x32xf32, #tpu.memory_space<vmem>>, vector<2x32xf32>,
    %c0_56 = arith.constant 0 : index
    %c0_57 = arith.constant 0 : index
    %84 = vector.load %arg17[%c0_56, %c0_57] : memref<2x32xf32, #tpu.memory_space<vmem>>, vector<2x32xf32>
    tpu.vector_store %arg17[%c0_56, %c0_57], %45 {strides = array<i32>} : memref<2x32xf32, #tpu.memory_space<vmem>>, vector<2x32xf32>,
    %c0_58 = arith.constant 0 : index
    %c0_59 = arith.constant 0 : index
    %85 = vector.load %arg18[%c0_58, %c0_59] : memref<2x32xf32, #tpu.memory_space<vmem>>, vector<2x32xf32>
    tpu.vector_store %arg18[%c0_58, %c0_59], %69 {strides = array<i32>} : memref<2x32xf32, #tpu.memory_space<vmem>>, vector<2x32xf32>,
    %c0_60 = arith.constant 0 : index
    %c0_61 = arith.constant 0 : index
    %86 = vector.load %arg19[%c0_60, %c0_61] : memref<2x32xf32, #tpu.memory_space<vmem>>, vector<2x32xf32>
    tpu.vector_store %arg19[%c0_60, %c0_61], %82 {strides = array<i32>} : memref<2x32xf32, #tpu.memory_space<vmem>>, vector<2x32xf32>,
    return
  }
  func.func @transform_0(%arg0: i32) -> (i32, i32) {
    %c0_i32 = arith.constant 0 : i32
    %c0_i32_0 = arith.constant 0 : i32
    return %arg0, %c0_i32 : i32, i32
  }
  func.func @transform_1(%arg0: i32) -> (i32, i32) {
    %c0_i32 = arith.constant 0 : i32
    %c0_i32_0 = arith.constant 0 : i32
    return %arg0, %c0_i32 : i32, i32
  }
  func.func @transform_2(%arg0: i32) -> (i32, i32) {
    %c0_i32 = arith.constant 0 : i32
    %c0_i32_0 = arith.constant 0 : i32
    return %arg0, %c0_i32 : i32, i32
  }
  func.func @transform_3(%arg0: i32) -> (i32, i32) {
    %c0_i32 = arith.constant 0 : i32
    %c0_i32_0 = arith.constant 0 : i32
    return %arg0, %c0_i32 : i32, i32
  }
  func.func @transform_4(%arg0: i32) -> (i32, i32) {
    %c0_i32 = arith.constant 0 : i32
    %c0_i32_0 = arith.constant 0 : i32
    %c0_i32_1 = arith.constant 0 : i32
    return %c0_i32, %c0_i32_0 : i32, i32
  }
  func.func @transform_5(%arg0: i32) -> (i32, i32) {
    %c0_i32 = arith.constant 0 : i32
    %c0_i32_0 = arith.constant 0 : i32
    %c0_i32_1 = arith.constant 0 : i32
    return %c0_i32, %c0_i32_0 : i32, i32
  }
  func.func @transform_6(%arg0: i32) -> (i32, i32) {
    %c0_i32 = arith.constant 0 : i32
    %c0_i32_0 = arith.constant 0 : i32
    %c0_i32_1 = arith.constant 0 : i32
    return %c0_i32, %c0_i32_0 : i32, i32
  }
  func.func @transform_7(%arg0: i32) -> (i32, i32) {
    %c0_i32 = arith.constant 0 : i32
    %c0_i32_0 = arith.constant 0 : i32
    %c0_i32_1 = arith.constant 0 : i32
    return %c0_i32, %c0_i32_0 : i32, i32
  }
  func.func @transform_8(%arg0: i32) -> (i32, i32) {
    %c0_i32 = arith.constant 0 : i32
    %c0_i32_0 = arith.constant 0 : i32
    %c0_i32_1 = arith.constant 0 : i32
    return %c0_i32, %c0_i32_0 : i32, i32
  }
  func.func @transform_9(%arg0: i32) -> (i32, i32) {
    %c0_i32 = arith.constant 0 : i32
    %c0_i32_0 = arith.constant 0 : i32
    %c0_i32_1 = arith.constant 0 : i32
    return %c0_i32, %c0_i32_0 : i32, i32
  }
  func.func @transform_10(%arg0: i32) -> (i32, i32) {
    %c0_i32 = arith.constant 0 : i32
    %c0_i32_0 = arith.constant 0 : i32
    %c0_i32_1 = arith.constant 0 : i32
    return %c0_i32, %c0_i32_0 : i32, i32
  }
  func.func @transform_11(%arg0: i32) -> (i32, i32) {
    %c0_i32 = arith.constant 0 : i32
    %c0_i32_0 = arith.constant 0 : i32
    %c0_i32_1 = arith.constant 0 : i32
    return %c0_i32, %c0_i32_0 : i32, i32
  }
  func.func @transform_12(%arg0: i32) -> (i32, i32) {
    %c0_i32 = arith.constant 0 : i32
    %c0_i32_0 = arith.constant 0 : i32
    %c0_i32_1 = arith.constant 0 : i32
    return %c0_i32, %c0_i32_0 : i32, i32
  }
  func.func @transform_13(%arg0: i32) -> (i32, i32) {
    %c0_i32 = arith.constant 0 : i32
    %c0_i32_0 = arith.constant 0 : i32
    %c0_i32_1 = arith.constant 0 : i32
    return %c0_i32, %c0_i32_0 : i32, i32
  }
  func.func @transform_14(%arg0: i32) -> (i32, i32) {
    %c0_i32 = arith.constant 0 : i32
    %c0_i32_0 = arith.constant 0 : i32
    %c0_i32_1 = arith.constant 0 : i32
    return %c0_i32, %c0_i32_0 : i32, i32
  }
  func.func @transform_15(%arg0: i32) -> (i32, i32) {
    %c0_i32 = arith.constant 0 : i32
    %c0_i32_0 = arith.constant 0 : i32
    return %arg0, %c0_i32 : i32, i32
  }
  func.func @transform_16(%arg0: i32) -> (i32, i32) {
    %c0_i32 = arith.constant 0 : i32
    %c0_i32_0 = arith.constant 0 : i32
    return %arg0, %c0_i32 : i32, i32
  }
  func.func @transform_17(%arg0: i32) -> (i32, i32) {
    %c0_i32 = arith.constant 0 : i32
    %c0_i32_0 = arith.constant 0 : i32
    return %arg0, %c0_i32 : i32, i32
  }
  func.func @transform_18(%arg0: i32) -> (i32, i32) {
    %c0_i32 = arith.constant 0 : i32
    %c0_i32_0 = arith.constant 0 : i32
    return %arg0, %c0_i32 : i32, i32
  }
}

module attributes {stable_mosaic.version = 11 : i64} {
  func.func @_cross_decode_kernel(%arg0: i32, %arg1: memref<16x32xbf16, #tpu.memory_space<vmem>>, %arg2: memref<16x8xbf16, #tpu.memory_space<vmem>>, %arg3: memref<16x32xbf16, #tpu.memory_space<vmem>>, %arg4: memref<2x32xbf16, #tpu.memory_space<vmem>>, %arg5: memref<4x1x32xf32, #tpu.memory_space<vmem>>, %arg6: memref<16x16xf32, #tpu.memory_space<vmem>>, %arg7: memref<16x2xbf16, #tpu.memory_space<vmem>>, %arg8: memref<32x32xbf16, #tpu.memory_space<vmem>>, %arg9: memref<8x32xbf16, #tpu.memory_space<vmem>>, %arg10: memref<1x32xf32, #tpu.memory_space<vmem>>, %arg11: memref<32x32xbf16, #tpu.memory_space<vmem>>, %arg12: memref<1x32xf32, #tpu.memory_space<vmem>>, %arg13: memref<32x32xbf16, #tpu.memory_space<vmem>>, %arg14: memref<1x32xf32, #tpu.memory_space<vmem>>, %arg15: memref<32x32xbf16, #tpu.memory_space<vmem>>, %arg16: memref<1x32xf32, #tpu.memory_space<vmem>>, %arg17: memref<32x32xbf16, #tpu.memory_space<vmem>>, %arg18: memref<1x32xf32, #tpu.memory_space<vmem>>, %arg19: memref<32x32xbf16, #tpu.memory_space<vmem>>, %arg20: memref<1x32xf32, #tpu.memory_space<vmem>>, %arg21: memref<32x32xbf16, #tpu.memory_space<vmem>>, %arg22: memref<32x32xbf16, #tpu.memory_space<vmem>>, %arg23: memref<1x32xf32, #tpu.memory_space<vmem>>, %arg24: memref<32x32xbf16, #tpu.memory_space<vmem>>, %arg25: memref<1x32xf32, #tpu.memory_space<vmem>>, %arg26: memref<32x2xbf16, #tpu.memory_space<vmem>>, %arg27: memref<1x2xf32, #tpu.memory_space<vmem>>, %arg28: memref<16x2xf32, #tpu.memory_space<vmem>>) attributes {dimension_semantics = [#tpu.dimension_semantics<parallel>], iteration_bounds = array<i64: 1>, scalar_prefetch = 0 : i64, scratch_operands = 0 : i64, tpu.core_type = #tpu.core_type<tc>, window_params = [{transform_indices = @transform_0, window_bounds = array<i64: 16, 32>}, {transform_indices = @transform_1, window_bounds = array<i64: 16, 8>}, {transform_indices = @transform_2, window_bounds = array<i64: 16, 32>}, {transform_indices = @transform_3, window_bounds = array<i64: 2, 32>}, {pipeline_mode = #tpu.pipeline_mode<synchronous>, transform_indices = @transform_4, window_bounds = array<i64: 4, 1, 32>}, {pipeline_mode = #tpu.pipeline_mode<synchronous>, transform_indices = @transform_5, window_bounds = array<i64: 16, 16>}, {pipeline_mode = #tpu.pipeline_mode<synchronous>, transform_indices = @transform_6, window_bounds = array<i64: 16, 2>}, {pipeline_mode = #tpu.pipeline_mode<synchronous>, transform_indices = @transform_7, window_bounds = array<i64: 32, 32>}, {pipeline_mode = #tpu.pipeline_mode<synchronous>, transform_indices = @transform_8, window_bounds = array<i64: 8, 32>}, {pipeline_mode = #tpu.pipeline_mode<synchronous>, transform_indices = @transform_9, window_bounds = array<i64: 1, 32>}, {pipeline_mode = #tpu.pipeline_mode<synchronous>, transform_indices = @transform_10, window_bounds = array<i64: 32, 32>}, {pipeline_mode = #tpu.pipeline_mode<synchronous>, transform_indices = @transform_11, window_bounds = array<i64: 1, 32>}, {pipeline_mode = #tpu.pipeline_mode<synchronous>, transform_indices = @transform_12, window_bounds = array<i64: 32, 32>}, {pipeline_mode = #tpu.pipeline_mode<synchronous>, transform_indices = @transform_13, window_bounds = array<i64: 1, 32>}, {pipeline_mode = #tpu.pipeline_mode<synchronous>, transform_indices = @transform_14, window_bounds = array<i64: 32, 32>}, {pipeline_mode = #tpu.pipeline_mode<synchronous>, transform_indices = @transform_15, window_bounds = array<i64: 1, 32>}, {pipeline_mode = #tpu.pipeline_mode<synchronous>, transform_indices = @transform_16, window_bounds = array<i64: 32, 32>}, {pipeline_mode = #tpu.pipeline_mode<synchronous>, transform_indices = @transform_17, window_bounds = array<i64: 1, 32>}, {pipeline_mode = #tpu.pipeline_mode<synchronous>, transform_indices = @transform_18, window_bounds = array<i64: 32, 32>}, {pipeline_mode = #tpu.pipeline_mode<synchronous>, transform_indices = @transform_19, window_bounds = array<i64: 1, 32>}, {pipeline_mode = #tpu.pipeline_mode<synchronous>, transform_indices = @transform_20, window_bounds = array<i64: 32, 32>}, {pipeline_mode = #tpu.pipeline_mode<synchronous>, transform_indices = @transform_21, window_bounds = array<i64: 32, 32>}, {pipeline_mode = #tpu.pipeline_mode<synchronous>, transform_indices = @transform_22, window_bounds = array<i64: 1, 32>}, {pipeline_mode = #tpu.pipeline_mode<synchronous>, transform_indices = @transform_23, window_bounds = array<i64: 32, 32>}, {pipeline_mode = #tpu.pipeline_mode<synchronous>, transform_indices = @transform_24, window_bounds = array<i64: 1, 32>}, {pipeline_mode = #tpu.pipeline_mode<synchronous>, transform_indices = @transform_25, window_bounds = array<i64: 32, 2>}, {pipeline_mode = #tpu.pipeline_mode<synchronous>, transform_indices = @transform_26, window_bounds = array<i64: 1, 2>}, {transform_indices = @transform_27, window_bounds = array<i64: 16, 2>}]} {
    %c0 = arith.constant 0 : index
    %c0_0 = arith.constant 0 : index
    %0 = vector.load %arg1[%c0, %c0_0] : memref<16x32xbf16, #tpu.memory_space<vmem>>, vector<16x32xbf16>
    %c0_1 = arith.constant 0 : index
    %c0_2 = arith.constant 0 : index
    %1 = vector.load %arg2[%c0_1, %c0_2] : memref<16x8xbf16, #tpu.memory_space<vmem>>, vector<16x8xbf16>
    %c0_3 = arith.constant 0 : index
    %c0_4 = arith.constant 0 : index
    %2 = vector.load %arg3[%c0_3, %c0_4] : memref<16x32xbf16, #tpu.memory_space<vmem>>, vector<16x32xbf16>
    %c0_5 = arith.constant 0 : index
    %c0_6 = arith.constant 0 : index
    %3 = vector.load %arg8[%c0_5, %c0_6] : memref<32x32xbf16, #tpu.memory_space<vmem>>, vector<32x32xbf16>
    %cst = arith.constant dense<0.000000e+00> : vector<16x32xf32>
    %4 = tpu.matmul %0, %3, %cst {dimension_numbers = #tpu.dot_dimension_numbers<[1], [0], [0], [1], [0, 0, 1, 1], [], []>} : vector<16x32xbf16>, vector<32x32xbf16>, vector<16x32xf32> -> vector<16x32xf32>
    %c0_7 = arith.constant 0 : index
    %c0_8 = arith.constant 0 : index
    %5 = vector.load %arg9[%c0_7, %c0_8] : memref<8x32xbf16, #tpu.memory_space<vmem>>, vector<8x32xbf16>
    %cst_9 = arith.constant dense<0.000000e+00> : vector<16x32xf32>
    %6 = tpu.matmul %1, %5, %cst_9 {dimension_numbers = #tpu.dot_dimension_numbers<[1], [0], [0], [1], [0, 0, 1, 1], [], []>} : vector<16x8xbf16>, vector<8x32xbf16>, vector<16x32xf32> -> vector<16x32xf32>
    %7 = arith.addf %4, %6 : vector<16x32xf32>
    %c0_10 = arith.constant 0 : index
    %c0_11 = arith.constant 0 : index
    %8 = vector.load %arg10[%c0_10, %c0_11] : memref<1x32xf32, #tpu.memory_space<vmem>>, vector<1x32xf32>
    %9 = vector.broadcast %8 : vector<1x32xf32> to vector<16x32xf32>
    %10 = arith.addf %7, %9 : vector<16x32xf32>
    %cst_12 = arith.constant 0.000000e+00 : f32
    %11 = vector.broadcast %cst_12 : f32 to vector<16x32xf32>
    %12 = arith.maximumf %10, %11 : vector<16x32xf32>
    %13 = arith.truncf %12 : vector<16x32xf32> to vector<16x32xbf16>
    %c0_13 = arith.constant 0 : index
    %c0_14 = arith.constant 0 : index
    %14 = vector.load %arg11[%c0_13, %c0_14] : memref<32x32xbf16, #tpu.memory_space<vmem>>, vector<32x32xbf16>
    %cst_15 = arith.constant dense<0.000000e+00> : vector<16x32xf32>
    %15 = tpu.matmul %13, %14, %cst_15 {dimension_numbers = #tpu.dot_dimension_numbers<[1], [0], [0], [1], [0, 0, 1, 1], [], []>} : vector<16x32xbf16>, vector<32x32xbf16>, vector<16x32xf32> -> vector<16x32xf32>
    %c0_16 = arith.constant 0 : index
    %c0_17 = arith.constant 0 : index
    %16 = vector.load %arg12[%c0_16, %c0_17] : memref<1x32xf32, #tpu.memory_space<vmem>>, vector<1x32xf32>
    %17 = vector.broadcast %16 : vector<1x32xf32> to vector<16x32xf32>
    %18 = arith.addf %15, %17 : vector<16x32xf32>
    %cst_18 = arith.constant 0.000000e+00 : f32
    %19 = vector.broadcast %cst_18 : f32 to vector<16x32xf32>
    %20 = arith.maximumf %18, %19 : vector<16x32xf32>
    %c0_19 = arith.constant 0 : index
    %c0_20 = arith.constant 0 : index
    %21 = vector.load %arg13[%c0_19, %c0_20] : memref<32x32xbf16, #tpu.memory_space<vmem>>, vector<32x32xbf16>
    %cst_21 = arith.constant dense<0.000000e+00> : vector<16x32xf32>
    %22 = tpu.matmul %2, %21, %cst_21 {dimension_numbers = #tpu.dot_dimension_numbers<[1], [0], [0], [1], [0, 0, 1, 1], [], []>} : vector<16x32xbf16>, vector<32x32xbf16>, vector<16x32xf32> -> vector<16x32xf32>
    %c0_22 = arith.constant 0 : index
    %c0_23 = arith.constant 0 : index
    %23 = vector.load %arg14[%c0_22, %c0_23] : memref<1x32xf32, #tpu.memory_space<vmem>>, vector<1x32xf32>
    %24 = vector.broadcast %23 : vector<1x32xf32> to vector<16x32xf32>
    %25 = arith.addf %22, %24 : vector<16x32xf32>
    %c0_24 = arith.constant 0 : index
    %c0_25 = arith.constant 0 : index
    %26 = vector.load %arg15[%c0_24, %c0_25] : memref<32x32xbf16, #tpu.memory_space<vmem>>, vector<32x32xbf16>
    %cst_26 = arith.constant dense<0.000000e+00> : vector<16x32xf32>
    %27 = tpu.matmul %0, %26, %cst_26 {dimension_numbers = #tpu.dot_dimension_numbers<[1], [0], [0], [1], [0, 0, 1, 1], [], []>} : vector<16x32xbf16>, vector<32x32xbf16>, vector<16x32xf32> -> vector<16x32xf32>
    %c0_27 = arith.constant 0 : index
    %c0_28 = arith.constant 0 : index
    %28 = vector.load %arg16[%c0_27, %c0_28] : memref<1x32xf32, #tpu.memory_space<vmem>>, vector<1x32xf32>
    %29 = vector.broadcast %28 : vector<1x32xf32> to vector<16x32xf32>
    %30 = arith.addf %27, %29 : vector<16x32xf32>
    %31 = arith.truncf %30 : vector<16x32xf32> to vector<16x32xbf16>
    %32 = arith.truncf %20 : vector<16x32xf32> to vector<16x32xbf16>
    %c0_29 = arith.constant 0 : index
    %c0_30 = arith.constant 0 : index
    %33 = vector.load %arg17[%c0_29, %c0_30] : memref<32x32xbf16, #tpu.memory_space<vmem>>, vector<32x32xbf16>
    %cst_31 = arith.constant dense<0.000000e+00> : vector<16x32xf32>
    %34 = tpu.matmul %32, %33, %cst_31 {dimension_numbers = #tpu.dot_dimension_numbers<[1], [0], [0], [1], [0, 0, 1, 1], [], []>} : vector<16x32xbf16>, vector<32x32xbf16>, vector<16x32xf32> -> vector<16x32xf32>
    %c0_32 = arith.constant 0 : index
    %c0_33 = arith.constant 0 : index
    %35 = vector.load %arg18[%c0_32, %c0_33] : memref<1x32xf32, #tpu.memory_space<vmem>>, vector<1x32xf32>
    %36 = vector.broadcast %35 : vector<1x32xf32> to vector<16x32xf32>
    %37 = arith.addf %34, %36 : vector<16x32xf32>
    %38 = arith.truncf %37 : vector<16x32xf32> to vector<16x32xbf16>
    %c0_34 = arith.constant 0 : index
    %c0_35 = arith.constant 0 : index
    %39 = vector.load %arg6[%c0_34, %c0_35] : memref<16x16xf32, #tpu.memory_space<vmem>>, vector<16x16xf32>
    %cst_36 = arith.constant 0.000000e+00 : f32
    %40 = vector.broadcast %cst_36 : f32 to vector<16x32xf32>
    %c0_37 = arith.constant 0 : index
    %c0_38 = arith.constant 0 : index
    %c0_39 = arith.constant 0 : index
    %41 = vector.load %arg5[%c0_37, %c0_38, %c0_39] : memref<4x1x32xf32, #tpu.memory_space<vmem>>, vector<1x1x32xf32>
    %42 = vector.shape_cast %41 : vector<1x1x32xf32> to vector<1x32xf32>
    %43 = vector.broadcast %42 : vector<1x32xf32> to vector<16x32xf32>
    %44 = arith.mulf %25, %43 : vector<16x32xf32>
    %45 = arith.truncf %44 : vector<16x32xf32> to vector<16x32xbf16>
    %cst_40 = arith.constant dense<0.000000e+00> : vector<16x16xf32>
    %46 = tpu.matmul %45, %31, %cst_40 {dimension_numbers = #tpu.dot_dimension_numbers<[1], [1], [0], [0], [0, 0, 1, 0], [], []>} : vector<16x32xbf16>, vector<16x32xbf16>, vector<16x16xf32> -> vector<16x16xf32>
    %cst_41 = arith.constant 0.353553385 : f32
    %47 = vector.broadcast %cst_41 : f32 to vector<16x16xf32>
    %48 = arith.mulf %46, %47 : vector<16x16xf32>
    %49 = arith.addf %48, %39 : vector<16x16xf32>
    %cst_42 = arith.constant dense<0xFF800000> : vector<16xf32>
    %50 = vector.multi_reduction <maximumf>, %49, %cst_42 [1] : vector<16x16xf32> to vector<16xf32>
    %51 = vector.shape_cast %50 : vector<16xf32> to vector<16x1xf32>
    %52 = vector.broadcast %51 : vector<16x1xf32> to vector<16x16xf32>
    %53 = arith.subf %49, %52 : vector<16x16xf32>
    %54 = math.exp %53 : vector<16x16xf32>
    %cst_43 = arith.constant dense<0.000000e+00> : vector<16xf32>
    %55 = vector.multi_reduction <add>, %54, %cst_43 [1] : vector<16x16xf32> to vector<16xf32>
    %56 = vector.shape_cast %55 : vector<16xf32> to vector<16x1xf32>
    %57 = tpu.reciprocal %56 {approx = true} : vector<16x1xf32> -> vector<16x1xf32>
    %58 = vector.broadcast %57 : vector<16x1xf32> to vector<16x16xf32>
    %59 = arith.mulf %54, %58 : vector<16x16xf32>
    %60 = arith.truncf %59 : vector<16x16xf32> to vector<16x16xbf16>
    %cst_44 = arith.constant dense<0.000000e+00> : vector<16x32xf32>
    %61 = tpu.matmul %60, %38, %cst_44 {dimension_numbers = #tpu.dot_dimension_numbers<[1], [0], [0], [1], [0, 0, 1, 1], [], []>} : vector<16x16xbf16>, vector<16x32xbf16>, vector<16x32xf32> -> vector<16x32xf32>
    %62 = vector.broadcast %42 : vector<1x32xf32> to vector<16x32xf32>
    %63 = arith.mulf %61, %62 : vector<16x32xf32>
    %64 = arith.addf %40, %63 : vector<16x32xf32>
    %c1 = arith.constant 1 : index
    %c0_45 = arith.constant 0 : index
    %c0_46 = arith.constant 0 : index
    %65 = vector.load %arg5[%c1, %c0_45, %c0_46] : memref<4x1x32xf32, #tpu.memory_space<vmem>>, vector<1x1x32xf32>
    %66 = vector.shape_cast %65 : vector<1x1x32xf32> to vector<1x32xf32>
    %67 = vector.broadcast %66 : vector<1x32xf32> to vector<16x32xf32>
    %68 = arith.mulf %25, %67 : vector<16x32xf32>
    %69 = arith.truncf %68 : vector<16x32xf32> to vector<16x32xbf16>
    %cst_47 = arith.constant dense<0.000000e+00> : vector<16x16xf32>
    %70 = tpu.matmul %69, %31, %cst_47 {dimension_numbers = #tpu.dot_dimension_numbers<[1], [1], [0], [0], [0, 0, 1, 0], [], []>} : vector<16x32xbf16>, vector<16x32xbf16>, vector<16x16xf32> -> vector<16x16xf32>
    %cst_48 = arith.constant 0.353553385 : f32
    %71 = vector.broadcast %cst_48 : f32 to vector<16x16xf32>
    %72 = arith.mulf %70, %71 : vector<16x16xf32>
    %73 = arith.addf %72, %39 : vector<16x16xf32>
    %cst_49 = arith.constant dense<0xFF800000> : vector<16xf32>
    %74 = vector.multi_reduction <maximumf>, %73, %cst_49 [1] : vector<16x16xf32> to vector<16xf32>
    %75 = vector.shape_cast %74 : vector<16xf32> to vector<16x1xf32>
    %76 = vector.broadcast %75 : vector<16x1xf32> to vector<16x16xf32>
    %77 = arith.subf %73, %76 : vector<16x16xf32>
    %78 = math.exp %77 : vector<16x16xf32>
    %cst_50 = arith.constant dense<0.000000e+00> : vector<16xf32>
    %79 = vector.multi_reduction <add>, %78, %cst_50 [1] : vector<16x16xf32> to vector<16xf32>
    %80 = vector.shape_cast %79 : vector<16xf32> to vector<16x1xf32>
    %81 = tpu.reciprocal %80 {approx = true} : vector<16x1xf32> -> vector<16x1xf32>
    %82 = vector.broadcast %81 : vector<16x1xf32> to vector<16x16xf32>
    %83 = arith.mulf %78, %82 : vector<16x16xf32>
    %84 = arith.truncf %83 : vector<16x16xf32> to vector<16x16xbf16>
    %cst_51 = arith.constant dense<0.000000e+00> : vector<16x32xf32>
    %85 = tpu.matmul %84, %38, %cst_51 {dimension_numbers = #tpu.dot_dimension_numbers<[1], [0], [0], [1], [0, 0, 1, 1], [], []>} : vector<16x16xbf16>, vector<16x32xbf16>, vector<16x32xf32> -> vector<16x32xf32>
    %86 = vector.broadcast %66 : vector<1x32xf32> to vector<16x32xf32>
    %87 = arith.mulf %85, %86 : vector<16x32xf32>
    %88 = arith.addf %64, %87 : vector<16x32xf32>
    %c2 = arith.constant 2 : index
    %c0_52 = arith.constant 0 : index
    %c0_53 = arith.constant 0 : index
    %89 = vector.load %arg5[%c2, %c0_52, %c0_53] : memref<4x1x32xf32, #tpu.memory_space<vmem>>, vector<1x1x32xf32>
    %90 = vector.shape_cast %89 : vector<1x1x32xf32> to vector<1x32xf32>
    %91 = vector.broadcast %90 : vector<1x32xf32> to vector<16x32xf32>
    %92 = arith.mulf %25, %91 : vector<16x32xf32>
    %93 = arith.truncf %92 : vector<16x32xf32> to vector<16x32xbf16>
    %cst_54 = arith.constant dense<0.000000e+00> : vector<16x16xf32>
    %94 = tpu.matmul %93, %31, %cst_54 {dimension_numbers = #tpu.dot_dimension_numbers<[1], [1], [0], [0], [0, 0, 1, 0], [], []>} : vector<16x32xbf16>, vector<16x32xbf16>, vector<16x16xf32> -> vector<16x16xf32>
    %cst_55 = arith.constant 0.353553385 : f32
    %95 = vector.broadcast %cst_55 : f32 to vector<16x16xf32>
    %96 = arith.mulf %94, %95 : vector<16x16xf32>
    %97 = arith.addf %96, %39 : vector<16x16xf32>
    %cst_56 = arith.constant dense<0xFF800000> : vector<16xf32>
    %98 = vector.multi_reduction <maximumf>, %97, %cst_56 [1] : vector<16x16xf32> to vector<16xf32>
    %99 = vector.shape_cast %98 : vector<16xf32> to vector<16x1xf32>
    %100 = vector.broadcast %99 : vector<16x1xf32> to vector<16x16xf32>
    %101 = arith.subf %97, %100 : vector<16x16xf32>
    %102 = math.exp %101 : vector<16x16xf32>
    %cst_57 = arith.constant dense<0.000000e+00> : vector<16xf32>
    %103 = vector.multi_reduction <add>, %102, %cst_57 [1] : vector<16x16xf32> to vector<16xf32>
    %104 = vector.shape_cast %103 : vector<16xf32> to vector<16x1xf32>
    %105 = tpu.reciprocal %104 {approx = true} : vector<16x1xf32> -> vector<16x1xf32>
    %106 = vector.broadcast %105 : vector<16x1xf32> to vector<16x16xf32>
    %107 = arith.mulf %102, %106 : vector<16x16xf32>
    %108 = arith.truncf %107 : vector<16x16xf32> to vector<16x16xbf16>
    %cst_58 = arith.constant dense<0.000000e+00> : vector<16x32xf32>
    %109 = tpu.matmul %108, %38, %cst_58 {dimension_numbers = #tpu.dot_dimension_numbers<[1], [0], [0], [1], [0, 0, 1, 1], [], []>} : vector<16x16xbf16>, vector<16x32xbf16>, vector<16x32xf32> -> vector<16x32xf32>
    %110 = vector.broadcast %90 : vector<1x32xf32> to vector<16x32xf32>
    %111 = arith.mulf %109, %110 : vector<16x32xf32>
    %112 = arith.addf %88, %111 : vector<16x32xf32>
    %c3 = arith.constant 3 : index
    %c0_59 = arith.constant 0 : index
    %c0_60 = arith.constant 0 : index
    %113 = vector.load %arg5[%c3, %c0_59, %c0_60] : memref<4x1x32xf32, #tpu.memory_space<vmem>>, vector<1x1x32xf32>
    %114 = vector.shape_cast %113 : vector<1x1x32xf32> to vector<1x32xf32>
    %115 = vector.broadcast %114 : vector<1x32xf32> to vector<16x32xf32>
    %116 = arith.mulf %25, %115 : vector<16x32xf32>
    %117 = arith.truncf %116 : vector<16x32xf32> to vector<16x32xbf16>
    %cst_61 = arith.constant dense<0.000000e+00> : vector<16x16xf32>
    %118 = tpu.matmul %117, %31, %cst_61 {dimension_numbers = #tpu.dot_dimension_numbers<[1], [1], [0], [0], [0, 0, 1, 0], [], []>} : vector<16x32xbf16>, vector<16x32xbf16>, vector<16x16xf32> -> vector<16x16xf32>
    %cst_62 = arith.constant 0.353553385 : f32
    %119 = vector.broadcast %cst_62 : f32 to vector<16x16xf32>
    %120 = arith.mulf %118, %119 : vector<16x16xf32>
    %121 = arith.addf %120, %39 : vector<16x16xf32>
    %cst_63 = arith.constant dense<0xFF800000> : vector<16xf32>
    %122 = vector.multi_reduction <maximumf>, %121, %cst_63 [1] : vector<16x16xf32> to vector<16xf32>
    %123 = vector.shape_cast %122 : vector<16xf32> to vector<16x1xf32>
    %124 = vector.broadcast %123 : vector<16x1xf32> to vector<16x16xf32>
    %125 = arith.subf %121, %124 : vector<16x16xf32>
    %126 = math.exp %125 : vector<16x16xf32>
    %cst_64 = arith.constant dense<0.000000e+00> : vector<16xf32>
    %127 = vector.multi_reduction <add>, %126, %cst_64 [1] : vector<16x16xf32> to vector<16xf32>
    %128 = vector.shape_cast %127 : vector<16xf32> to vector<16x1xf32>
    %129 = tpu.reciprocal %128 {approx = true} : vector<16x1xf32> -> vector<16x1xf32>
    %130 = vector.broadcast %129 : vector<16x1xf32> to vector<16x16xf32>
    %131 = arith.mulf %126, %130 : vector<16x16xf32>
    %132 = arith.truncf %131 : vector<16x16xf32> to vector<16x16xbf16>
    %cst_65 = arith.constant dense<0.000000e+00> : vector<16x32xf32>
    %133 = tpu.matmul %132, %38, %cst_65 {dimension_numbers = #tpu.dot_dimension_numbers<[1], [0], [0], [1], [0, 0, 1, 1], [], []>} : vector<16x16xbf16>, vector<16x32xbf16>, vector<16x32xf32> -> vector<16x32xf32>
    %134 = vector.broadcast %114 : vector<1x32xf32> to vector<16x32xf32>
    %135 = arith.mulf %133, %134 : vector<16x32xf32>
    %136 = arith.addf %112, %135 : vector<16x32xf32>
    %137 = arith.truncf %136 : vector<16x32xf32> to vector<16x32xbf16>
    %c0_66 = arith.constant 0 : index
    %c0_67 = arith.constant 0 : index
    %138 = vector.load %arg19[%c0_66, %c0_67] : memref<32x32xbf16, #tpu.memory_space<vmem>>, vector<32x32xbf16>
    %cst_68 = arith.constant dense<0.000000e+00> : vector<16x32xf32>
    %139 = tpu.matmul %137, %138, %cst_68 {dimension_numbers = #tpu.dot_dimension_numbers<[1], [0], [0], [1], [0, 0, 1, 1], [], []>} : vector<16x32xbf16>, vector<32x32xbf16>, vector<16x32xf32> -> vector<16x32xf32>
    %c0_69 = arith.constant 0 : index
    %c0_70 = arith.constant 0 : index
    %140 = vector.load %arg20[%c0_69, %c0_70] : memref<1x32xf32, #tpu.memory_space<vmem>>, vector<1x32xf32>
    %141 = vector.broadcast %140 : vector<1x32xf32> to vector<16x32xf32>
    %142 = arith.addf %139, %141 : vector<16x32xf32>
    %c0_71 = arith.constant 0 : index
    %c0_72 = arith.constant 0 : index
    %143 = vector.load %arg7[%c0_71, %c0_72] : memref<16x2xbf16, #tpu.memory_space<vmem>>, vector<16x2xbf16>
    %c0_73 = arith.constant 0 : index
    %c0_74 = arith.constant 0 : index
    %144 = vector.load %arg4[%c0_73, %c0_74] : memref<2x32xbf16, #tpu.memory_space<vmem>>, vector<2x32xbf16>
    %cst_75 = arith.constant dense<0.000000e+00> : vector<16x32xf32>
    %145 = tpu.matmul %143, %144, %cst_75 {dimension_numbers = #tpu.dot_dimension_numbers<[1], [0], [0], [1], [0, 0, 1, 1], [], []>} : vector<16x2xbf16>, vector<2x32xbf16>, vector<16x32xf32> -> vector<16x32xf32>
    %c0_76 = arith.constant 0 : index
    %c0_77 = arith.constant 0 : index
    %146 = vector.load %arg21[%c0_76, %c0_77] : memref<32x32xbf16, #tpu.memory_space<vmem>>, vector<32x32xbf16>
    %cst_78 = arith.constant dense<0.000000e+00> : vector<16x32xf32>
    %147 = tpu.matmul %2, %146, %cst_78 {dimension_numbers = #tpu.dot_dimension_numbers<[1], [0], [0], [1], [0, 0, 1, 1], [], []>} : vector<16x32xbf16>, vector<32x32xbf16>, vector<16x32xf32> -> vector<16x32xf32>
    %148 = arith.truncf %142 : vector<16x32xf32> to vector<16x32xbf16>
    %c0_79 = arith.constant 0 : index
    %c0_80 = arith.constant 0 : index
    %149 = vector.load %arg22[%c0_79, %c0_80] : memref<32x32xbf16, #tpu.memory_space<vmem>>, vector<32x32xbf16>
    %cst_81 = arith.constant dense<0.000000e+00> : vector<16x32xf32>
    %150 = tpu.matmul %148, %149, %cst_81 {dimension_numbers = #tpu.dot_dimension_numbers<[1], [0], [0], [1], [0, 0, 1, 1], [], []>} : vector<16x32xbf16>, vector<32x32xbf16>, vector<16x32xf32> -> vector<16x32xf32>
    %151 = arith.addf %147, %150 : vector<16x32xf32>
    %152 = arith.addf %151, %145 : vector<16x32xf32>
    %c0_82 = arith.constant 0 : index
    %c0_83 = arith.constant 0 : index
    %153 = vector.load %arg23[%c0_82, %c0_83] : memref<1x32xf32, #tpu.memory_space<vmem>>, vector<1x32xf32>
    %154 = vector.broadcast %153 : vector<1x32xf32> to vector<16x32xf32>
    %155 = arith.addf %152, %154 : vector<16x32xf32>
    %cst_84 = arith.constant 0.000000e+00 : f32
    %156 = vector.broadcast %cst_84 : f32 to vector<16x32xf32>
    %157 = arith.maximumf %155, %156 : vector<16x32xf32>
    %158 = arith.truncf %157 : vector<16x32xf32> to vector<16x32xbf16>
    %c0_85 = arith.constant 0 : index
    %c0_86 = arith.constant 0 : index
    %159 = vector.load %arg24[%c0_85, %c0_86] : memref<32x32xbf16, #tpu.memory_space<vmem>>, vector<32x32xbf16>
    %cst_87 = arith.constant dense<0.000000e+00> : vector<16x32xf32>
    %160 = tpu.matmul %158, %159, %cst_87 {dimension_numbers = #tpu.dot_dimension_numbers<[1], [0], [0], [1], [0, 0, 1, 1], [], []>} : vector<16x32xbf16>, vector<32x32xbf16>, vector<16x32xf32> -> vector<16x32xf32>
    %c0_88 = arith.constant 0 : index
    %c0_89 = arith.constant 0 : index
    %161 = vector.load %arg25[%c0_88, %c0_89] : memref<1x32xf32, #tpu.memory_space<vmem>>, vector<1x32xf32>
    %162 = vector.broadcast %161 : vector<1x32xf32> to vector<16x32xf32>
    %163 = arith.addf %160, %162 : vector<16x32xf32>
    %cst_90 = arith.constant 0.000000e+00 : f32
    %164 = vector.broadcast %cst_90 : f32 to vector<16x32xf32>
    %165 = arith.maximumf %163, %164 : vector<16x32xf32>
    %166 = arith.truncf %165 : vector<16x32xf32> to vector<16x32xbf16>
    %c0_91 = arith.constant 0 : index
    %c0_92 = arith.constant 0 : index
    %167 = vector.load %arg26[%c0_91, %c0_92] : memref<32x2xbf16, #tpu.memory_space<vmem>>, vector<32x2xbf16>
    %cst_93 = arith.constant dense<0.000000e+00> : vector<16x2xf32>
    %168 = tpu.matmul %166, %167, %cst_93 {dimension_numbers = #tpu.dot_dimension_numbers<[1], [0], [0], [1], [0, 0, 1, 1], [], []>} : vector<16x32xbf16>, vector<32x2xbf16>, vector<16x2xf32> -> vector<16x2xf32>
    %c0_94 = arith.constant 0 : index
    %c0_95 = arith.constant 0 : index
    %169 = vector.load %arg27[%c0_94, %c0_95] : memref<1x2xf32, #tpu.memory_space<vmem>>, vector<1x2xf32>
    %170 = vector.broadcast %169 : vector<1x2xf32> to vector<16x2xf32>
    %171 = arith.addf %168, %170 : vector<16x2xf32>
    %c0_96 = arith.constant 0 : index
    %c0_97 = arith.constant 0 : index
    %172 = vector.load %arg28[%c0_96, %c0_97] : memref<16x2xf32, #tpu.memory_space<vmem>>, vector<16x2xf32>
    tpu.vector_store %arg28[%c0_96, %c0_97], %171 {strides = array<i32>} : memref<16x2xf32, #tpu.memory_space<vmem>>, vector<16x2xf32>,
    return
  }
  func.func @transform_0(%arg0: i32) -> (i32, i32) {
    %c0_i32 = arith.constant 0 : i32
    %c0_i32_0 = arith.constant 0 : i32
    return %arg0, %c0_i32 : i32, i32
  }
  func.func @transform_1(%arg0: i32) -> (i32, i32) {
    %c0_i32 = arith.constant 0 : i32
    %c0_i32_0 = arith.constant 0 : i32
    return %arg0, %c0_i32 : i32, i32
  }
  func.func @transform_2(%arg0: i32) -> (i32, i32) {
    %c0_i32 = arith.constant 0 : i32
    %c0_i32_0 = arith.constant 0 : i32
    return %arg0, %c0_i32 : i32, i32
  }
  func.func @transform_3(%arg0: i32) -> (i32, i32) {
    %c0_i32 = arith.constant 0 : i32
    %c0_i32_0 = arith.constant 0 : i32
    return %arg0, %c0_i32 : i32, i32
  }
  func.func @transform_4(%arg0: i32) -> (i32, i32, i32) {
    %c0_i32 = arith.constant 0 : i32
    %c0_i32_0 = arith.constant 0 : i32
    %c0_i32_1 = arith.constant 0 : i32
    %c0_i32_2 = arith.constant 0 : i32
    return %c0_i32, %c0_i32_0, %c0_i32_1 : i32, i32, i32
  }
  func.func @transform_5(%arg0: i32) -> (i32, i32) {
    %c0_i32 = arith.constant 0 : i32
    %c0_i32_0 = arith.constant 0 : i32
    %c0_i32_1 = arith.constant 0 : i32
    return %c0_i32, %c0_i32_0 : i32, i32
  }
  func.func @transform_6(%arg0: i32) -> (i32, i32) {
    %c0_i32 = arith.constant 0 : i32
    %c0_i32_0 = arith.constant 0 : i32
    %c0_i32_1 = arith.constant 0 : i32
    return %c0_i32, %c0_i32_0 : i32, i32
  }
  func.func @transform_7(%arg0: i32) -> (i32, i32) {
    %c0_i32 = arith.constant 0 : i32
    %c0_i32_0 = arith.constant 0 : i32
    %c0_i32_1 = arith.constant 0 : i32
    return %c0_i32, %c0_i32_0 : i32, i32
  }
  func.func @transform_8(%arg0: i32) -> (i32, i32) {
    %c0_i32 = arith.constant 0 : i32
    %c0_i32_0 = arith.constant 0 : i32
    %c0_i32_1 = arith.constant 0 : i32
    return %c0_i32, %c0_i32_0 : i32, i32
  }
  func.func @transform_9(%arg0: i32) -> (i32, i32) {
    %c0_i32 = arith.constant 0 : i32
    %c0_i32_0 = arith.constant 0 : i32
    %c0_i32_1 = arith.constant 0 : i32
    return %c0_i32, %c0_i32_0 : i32, i32
  }
  func.func @transform_10(%arg0: i32) -> (i32, i32) {
    %c0_i32 = arith.constant 0 : i32
    %c0_i32_0 = arith.constant 0 : i32
    %c0_i32_1 = arith.constant 0 : i32
    return %c0_i32, %c0_i32_0 : i32, i32
  }
  func.func @transform_11(%arg0: i32) -> (i32, i32) {
    %c0_i32 = arith.constant 0 : i32
    %c0_i32_0 = arith.constant 0 : i32
    %c0_i32_1 = arith.constant 0 : i32
    return %c0_i32, %c0_i32_0 : i32, i32
  }
  func.func @transform_12(%arg0: i32) -> (i32, i32) {
    %c0_i32 = arith.constant 0 : i32
    %c0_i32_0 = arith.constant 0 : i32
    %c0_i32_1 = arith.constant 0 : i32
    return %c0_i32, %c0_i32_0 : i32, i32
  }
  func.func @transform_13(%arg0: i32) -> (i32, i32) {
    %c0_i32 = arith.constant 0 : i32
    %c0_i32_0 = arith.constant 0 : i32
    %c0_i32_1 = arith.constant 0 : i32
    return %c0_i32, %c0_i32_0 : i32, i32
  }
  func.func @transform_14(%arg0: i32) -> (i32, i32) {
    %c0_i32 = arith.constant 0 : i32
    %c0_i32_0 = arith.constant 0 : i32
    %c0_i32_1 = arith.constant 0 : i32
    return %c0_i32, %c0_i32_0 : i32, i32
  }
  func.func @transform_15(%arg0: i32) -> (i32, i32) {
    %c0_i32 = arith.constant 0 : i32
    %c0_i32_0 = arith.constant 0 : i32
    %c0_i32_1 = arith.constant 0 : i32
    return %c0_i32, %c0_i32_0 : i32, i32
  }
  func.func @transform_16(%arg0: i32) -> (i32, i32) {
    %c0_i32 = arith.constant 0 : i32
    %c0_i32_0 = arith.constant 0 : i32
    %c0_i32_1 = arith.constant 0 : i32
    return %c0_i32, %c0_i32_0 : i32, i32
  }
  func.func @transform_17(%arg0: i32) -> (i32, i32) {
    %c0_i32 = arith.constant 0 : i32
    %c0_i32_0 = arith.constant 0 : i32
    %c0_i32_1 = arith.constant 0 : i32
    return %c0_i32, %c0_i32_0 : i32, i32
  }
  func.func @transform_18(%arg0: i32) -> (i32, i32) {
    %c0_i32 = arith.constant 0 : i32
    %c0_i32_0 = arith.constant 0 : i32
    %c0_i32_1 = arith.constant 0 : i32
    return %c0_i32, %c0_i32_0 : i32, i32
  }
  func.func @transform_19(%arg0: i32) -> (i32, i32) {
    %c0_i32 = arith.constant 0 : i32
    %c0_i32_0 = arith.constant 0 : i32
    %c0_i32_1 = arith.constant 0 : i32
    return %c0_i32, %c0_i32_0 : i32, i32
  }
  func.func @transform_20(%arg0: i32) -> (i32, i32) {
    %c0_i32 = arith.constant 0 : i32
    %c0_i32_0 = arith.constant 0 : i32
    %c0_i32_1 = arith.constant 0 : i32
    return %c0_i32, %c0_i32_0 : i32, i32
  }
  func.func @transform_21(%arg0: i32) -> (i32, i32) {
    %c0_i32 = arith.constant 0 : i32
    %c0_i32_0 = arith.constant 0 : i32
    %c0_i32_1 = arith.constant 0 : i32
    return %c0_i32, %c0_i32_0 : i32, i32
  }
  func.func @transform_22(%arg0: i32) -> (i32, i32) {
    %c0_i32 = arith.constant 0 : i32
    %c0_i32_0 = arith.constant 0 : i32
    %c0_i32_1 = arith.constant 0 : i32
    return %c0_i32, %c0_i32_0 : i32, i32
  }
  func.func @transform_23(%arg0: i32) -> (i32, i32) {
    %c0_i32 = arith.constant 0 : i32
    %c0_i32_0 = arith.constant 0 : i32
    %c0_i32_1 = arith.constant 0 : i32
    return %c0_i32, %c0_i32_0 : i32, i32
  }
  func.func @transform_24(%arg0: i32) -> (i32, i32) {
    %c0_i32 = arith.constant 0 : i32
    %c0_i32_0 = arith.constant 0 : i32
    %c0_i32_1 = arith.constant 0 : i32
    return %c0_i32, %c0_i32_0 : i32, i32
  }
  func.func @transform_25(%arg0: i32) -> (i32, i32) {
    %c0_i32 = arith.constant 0 : i32
    %c0_i32_0 = arith.constant 0 : i32
    %c0_i32_1 = arith.constant 0 : i32
    return %c0_i32, %c0_i32_0 : i32, i32
  }
  func.func @transform_26(%arg0: i32) -> (i32, i32) {
    %c0_i32 = arith.constant 0 : i32
    %c0_i32_0 = arith.constant 0 : i32
    %c0_i32_1 = arith.constant 0 : i32
    return %c0_i32, %c0_i32_0 : i32, i32
  }
  func.func @transform_27(%arg0: i32) -> (i32, i32) {
    %c0_i32 = arith.constant 0 : i32
    %c0_i32_0 = arith.constant 0 : i32
    return %arg0, %c0_i32 : i32, i32
  }
}

</mosaic_0001>

<llo_original>
// kernel: set_np_forward.3
$region0: #{set_np_forward.3}
  #allocation0 [shape = 'u32[]', space=smem, size = 0x4, offset = 0x4, fixed_abs, tag = 'smem constant byte address 0x4 - core index']
  #allocation1 [shape = 'u32[144,128]{1,0:T(1,128)}', space=vmem, size = 0x12000, scoped, tag = 'internal scratch']
  %s0 = inlined_call_operand.vmem [shape: bf16[32,20], index: 0, kind: input, shape index: {}]
  %s1 = inlined_call_operand.vmem [shape: bf16[20,32], index: 1, kind: input, shape index: {}]
  %s2 = inlined_call_operand.vmem [shape: bf16[20,32], index: 2, kind: input, shape index: {}]
  %s3 = inlined_call_operand.vmem [shape: bf16[20,32], index: 3, kind: input, shape index: {}]
  %s4 = inlined_call_operand.vmem [shape: bf16[20,32], index: 4, kind: input, shape index: {}]
  %s5 = inlined_call_operand.vmem [shape: f32[1,32], index: 5, kind: input, shape index: {}]
  %s6 = inlined_call_operand.vmem [shape: f32[1,32], index: 6, kind: input, shape index: {}]
  %s7 = inlined_call_operand.vmem [shape: f32[1,32], index: 7, kind: input, shape index: {}]
  %s8 = inlined_call_operand.vmem [shape: f32[1,32], index: 8, kind: input, shape index: {}]
  %s9 = inlined_call_operand.vmem [shape: f32[1,32], index: 9, kind: input, shape index: {}]
  %s10 = inlined_call_operand.vmem [shape: bf16[32,32], index: 10, kind: input, shape index: {}]
  %s11 = inlined_call_operand.vmem [shape: f32[1,32], index: 11, kind: input, shape index: {}]
  %s12 = inlined_call_operand.vmem [shape: bf16[32,8], index: 12, kind: input, shape index: {}]
  %s13 = inlined_call_operand.vmem [shape: bf16[8,32], index: 13, kind: input, shape index: {}]
  %s14 = inlined_call_operand.vmem [shape: bf16[32,32], index: 14, kind: output, shape index: {}]
  %s15 = sld [smem:[#allocation0]]
  $region66: #{set_np_forward.3} parent=0
    _
  %s17 = ssub.s32 1, %s15
  %s18 = scalar_select 0, %s17, %s15
  // Predicated region
  $region2: #{set_np_forward.3} parent=0 // pred_check
    _
  $region3: #{set_np_forward.3} parent=0 // pred_check_branch
    %20 = sbr.rel (0) target = $region5
  $region4: #{set_np_forward.3} parent=0 // pred_region
    _
  $region5: #{set_np_forward.3} parent=0 // pred_fallthru
    _
  // Predicated region
  $region6: #{set_np_forward.3} parent=0 // pred_check
    _
  $region7: #{set_np_forward.3} parent=0 // pred_check_branch
    %22 = sbr.rel (0) target = $region9
  $region8: #{set_np_forward.3} parent=0 // pred_region
    _
  $region9: #{set_np_forward.3} parent=0 // pred_fallthru
    _
  // Predicated region
  $region10: #{set_np_forward.3} parent=0 // pred_check
    _
  $region11: #{set_np_forward.3} parent=0 // pred_check_branch
    %24 = sbr.rel (0) target = $region13
  $region12: #{set_np_forward.3} parent=0 // pred_region
    _
  $region13: #{set_np_forward.3} parent=0 // pred_fallthru
    _
  // Predicated region
  $region14: #{set_np_forward.3} parent=0 // pred_check
    _
  $region15: #{set_np_forward.3} parent=0 // pred_check_branch
    %26 = sbr.rel (0) target = $region17
  $region16: #{set_np_forward.3} parent=0 // pred_region
    _
  $region17: #{set_np_forward.3} parent=0 // pred_fallthru
    _
  // Predicated region
  $region18: #{set_np_forward.3} parent=0 // pred_check
    _
  $region19: #{set_np_forward.3} parent=0 // pred_check_branch
    %28 = sbr.rel (0) target = $region21
  $region20: #{set_np_forward.3} parent=0 // pred_region
    _
  $region21: #{set_np_forward.3} parent=0 // pred_fallthru
    _
  // Predicated region
  $region22: #{set_np_forward.3} parent=0 // pred_check
    _
  $region23: #{set_np_forward.3} parent=0 // pred_check_branch
    %30 = sbr.rel (0) target = $region25
  $region24: #{set_np_forward.3} parent=0 // pred_region
    _
  $region25: #{set_np_forward.3} parent=0 // pred_fallthru
    _
  // Predicated region
  $region26: #{set_np_forward.3} parent=0 // pred_check
    _
  $region27: #{set_np_forward.3} parent=0 // pred_check_branch
    %32 = sbr.rel (0) target = $region29
  $region28: #{set_np_forward.3} parent=0 // pred_region
    _
  $region29: #{set_np_forward.3} parent=0 // pred_fallthru
    _
  // Predicated region
  $region30: #{set_np_forward.3} parent=0 // pred_check
    _
  $region31: #{set_np_forward.3} parent=0 // pred_check_branch
    %34 = sbr.rel (0) target = $region33
  $region32: #{set_np_forward.3} parent=0 // pred_region
    _
  $region33: #{set_np_forward.3} parent=0 // pred_fallthru
    _
  // Predicated region
  $region34: #{set_np_forward.3} parent=0 // pred_check
    _
  $region35: #{set_np_forward.3} parent=0 // pred_check_branch
    %36 = sbr.rel (0) target = $region37
  $region36: #{set_np_forward.3} parent=0 // pred_region
    _
  $region37: #{set_np_forward.3} parent=0 // pred_fallthru
    _
  // Predicated region
  $region38: #{set_np_forward.3} parent=0 // pred_check
    _
  $region39: #{set_np_forward.3} parent=0 // pred_check_branch
    %38 = sbr.rel (0) target = $region41
  $region40: #{set_np_forward.3} parent=0 // pred_region
    _
  $region41: #{set_np_forward.3} parent=0 // pred_fallthru
    _
  // Predicated region
  $region42: #{set_np_forward.3} parent=0 // pred_check
    _
  $region43: #{set_np_forward.3} parent=0 // pred_check_branch
    %40 = sbr.rel (0) target = $region45
  $region44: #{set_np_forward.3} parent=0 // pred_region
    _
  $region45: #{set_np_forward.3} parent=0 // pred_fallthru
    _
  // Predicated region
  $region46: #{set_np_forward.3} parent=0 // pred_check
    _
  $region47: #{set_np_forward.3} parent=0 // pred_check_branch
    %42 = sbr.rel (0) target = $region49
  $region48: #{set_np_forward.3} parent=0 // pred_region
    _
  $region49: #{set_np_forward.3} parent=0 // pred_fallthru
    _
  // Predicated region
  $region50: #{set_np_forward.3} parent=0 // pred_check
    _
  $region51: #{set_np_forward.3} parent=0 // pred_check_branch
    %44 = sbr.rel (0) target = $region53
  $region52: #{set_np_forward.3} parent=0 // pred_region
    _
  $region53: #{set_np_forward.3} parent=0 // pred_fallthru
    _
  // Predicated region
  $region54: #{set_np_forward.3} parent=0 // pred_check
    _
  $region55: #{set_np_forward.3} parent=0 // pred_check_branch
    %46 = sbr.rel (0) target = $region57
  $region56: #{set_np_forward.3} parent=0 // pred_region
    _
  $region57: #{set_np_forward.3} parent=0 // pred_fallthru
    _
  %v48 = vld [vmem:[%s0] sm:$0xf]
  %v49 = vld [vmem:[%s0 + $0x4] sm:$0xf]
  %v50 = vld [vmem:[%s0 + $0x8] sm:$0xf]
  %v51 = vld [vmem:[%s0 + $0xc] sm:$0xf]
  %v52 = vld [vmem:[%s1] sm:$0xf]
  %v53 = vld [vmem:[%s1 + $0x4] sm:$0xf]
  %v54 = vld [vmem:[%s1 + $0x8] sm:$0x3]
  %v55 = vld [vmem:[%s5] sm:$0x1]
  %v57 = vlaneseq
  %v58 = vshrl.u32 %v57, 7
  %v59 = vsub.s32 0, %v58
  %v60 = vrot.slane %v55, %v59
  %v66 = vunpack.c.l.b16 %v48
  %v67 = vunpack.c.l.b16 %v49
  %v68 = vunpack.c.l.b16 %v50
  %v69 = vunpack.c.l.b16 %v51
  %v70 = vpack.c.b16 %v67, %v66
  %v71 = vpack.c.b16 %v69, %v68
  %v75 = vunpack.c.l.b16 %v52
  %v76 = vunpack.c.l.b16 %v53
  %v77 = vunpack.c.l.b16 %v54
  %v78 = vpack.c.b16 %v76, %v75
  %v79 = vpack.c.b16 %v77, %v77
  %vm81 = vcmask 162816
  %v83 = vsel %vm81, %v70, 0
  %v86 = vsel %vm81, %v71, 0
  %vm88 = vcmask 1041408
  %v90 = vsel %vm88, %v79, 0
  %92 = vmatprep.subr.bf16.mxu0 0
  %93 = vmatpush1.bf16.msra.mxu0 %v78
  %94 = vmatprep.subr.bf16.mxu0 0
  %95 = vmatpush1.bf16.msra.mxu0 %v90
  %96 = vmatprep.subr.bf16.mxu0 0
  %97 = vmatpush1.bf16.msra.mxu0 0
  %98 = vmatprep.subr.bf16.mxu0 0
  %99 = vmatpush1.bf16.msra.mxu0 0
  %100 = vmatprep.subr.bf16.mxu0 0
  %101 = vmatpush1.bf16.msra.mxu0 0
  %102 = vmatprep.subr.bf16.mxu0 0
  %103 = vmatpush1.bf16.msra.mxu0 0
  %104 = vmatprep.subr.bf16.mxu0 0
  %105 = vmatpush1.bf16.msra.mxu0 0
  %106 = vmatprep.subr.bf16.mxu0 0
  %107 = vmatpush1.bf16.msra.mxu0 0
  %108 = vmatprep.subr.bf16.mxu0 0
  %109 = vmatpush1.bf16.msra.mxu0 0
  %110 = vmatprep.subr.bf16.mxu0 0
  %111 = vmatpush1.bf16.msra.mxu0 0
  %112 = vmatprep.subr.bf16.mxu0 0
  %113 = vmatpush1.bf16.msra.mxu0 0
  %114 = vmatprep.subr.bf16.mxu0 0
  %115 = vmatpush1.bf16.msra.mxu0 0
  %116 = vmatprep.subr.bf16.mxu0 0
  %117 = vmatpush1.bf16.msra.mxu0 0
  %118 = vmatprep.subr.bf16.mxu0 0
  %119 = vmatpush1.bf16.msra.mxu0 0
  %120 = vmatprep.subr.bf16.mxu0 0
  %121 = vmatpush1.bf16.msra.mxu0 0
  %122 = vmatprep.subr.bf16.mxu0 0
  %123 = vmatpush1.bf16.msra.mxu0 0
  %124 = vmatprep.mubr.bf16.mxu0 0
  %125 = vmatmul.mubr.bf16.gmra.mrb[0].mxu0 %v83
  %v126 = vpop.f32.mrb[0].mxu0
  %v127 = vadd.f32 %v60, %v126
  %v128 = vpop.f32.mrb[0].mxu0
  %v129 = vpop.f32.mrb[0].mxu0
  %v130 = vadd.f32 %v60, %v129
  %v131 = vpop.f32.mrb[0].mxu0
  %132 = vmatprep.mubr.bf16.mxu0 0
  %133 = vmatmul.mubr.bf16.gmra.mrb[0].mxu0 %v86
  %v134 = vpop.f32.mrb[0].mxu0
  %v135 = vadd.f32 %v60, %v134
  %v136 = vpop.f32.mrb[0].mxu0
  %v137 = vpop.f32.mrb[0].mxu0
  %v138 = vadd.f32 %v60, %v137
  %v139 = vpop.f32.mrb[0].mxu0
  %140 = vdwg.mxu0
  %v141 = vld [vmem:[%s2] sm:$0xf]
  %v142 = vld [vmem:[%s2 + $0x4] sm:$0xf]
  %v143 = vld [vmem:[%s2 + $0x8] sm:$0x3]
  %v144 = vld [vmem:[%s6] sm:$0x1]
  %v146 = vlaneseq
  %v147 = vshrl.u32 %v146, 7
  %v148 = vsub.s32 0, %v147
  %v149 = vrot.slane %v144, %v148
  %v154 = vunpack.c.l.b16 %v141
  %v155 = vunpack.c.l.b16 %v142
  %v156 = vunpack.c.l.b16 %v143
  %v157 = vpack.c.b16 %v155, %v154
  %v158 = vpack.c.b16 %v156, %v156
  %v161 = vsel %vm88, %v158, 0
  %163 = vmatprep.subr.bf16.mxu0 0
  %164 = vmatpush1.bf16.msra.mxu0 %v157
  %165 = vmatprep.subr.bf16.mxu0 0
  %166 = vmatpush1.bf16.msra.mxu0 %v161
  %167 = vmatprep.subr.bf16.mxu0 0
  %168 = vmatpush1.bf16.msra.mxu0 0
  %169 = vmatprep.subr.bf16.mxu0 0
  %170 = vmatpush1.bf16.msra.mxu0 0
  %171 = vmatprep.subr.bf16.mxu0 0
  %172 = vmatpush1.bf16.msra.mxu0 0
  %173 = vmatprep.subr.bf16.mxu0 0
  %174 = vmatpush1.bf16.msra.mxu0 0
  %175 = vmatprep.subr.bf16.mxu0 0
  %176 = vmatpush1.bf16.msra.mxu0 0
  %177 = vmatprep.subr.bf16.mxu0 0
  %178 = vmatpush1.bf16.msra.mxu0 0
  %179 = vmatprep.subr.bf16.mxu0 0
  %180 = vmatpush1.bf16.msra.mxu0 0
  %181 = vmatprep.subr.bf16.mxu0 0
  %182 = vmatpush1.bf16.msra.mxu0 0
  %183 = vmatprep.subr.bf16.mxu0 0
  %184 = vmatpush1.bf16.msra.mxu0 0
  %185 = vmatprep.subr.bf16.mxu0 0
  %186 = vmatpush1.bf16.msra.mxu0 0
  %187 = vmatprep.subr.bf16.mxu0 0
  %188 = vmatpush1.bf16.msra.mxu0 0
  %189 = vmatprep.subr.bf16.mxu0 0
  %190 = vmatpush1.bf16.msra.mxu0 0
  %191 = vmatprep.subr.bf16.mxu0 0
  %192 = vmatpush1.bf16.msra.mxu0 0
  %193 = vmatprep.subr.bf16.mxu0 0
  %194 = vmatpush1.bf16.msra.mxu0 0
  %195 = vmatprep.mubr.bf16.mxu0 0
  %196 = vmatmul.mubr.bf16.gmra.mrb[0].mxu0 %v83
  %v197 = vpop.f32.mrb[0].mxu0
  %v198 = vadd.f32 %v149, %v197
  %v199 = vpop.f32.mrb[0].mxu0
  %v200 = vpop.f32.mrb[0].mxu0
  %v201 = vadd.f32 %v149, %v200
  %v202 = vpop.f32.mrb[0].mxu0
  %203 = vmatprep.mubr.bf16.mxu0 0
  %204 = vmatmul.mubr.bf16.gmra.mrb[0].mxu0 %v86
  %v205 = vpop.f32.mrb[0].mxu0
  %v206 = vadd.f32 %v149, %v205
  %v207 = vpop.f32.mrb[0].mxu0
  %v208 = vpop.f32.mrb[0].mxu0
  %v209 = vadd.f32 %v149, %v208
  %v210 = vpop.f32.mrb[0].mxu0
  %211 = vdwg.mxu0
  %v212 = vld [vmem:[%s3] sm:$0xf]
  %v213 = vld [vmem:[%s3 + $0x4] sm:$0xf]
  %v214 = vld [vmem:[%s3 + $0x8] sm:$0x3]
  %v215 = vld [vmem:[%s7] sm:$0x1]
  %v217 = vlaneseq
  %v218 = vshrl.u32 %v217, 7
  %v219 = vsub.s32 0, %v218
  %v220 = vrot.slane %v215, %v219
  %v225 = vunpack.c.l.b16 %v212
  %v226 = vunpack.c.l.b16 %v213
  %v227 = vunpack.c.l.b16 %v214
  %v228 = vpack.c.b16 %v226, %v225
  %v229 = vpack.c.b16 %v227, %v227
  %v232 = vsel %vm88, %v229, 0
  %234 = vmatprep.subr.bf16.mxu0 0
  %235 = vmatpush1.bf16.msra.mxu0 %v228
  %236 = vmatprep.subr.bf16.mxu0 0
  %237 = vmatpush1.bf16.msra.mxu0 %v232
  %238 = vmatprep.subr.bf16.mxu0 0
  %239 = vmatpush1.bf16.msra.mxu0 0
  %240 = vmatprep.subr.bf16.mxu0 0
  %241 = vmatpush1.bf16.msra.mxu0 0
  %242 = vmatprep.subr.bf16.mxu0 0
  %243 = vmatpush1.bf16.msra.mxu0 0
  %244 = vmatprep.subr.bf16.mxu0 0
  %245 = vmatpush1.bf16.msra.mxu0 0
  %246 = vmatprep.subr.bf16.mxu0 0
  %247 = vmatpush1.bf16.msra.mxu0 0
  %248 = vmatprep.subr.bf16.mxu0 0
  %249 = vmatpush1.bf16.msra.mxu0 0
  %250 = vmatprep.subr.bf16.mxu0 0
  %251 = vmatpush1.bf16.msra.mxu0 0
  %252 = vmatprep.subr.bf16.mxu0 0
  %253 = vmatpush1.bf16.msra.mxu0 0
  %254 = vmatprep.subr.bf16.mxu0 0
  %255 = vmatpush1.bf16.msra.mxu0 0
  %256 = vmatprep.subr.bf16.mxu0 0
  %257 = vmatpush1.bf16.msra.mxu0 0
  %258 = vmatprep.subr.bf16.mxu0 0
  %259 = vmatpush1.bf16.msra.mxu0 0
  %260 = vmatprep.subr.bf16.mxu0 0
  %261 = vmatpush1.bf16.msra.mxu0 0
  %262 = vmatprep.subr.bf16.mxu0 0
  %263 = vmatpush1.bf16.msra.mxu0 0
  %264 = vmatprep.subr.bf16.mxu0 0
  %265 = vmatpush1.bf16.msra.mxu0 0
  %266 = vmatprep.mubr.bf16.mxu0 0
  %267 = vmatmul.mubr.bf16.gmra.mrb[0].mxu0 %v83
  %v268 = vpop.f32.mrb[0].mxu0
  %v269 = vadd.f32 %v220, %v268
  %v270 = vpop.f32.mrb[0].mxu0
  %v271 = vpop.f32.mrb[0].mxu0
  %v272 = vadd.f32 %v220, %v271
  %v273 = vpop.f32.mrb[0].mxu0
  %274 = vmatprep.mubr.bf16.mxu0 0
  %275 = vmatmul.mubr.bf16.gmra.mrb[0].mxu0 %v86
  %v276 = vpop.f32.mrb[0].mxu0
  %v277 = vadd.f32 %v220, %v276
  %v278 = vpop.f32.mrb[0].mxu0
  %v279 = vpop.f32.mrb[0].mxu0
  %v280 = vadd.f32 %v220, %v279
  %v281 = vpop.f32.mrb[0].mxu0
  %282 = vdwg.mxu0
  %v283 = vld [vmem:[%s4] sm:$0xf]
  %v284 = vld [vmem:[%s4 + $0x4] sm:$0xf]
  %v285 = vld [vmem:[%s4 + $0x8] sm:$0x3]
  %v286 = vld [vmem:[%s8] sm:$0x1]
  %v288 = vlaneseq
  %v289 = vshrl.u32 %v288, 7
  %v290 = vsub.s32 0, %v289
  %v291 = vrot.slane %v286, %v290
  %v296 = vunpack.c.l.b16 %v283
  %v297 = vunpack.c.l.b16 %v284
  %v298 = vunpack.c.l.b16 %v285
  %v299 = vpack.c.b16 %v297, %v296
  %v300 = vpack.c.b16 %v298, %v298
  %v303 = vsel %vm88, %v300, 0
  %305 = vmatprep.subr.bf16.mxu0 0
  %306 = vmatpush1.bf16.msra.mxu0 %v299
  %307 = vmatprep.subr.bf16.mxu0 0
  %308 = vmatpush1.bf16.msra.mxu0 %v303
  %309 = vmatprep.subr.bf16.mxu0 0
  %310 = vmatpush1.bf16.msra.mxu0 0
  %311 = vmatprep.subr.bf16.mxu0 0
  %312 = vmatpush1.bf16.msra.mxu0 0
  %313 = vmatprep.subr.bf16.mxu0 0
  %314 = vmatpush1.bf16.msra.mxu0 0
  %315 = vmatprep.subr.bf16.mxu0 0
  %316 = vmatpush1.bf16.msra.mxu0 0
  %317 = vmatprep.subr.bf16.mxu0 0
  %318 = vmatpush1.bf16.msra.mxu0 0
  %319 = vmatprep.subr.bf16.mxu0 0
  %320 = vmatpush1.bf16.msra.mxu0 0
  %321 = vmatprep.subr.bf16.mxu0 0
  %322 = vmatpush1.bf16.msra.mxu0 0
  %323 = vmatprep.subr.bf16.mxu0 0
  %324 = vmatpush1.bf16.msra.mxu0 0
  %325 = vmatprep.subr.bf16.mxu0 0
  %326 = vmatpush1.bf16.msra.mxu0 0
  %327 = vmatprep.subr.bf16.mxu0 0
  %328 = vmatpush1.bf16.msra.mxu0 0
  %329 = vmatprep.subr.bf16.mxu0 0
  %330 = vmatpush1.bf16.msra.mxu0 0
  %331 = vmatprep.subr.bf16.mxu0 0
  %332 = vmatpush1.bf16.msra.mxu0 0
  %333 = vmatprep.subr.bf16.mxu0 0
  %334 = vmatpush1.bf16.msra.mxu0 0
  %335 = vmatprep.subr.bf16.mxu0 0
  %336 = vmatpush1.bf16.msra.mxu0 0
  %337 = vmatprep.mubr.bf16.mxu0 0
  %338 = vmatmul.mubr.bf16.gmra.mrb[0].mxu0 %v83
  %v339 = vpop.f32.mrb[0].mxu0
  %v340 = vadd.f32 %v291, %v339
  %v341 = vpop.f32.mrb[0].mxu0
  %v342 = vpop.f32.mrb[0].mxu0
  %v343 = vadd.f32 %v291, %v342
  %v344 = vpop.f32.mrb[0].mxu0
  %345 = vmatprep.mubr.bf16.mxu0 0
  %346 = vmatmul.mubr.bf16.gmra.mrb[0].mxu0 %v86
  %v347 = vpop.f32.mrb[0].mxu0
  %v348 = vadd.f32 %v291, %v347
  %v349 = vpop.f32.mrb[0].mxu0
  %v350 = vpop.f32.mrb[0].mxu0
  %v351 = vadd.f32 %v291, %v350
  %v352 = vpop.f32.mrb[0].mxu0
  %353 = vdwg.mxu0
  %v354 = vld [vmem:[%s9] sm:$0x1]
  %v355 = vsub.f32 %v127, %v198
  %v356 = vsub.f32 %v130, %v201
  %v357 = vsub.f32 %v135, %v206
  %v358 = vsub.f32 %v138, %v209
  %v360 = vlaneseq
  %v361 = vshrl.u32 %v360, 7
  %v362 = vsub.s32 0, %v361
  %v363 = vrot.slane %v354, %v362
  %v365 = vmul.f32 %v355, %v363
  %v366 = vmul.f32 %v356, %v363
  %v367 = vmul.f32 %v357, %v363
  %v368 = vmul.f32 %v358, %v363
  %v369 = vpack.c.bf16 %v366, %v365
  %v370 = vpack.c.bf16 %v368, %v367
  %v371 = vld [vmem:[%s12] sm:$0xf]
  %v372 = vld [vmem:[%s12 + $0x4] sm:$0xf]
  %v373 = vld [vmem:[%s12 + $0x8] sm:$0xf]
  %v374 = vld [vmem:[%s12 + $0xc] sm:$0xf]
  %v379 = vunpack.c.l.b16 %v371
  %v380 = vunpack.c.l.b16 %v372
  %v381 = vunpack.c.l.b16 %v373
  %v382 = vunpack.c.l.b16 %v374
  %v383 = vpack.c.b16 %v380, %v379
  %v384 = vpack.c.b16 %v382, %v381
  %vm387 = vcmask 261120
  %v389 = vsel %vm387, %v369, 0
  %v392 = vsel %vm387, %v370, 0
  %394 = vmatprep.subr.bf16.mxu0 0
  %395 = vmatpush1.bf16.msra.mxu0 %v383
  %396 = vmatprep.subr.bf16.mxu0 0
  %397 = vmatpush1.bf16.msra.mxu0 %v384
  %398 = vmatprep.subr.bf16.mxu0 0
  %399 = vmatpush1.bf16.msra.mxu0 0
  %400 = vmatprep.subr.bf16.mxu0 0
  %401 = vmatpush1.bf16.msra.mxu0 0
  %402 = vmatprep.subr.bf16.mxu0 0
  %403 = vmatpush1.bf16.msra.mxu0 0
  %404 = vmatprep.subr.bf16.mxu0 0
  %405 = vmatpush1.bf16.msra.mxu0 0
  %406 = vmatprep.subr.bf16.mxu0 0
  %407 = vmatpush1.bf16.msra.mxu0 0
  %408 = vmatprep.subr.bf16.mxu0 0
  %409 = vmatpush1.bf16.msra.mxu0 0
  %410 = vmatprep.subr.bf16.mxu0 0
  %411 = vmatpush1.bf16.msra.mxu0 0
  %412 = vmatprep.subr.bf16.mxu0 0
  %413 = vmatpush1.bf16.msra.mxu0 0
  %414 = vmatprep.subr.bf16.mxu0 0
  %415 = vmatpush1.bf16.msra.mxu0 0
  %416 = vmatprep.subr.bf16.mxu0 0
  %417 = vmatpush1.bf16.msra.mxu0 0
  %418 = vmatprep.subr.bf16.mxu0 0
  %419 = vmatpush1.bf16.msra.mxu0 0
  %420 = vmatprep.subr.bf16.mxu0 0
  %421 = vmatpush1.bf16.msra.mxu0 0
  %422 = vmatprep.subr.bf16.mxu0 0
  %423 = vmatpush1.bf16.msra.mxu0 0
  %424 = vmatprep.subr.bf16.mxu0 0
  %425 = vmatpush1.bf16.msra.mxu0 0
  %426 = vmatprep.mubr.bf16.mxu0 0
  %427 = vmatmul.mubr.bf16.gmra.mrb[0].mxu0 %v389
  %v428 = vpop.f32.mrb[0].mxu0
  %v429 = vadd.f32 0.0, %v428
  %v430 = vpop.f32.mrb[0].mxu0
  %v431 = vpop.f32.mrb[0].mxu0
  %v432 = vadd.f32 0.0, %v431
  %v433 = vpop.f32.mrb[0].mxu0
  %434 = vmatprep.mubr.bf16.mxu0 0
  %435 = vmatmul.mubr.bf16.gmra.mrb[0].mxu0 %v392
  %v436 = vpop.f32.mrb[0].mxu0
  %v437 = vadd.f32 0.0, %v436
  %v438 = vpop.f32.mrb[0].mxu0
  %v439 = vpop.f32.mrb[0].mxu0
  %v440 = vadd.f32 0.0, %v439
  %v441 = vpop.f32.mrb[0].mxu0
  %442 = vdwg.mxu0
  %v443 = vmul.f32 %v429, 0.17677669
  %v444 = vmul.f32 %v432, 0.17677669
  %v445 = vmul.f32 %v437, 0.17677669
  %v446 = vmul.f32 %v440, 0.17677669
  %v447 = vpack.c.bf16 %v444, %v443
  %v448 = vpack.c.bf16 %v446, %v445
  %v449 = vld [vmem:[%s13] sm:$0xf]
  %vm450 = vcmask 64512
  %v452 = vsel %vm450, %v447, 0
  %v455 = vsel %vm450, %v448, 0
  %vm457 = vcmask 1043456
  %v459 = vsel %vm457, %v449, 0
  %461 = vmatprep.subr.bf16.mxu0 0
  %462 = vmatpush1.bf16.msra.mxu0 %v459
  %463 = vmatprep.subr.bf16.mxu0 0
  %464 = vmatpush1.bf16.msra.mxu0 0
  %465 = vmatprep.subr.bf16.mxu0 0
  %466 = vmatpush1.bf16.msra.mxu0 0
  %467 = vmatprep.subr.bf16.mxu0 0
  %468 = vmatpush1.bf16.msra.mxu0 0
  %469 = vmatprep.subr.bf16.mxu0 0
  %470 = vmatpush1.bf16.msra.mxu0 0
  %471 = vmatprep.subr.bf16.mxu0 0
  %472 = vmatpush1.bf16.msra.mxu0 0
  %473 = vmatprep.subr.bf16.mxu0 0
  %474 = vmatpush1.bf16.msra.mxu0 0
  %475 = vmatprep.subr.bf16.mxu0 0
  %476 = vmatpush1.bf16.msra.mxu0 0
  %477 = vmatprep.subr.bf16.mxu0 0
  %478 = vmatpush1.bf16.msra.mxu0 0
  %479 = vmatprep.subr.bf16.mxu0 0
  %480 = vmatpush1.bf16.msra.mxu0 0
  %481 = vmatprep.subr.bf16.mxu0 0
  %482 = vmatpush1.bf16.msra.mxu0 0
  %483 = vmatprep.subr.bf16.mxu0 0
  %484 = vmatpush1.bf16.msra.mxu0 0
  %485 = vmatprep.subr.bf16.mxu0 0
  %486 = vmatpush1.bf16.msra.mxu0 0
  %487 = vmatprep.subr.bf16.mxu0 0
  %488 = vmatpush1.bf16.msra.mxu0 0
  %489 = vmatprep.subr.bf16.mxu0 0
  %490 = vmatpush1.bf16.msra.mxu0 0
  %491 = vmatprep.subr.bf16.mxu0 0
  %492 = vmatpush1.bf16.msra.mxu0 0
  %493 = vmatprep.mubr.bf16.mxu0 0
  %494 = vmatmul.mubr.bf16.gmra.mrb[0].mxu0 %v452
  %v495 = vpop.f32.mrb[0].mxu0
  %v496 = vadd.f32 0.0, %v495
  %v497 = vpop.f32.mrb[0].mxu0
  %v498 = vpop.f32.mrb[0].mxu0
  %v499 = vadd.f32 0.0, %v498
  %v500 = vpop.f32.mrb[0].mxu0
  %501 = vmatprep.mubr.bf16.mxu0 0
  %502 = vmatmul.mubr.bf16.gmra.mrb[0].mxu0 %v455
  %v503 = vpop.f32.mrb[0].mxu0
  %v504 = vadd.f32 0.0, %v503
  %v505 = vpop.f32.mrb[0].mxu0
  %v506 = vpop.f32.mrb[0].mxu0
  %v507 = vadd.f32 0.0, %v506
  %v508 = vpop.f32.mrb[0].mxu0
  %509 = vdwg.mxu0
  %v510 = vsub.f32 0.0, %v496
  %v511 = vsub.f32 0.0, %v499
  %v512 = vsub.f32 0.0, %v504
  %v513 = vsub.f32 0.0, %v507
  %v514 = vmul.f32 %v510, 1.442695
  %v515 = vpow.pop %v514
  %v516 = vmul.f32 %v511, 1.442695
  %v517 = vpow.pop %v516
  %v518 = vmul.f32 %v512, 1.442695
  %v519 = vpow.pop %v518
  %v520 = vmul.f32 %v513, 1.442695
  %v521 = vpow.pop %v520
  %v522 = vadd.f32 %v515, 1.0
  %v523 = vadd.f32 %v517, 1.0
  %v524 = vadd.f32 %v519, 1.0
  %v525 = vadd.f32 %v521, 1.0
  %v526 = vrcp.pop %v522
  %v527 = vrcp.pop %v523
  %v528 = vrcp.pop %v524
  %v529 = vrcp.pop %v525
  %v530 = vsub.f32 %v269, %v340
  %v531 = vsub.f32 %v272, %v343
  %v532 = vsub.f32 %v277, %v348
  %v533 = vsub.f32 %v280, %v351
  %v534 = vmul.f32 %v526, %v530
  %v535 = vmul.f32 %v527, %v531
  %v536 = vmul.f32 %v528, %v532
  %v537 = vmul.f32 %v529, %v533
  %v538 = vadd.f32 %v340, %v534
  %v539 = vadd.f32 %v343, %v535
  %v540 = vadd.f32 %v348, %v536
  %v541 = vadd.f32 %v351, %v537
  %v542 = vadd.f32 %v363, %v538
  %v543 = vadd.f32 %v363, %v539
  %v544 = vadd.f32 %v363, %v540
  %v545 = vadd.f32 %v363, %v541
  %v546 = vpack.c.bf16 %v543, %v542
  %v547 = vpack.c.bf16 %v545, %v544
  %v548 = vld [vmem:[%s10] sm:$0xf]
  %v549 = vld [vmem:[%s10 + $0x4] sm:$0xf]
  %v550 = vld [vmem:[%s10 + $0x8] sm:$0xf]
  %v551 = vld [vmem:[%s10 + $0xc] sm:$0xf]
  %v552 = vld [vmem:[%s11] sm:$0x1]
  %v554 = vlaneseq
  %v555 = vshrl.u32 %v554, 7
  %v556 = vsub.s32 0, %v555
  %v557 = vrot.slane %v552, %v556
  %v563 = vunpack.c.l.b16 %v548
  %v564 = vunpack.c.l.b16 %v549
  %v565 = vunpack.c.l.b16 %v550
  %v566 = vunpack.c.l.b16 %v551
  %v567 = vpack.c.b16 %v564, %v563
  %v568 = vpack.c.b16 %v566, %v565
  %v572 = vsel %vm387, %v546, 0
  %v575 = vsel %vm387, %v547, 0
  %577 = vmatprep.subr.bf16.mxu0 0
  %578 = vmatpush1.bf16.msra.mxu0 %v567
  %579 = vmatprep.subr.bf16.mxu0 0
  %580 = vmatpush1.bf16.msra.mxu0 %v568
  %581 = vmatprep.subr.bf16.mxu0 0
  %582 = vmatpush1.bf16.msra.mxu0 0
  %583 = vmatprep.subr.bf16.mxu0 0
  %584 = vmatpush1.bf16.msra.mxu0 0
  %585 = vmatprep.subr.bf16.mxu0 0
  %586 = vmatpush1.bf16.msra.mxu0 0
  %587 = vmatprep.subr.bf16.mxu0 0
  %588 = vmatpush1.bf16.msra.mxu0 0
  %589 = vmatprep.subr.bf16.mxu0 0
  %590 = vmatpush1.bf16.msra.mxu0 0
  %591 = vmatprep.subr.bf16.mxu0 0
  %592 = vmatpush1.bf16.msra.mxu0 0
  %593 = vmatprep.subr.bf16.mxu0 0
  %594 = vmatpush1.bf16.msra.mxu0 0
  %595 = vmatprep.subr.bf16.mxu0 0
  %596 = vmatpush1.bf16.msra.mxu0 0
  %597 = vmatprep.subr.bf16.mxu0 0
  %598 = vmatpush1.bf16.msra.mxu0 0
  %599 = vmatprep.subr.bf16.mxu0 0
  %600 = vmatpush1.bf16.msra.mxu0 0
  %601 = vmatprep.subr.bf16.mxu0 0
  %602 = vmatpush1.bf16.msra.mxu0 0
  %603 = vmatprep.subr.bf16.mxu0 0
  %604 = vmatpush1.bf16.msra.mxu0 0
  %605 = vmatprep.subr.bf16.mxu0 0
  %606 = vmatpush1.bf16.msra.mxu0 0
  %607 = vmatprep.subr.bf16.mxu0 0
  %608 = vmatpush1.bf16.msra.mxu0 0
  %609 = vmatprep.mubr.bf16.mxu0 0
  %610 = vmatmul.mubr.bf16.gmra.mrb[0].mxu0 %v572
  %v611 = vpop.f32.mrb[0].mxu0
  %v612 = vadd.f32 %v557, %v611
  %v613 = vpop.f32.mrb[0].mxu0
  %v614 = vpop.f32.mrb[0].mxu0
  %v615 = vadd.f32 %v557, %v614
  %v616 = vpop.f32.mrb[0].mxu0
  %617 = vmatprep.mubr.bf16.mxu0 0
  %618 = vmatmul.mubr.bf16.gmra.mrb[0].mxu0 %v575
  %v619 = vpop.f32.mrb[0].mxu0
  %v620 = vadd.f32 %v557, %v619
  %v621 = vpop.f32.mrb[0].mxu0
  %v622 = vpop.f32.mrb[0].mxu0
  %v623 = vadd.f32 %v557, %v622
  %v624 = vpop.f32.mrb[0].mxu0
  %625 = vdwg.mxu0
  %v626 = vmax.f32 %v612, 0.0
  %v627 = vmax.f32 %v615, 0.0
  %v628 = vmax.f32 %v620, 0.0
  %v629 = vmax.f32 %v623, 0.0
  %v630 = vadd.f32 %v542, %v626
  %v631 = vadd.f32 %v543, %v627
  %v632 = vadd.f32 %v544, %v628
  %v633 = vadd.f32 %v545, %v629
  %v634 = vpack.c.bf16 %v631, %v630
  %v635 = vpack.c.bf16 %v633, %v632
  %v638 = vunpack.c.l.b16 %v634
  %v639 = vunpack.c.h.b16 %v634
  %v640 = vunpack.c.l.b16 %v635
  %v641 = vunpack.c.h.b16 %v635
  %v642 = vpack.c.b16 %v638, %v638
  %v643 = vpack.c.b16 %v639, %v639
  %v644 = vpack.c.b16 %v640, %v640
  %v645 = vpack.c.b16 %v641, %v641
  %vm650 = vcmask 257024
  %651 = vst.msk [vmem:[%s14] sm:$0xf] %vm650, %v642
  %652 = vst.msk [vmem:[%s14 + $0x4] sm:$0xf] %vm650, %v643
  %653 = vst.msk [vmem:[%s14 + $0x8] sm:$0xf] %vm650, %v644
  %654 = vst.msk [vmem:[%s14 + $0xc] sm:$0xf] %vm650, %v645
  // Predicated region
  $region58: #{set_np_forward.3} parent=0 // pred_check
    _
  $region59: #{set_np_forward.3} parent=0 // pred_check_branch
    %656 = sbr.rel (0) target = $region61
  $region60: #{set_np_forward.3} parent=0 // pred_region
    _
  $region61: #{set_np_forward.3} parent=0 // pred_fallthru
    _
  // Predicated region
  $region62: #{set_np_forward.3} parent=0 // pred_check
    _
  $region63: #{set_np_forward.3} parent=0 // pred_check_branch
    %658 = sbr.rel (0) target = $region65
  $region64: #{set_np_forward.3} parent=0 // pred_region
    _
  $region65: #{set_np_forward.3} parent=0 // pred_fallthru
    _

// kernel: set_np_forward.4
$region0: #{set_np_forward.4}
  #allocation0 [shape = 'u32[]', space=smem, size = 0x4, offset = 0x4, fixed_abs, tag = 'smem constant byte address 0x4 - core index']
  #allocation1 [shape = 'u32[144,128]{1,0:T(1,128)}', space=vmem, size = 0x12000, scoped, tag = 'internal scratch']
  %s0 = inlined_call_operand.vmem [shape: bf16[16,32], index: 0, kind: input, shape index: {}]
  %s1 = inlined_call_operand.vmem [shape: bf16[16,8], index: 1, kind: input, shape index: {}]
  %s2 = inlined_call_operand.vmem [shape: bf16[16,32], index: 2, kind: input, shape index: {}]
  %s3 = inlined_call_operand.vmem [shape: bf16[16,8], index: 3, kind: input, shape index: {}]
  %s4 = inlined_call_operand.vmem [shape: bf16[2,16], index: 4, kind: input, shape index: {}, may-alias: {4,5}]
  %s5 = inlined_call_operand.vmem [shape: bf16[2,16], index: 5, kind: input, shape index: {}, may-alias: {4,5}]
  %s6 = inlined_call_operand.vmem [shape: bf16[32,32], index: 6, kind: input, shape index: {}]
  %s7 = inlined_call_operand.vmem [shape: bf16[8,32], index: 7, kind: input, shape index: {}]
  %s8 = inlined_call_operand.vmem [shape: f32[1,32], index: 8, kind: input, shape index: {}]
  %s9 = inlined_call_operand.vmem [shape: bf16[32,32], index: 9, kind: input, shape index: {}]
  %s10 = inlined_call_operand.vmem [shape: f32[1,32], index: 10, kind: input, shape index: {}]
  %s11 = inlined_call_operand.vmem [shape: bf16[32,32], index: 11, kind: input, shape index: {}]
  %s12 = inlined_call_operand.vmem [shape: f32[1,32], index: 12, kind: input, shape index: {}]
  %s13 = inlined_call_operand.vmem [shape: bf16[32,32], index: 13, kind: input, shape index: {}]
  %s14 = inlined_call_operand.vmem [shape: f32[1,32], index: 14, kind: input, shape index: {}]
  %s15 = inlined_call_operand.vmem [shape: f32[2,32], index: 15, kind: output, shape index: {0}]
  %s16 = inlined_call_operand.vmem [shape: f32[2,32], index: 16, kind: output, shape index: {1}]
  %s17 = inlined_call_operand.vmem [shape: f32[2,32], index: 17, kind: output, shape index: {2}]
  %s18 = inlined_call_operand.vmem [shape: f32[2,32], index: 18, kind: output, shape index: {3}]
  %19 = xla_tuple %s15, %s16, %s17, %s18
  %s20 = sld [smem:[#allocation0]]
  $region94: #{set_np_forward.4} parent=0
    _
  %s22 = ssub.s32 1, %s20
  %s23 = scalar_select 0, %s22, %s20
  // Predicated region
  $region2: #{set_np_forward.4} parent=0 // pred_check
    _
  $region3: #{set_np_forward.4} parent=0 // pred_check_branch
    %25 = sbr.rel (0) target = $region5
  $region4: #{set_np_forward.4} parent=0 // pred_region
    _
  $region5: #{set_np_forward.4} parent=0 // pred_fallthru
    _
  // Predicated region
  $region6: #{set_np_forward.4} parent=0 // pred_check
    _
  $region7: #{set_np_forward.4} parent=0 // pred_check_branch
    %27 = sbr.rel (0) target = $region9
  $region8: #{set_np_forward.4} parent=0 // pred_region
    _
  $region9: #{set_np_forward.4} parent=0 // pred_fallthru
    _
  // Predicated region
  $region10: #{set_np_forward.4} parent=0 // pred_check
    _
  $region11: #{set_np_forward.4} parent=0 // pred_check_branch
    %29 = sbr.rel (0) target = $region13
  $region12: #{set_np_forward.4} parent=0 // pred_region
    _
  $region13: #{set_np_forward.4} parent=0 // pred_fallthru
    _
  // Predicated region
  $region14: #{set_np_forward.4} parent=0 // pred_check
    _
  $region15: #{set_np_forward.4} parent=0 // pred_check_branch
    %31 = sbr.rel (0) target = $region17
  $region16: #{set_np_forward.4} parent=0 // pred_region
    _
  $region17: #{set_np_forward.4} parent=0 // pred_fallthru
    _
  // Predicated region
  $region18: #{set_np_forward.4} parent=0 // pred_check
    _
  $region19: #{set_np_forward.4} parent=0 // pred_check_branch
    %33 = sbr.rel (0) target = $region21
  $region20: #{set_np_forward.4} parent=0 // pred_region
    _
  $region21: #{set_np_forward.4} parent=0 // pred_fallthru
    _
  // Predicated region
  $region22: #{set_np_forward.4} parent=0 // pred_check
    _
  $region23: #{set_np_forward.4} parent=0 // pred_check_branch
    %35 = sbr.rel (0) target = $region25
  $region24: #{set_np_forward.4} parent=0 // pred_region
    _
  $region25: #{set_np_forward.4} parent=0 // pred_fallthru
    _
  // Predicated region
  $region26: #{set_np_forward.4} parent=0 // pred_check
    _
  $region27: #{set_np_forward.4} parent=0 // pred_check_branch
    %37 = sbr.rel (0) target = $region29
  $region28: #{set_np_forward.4} parent=0 // pred_region
    _
  $region29: #{set_np_forward.4} parent=0 // pred_fallthru
    _
  // Predicated region
  $region30: #{set_np_forward.4} parent=0 // pred_check
    _
  $region31: #{set_np_forward.4} parent=0 // pred_check_branch
    %39 = sbr.rel (0) target = $region33
  $region32: #{set_np_forward.4} parent=0 // pred_region
    _
  $region33: #{set_np_forward.4} parent=0 // pred_fallthru
    _
  // Predicated region
  $region34: #{set_np_forward.4} parent=0 // pred_check
    _
  $region35: #{set_np_forward.4} parent=0 // pred_check_branch
    %41 = sbr.rel (0) target = $region37
  $region36: #{set_np_forward.4} parent=0 // pred_region
    _
  $region37: #{set_np_forward.4} parent=0 // pred_fallthru
    _
  // Predicated region
  $region38: #{set_np_forward.4} parent=0 // pred_check
    _
  $region39: #{set_np_forward.4} parent=0 // pred_check_branch
    %43 = sbr.rel (0) target = $region41
  $region40: #{set_np_forward.4} parent=0 // pred_region
    _
  $region41: #{set_np_forward.4} parent=0 // pred_fallthru
    _
  // Predicated region
  $region42: #{set_np_forward.4} parent=0 // pred_check
    _
  $region43: #{set_np_forward.4} parent=0 // pred_check_branch
    %45 = sbr.rel (0) target = $region45
  $region44: #{set_np_forward.4} parent=0 // pred_region
    _
  $region45: #{set_np_forward.4} parent=0 // pred_fallthru
    _
  // Predicated region
  $region46: #{set_np_forward.4} parent=0 // pred_check
    _
  $region47: #{set_np_forward.4} parent=0 // pred_check_branch
    %47 = sbr.rel (0) target = $region49
  $region48: #{set_np_forward.4} parent=0 // pred_region
    _
  $region49: #{set_np_forward.4} parent=0 // pred_fallthru
    _
  // Predicated region
  $region50: #{set_np_forward.4} parent=0 // pred_check
    _
  $region51: #{set_np_forward.4} parent=0 // pred_check_branch
    %49 = sbr.rel (0) target = $region53
  $region52: #{set_np_forward.4} parent=0 // pred_region
    _
  $region53: #{set_np_forward.4} parent=0 // pred_fallthru
    _
  // Predicated region
  $region54: #{set_np_forward.4} parent=0 // pred_check
    _
  $region55: #{set_np_forward.4} parent=0 // pred_check_branch
    %51 = sbr.rel (0) target = $region57
  $region56: #{set_np_forward.4} parent=0 // pred_region
    _
  $region57: #{set_np_forward.4} parent=0 // pred_fallthru
    _
  // Predicated region
  $region58: #{set_np_forward.4} parent=0 // pred_check
    _
  $region59: #{set_np_forward.4} parent=0 // pred_check_branch
    %53 = sbr.rel (0) target = $region61
  $region60: #{set_np_forward.4} parent=0 // pred_region
    _
  $region61: #{set_np_forward.4} parent=0 // pred_fallthru
    _
  %v55 = vld [vmem:[%s6] sm:$0xf]
  %v56 = vld [vmem:[%s6 + $0x4] sm:$0xf]
  %v57 = vld [vmem:[%s6 + $0x8] sm:$0xf]
  %v58 = vld [vmem:[%s6 + $0xc] sm:$0xf]
  %v59 = vld [vmem:[%s7] sm:$0xf]
  %v60 = vld [vmem:[%s8] sm:$0x1]
  %v61 = vld [vmem:[%s9] sm:$0xf]
  %v62 = vld [vmem:[%s9 + $0x4] sm:$0xf]
  %v63 = vld [vmem:[%s9 + $0x8] sm:$0xf]
  %v64 = vld [vmem:[%s9 + $0xc] sm:$0xf]
  %v65 = vld [vmem:[%s10] sm:$0x1]
  %v66 = vld [vmem:[%s11] sm:$0xf]
  %v67 = vld [vmem:[%s11 + $0x4] sm:$0xf]
  %v68 = vld [vmem:[%s11 + $0x8] sm:$0xf]
  %v69 = vld [vmem:[%s11 + $0xc] sm:$0xf]
  %v70 = vld [vmem:[%s12] sm:$0x1]
  %v71 = vld [vmem:[%s13] sm:$0xf]
  %v72 = vld [vmem:[%s13 + $0x4] sm:$0xf]
  %v73 = vld [vmem:[%s13 + $0x8] sm:$0xf]
  %v74 = vld [vmem:[%s13 + $0xc] sm:$0xf]
  %v75 = vld [vmem:[%s14] sm:$0x1]
  %v76 = vld [vmem:[%s0] sm:$0xf]
  %v77 = vld [vmem:[%s0 + $0x4] sm:$0xf]
  %v78 = vld [vmem:[%s1] sm:$0xf]
  %v79 = vld [vmem:[%s1 + $0x4] sm:$0xf]
  %v80 = vld [vmem:[%s4] sm:$0x1]
  %v83 = vunpack.c.l.b16 %v78
  %v84 = vunpack.c.l.b16 %v79
  %v85 = vpack.c.b16 %v84, %v83
  %vm86 = vcmask 64512
  %v88 = vsel %vm86, %v85, 0
  %vm90 = vcmask 1043456
  %v92 = vsel %vm90, %v59, 0
  %94 = vmatprep.subr.bf16.mxu0 0
  %95 = vmatpush1.bf16.msra.mxu0 %v92
  %96 = vmatprep.subr.bf16.mxu0 0
  %97 = vmatpush1.bf16.msra.mxu0 0
  %98 = vmatprep.subr.bf16.mxu0 0
  %99 = vmatpush1.bf16.msra.mxu0 0
  %100 = vmatprep.subr.bf16.mxu0 0
  %101 = vmatpush1.bf16.msra.mxu0 0
  %102 = vmatprep.subr.bf16.mxu0 0
  %103 = vmatpush1.bf16.msra.mxu0 0
  %104 = vmatprep.subr.bf16.mxu0 0
  %105 = vmatpush1.bf16.msra.mxu0 0
  %106 = vmatprep.subr.bf16.mxu0 0
  %107 = vmatpush1.bf16.msra.mxu0 0
  %108 = vmatprep.subr.bf16.mxu0 0
  %109 = vmatpush1.bf16.msra.mxu0 0
  %110 = vmatprep.subr.bf16.mxu0 0
  %111 = vmatpush1.bf16.msra.mxu0 0
  %112 = vmatprep.subr.bf16.mxu0 0
  %113 = vmatpush1.bf16.msra.mxu0 0
  %114 = vmatprep.subr.bf16.mxu0 0
  %115 = vmatpush1.bf16.msra.mxu0 0
  %116 = vmatprep.subr.bf16.mxu0 0
  %117 = vmatpush1.bf16.msra.mxu0 0
  %118 = vmatprep.subr.bf16.mxu0 0
  %119 = vmatpush1.bf16.msra.mxu0 0
  %120 = vmatprep.subr.bf16.mxu0 0
  %121 = vmatpush1.bf16.msra.mxu0 0
  %122 = vmatprep.subr.bf16.mxu0 0
  %123 = vmatpush1.bf16.msra.mxu0 0
  %124 = vmatprep.subr.bf16.mxu0 0
  %125 = vmatpush1.bf16.msra.mxu0 0
  %126 = vmatprep.mubr.bf16.mxu0 0
  %127 = vmatmul.mubr.bf16.gmra.mrb[0].mxu0 %v88
  %v128 = vpop.f32.mrb[0].mxu0
  %v129 = vadd.f32 0.0, %v128
  %v130 = vpop.f32.mrb[0].mxu0
  %v131 = vpop.f32.mrb[0].mxu0
  %v132 = vadd.f32 0.0, %v131
  %v133 = vpop.f32.mrb[0].mxu0
  %134 = vdwg.mxu0
  %v137 = vunpack.c.l.b16 %v76
  %v138 = vunpack.c.l.b16 %v77
  %v139 = vpack.c.b16 %v138, %v137
  %v144 = vunpack.c.l.b16 %v55
  %v145 = vunpack.c.l.b16 %v56
  %v146 = vunpack.c.l.b16 %v57
  %v147 = vunpack.c.l.b16 %v58
  %v148 = vpack.c.b16 %v145, %v144
  %v149 = vpack.c.b16 %v147, %v146
  %vm152 = vcmask 261120
  %v154 = vsel %vm152, %v139, 0
  %156 = vmatprep.subr.bf16.mxu0 0
  %157 = vmatpush1.bf16.msra.mxu0 %v148
  %158 = vmatprep.subr.bf16.mxu0 0
  %159 = vmatpush1.bf16.msra.mxu0 %v149
  %160 = vmatprep.subr.bf16.mxu0 0
  %161 = vmatpush1.bf16.msra.mxu0 0
  %162 = vmatprep.subr.bf16.mxu0 0
  %163 = vmatpush1.bf16.msra.mxu0 0
  %164 = vmatprep.subr.bf16.mxu0 0
  %165 = vmatpush1.bf16.msra.mxu0 0
  %166 = vmatprep.subr.bf16.mxu0 0
  %167 = vmatpush1.bf16.msra.mxu0 0
  %168 = vmatprep.subr.bf16.mxu0 0
  %169 = vmatpush1.bf16.msra.mxu0 0
  %170 = vmatprep.subr.bf16.mxu0 0
  %171 = vmatpush1.bf16.msra.mxu0 0
  %172 = vmatprep.subr.bf16.mxu0 0
  %173 = vmatpush1.bf16.msra.mxu0 0
  %174 = vmatprep.subr.bf16.mxu0 0
  %175 = vmatpush1.bf16.msra.mxu0 0
  %176 = vmatprep.subr.bf16.mxu0 0
  %177 = vmatpush1.bf16.msra.mxu0 0
  %178 = vmatprep.subr.bf16.mxu0 0
  %179 = vmatpush1.bf16.msra.mxu0 0
  %180 = vmatprep.subr.bf16.mxu0 0
  %181 = vmatpush1.bf16.msra.mxu0 0
  %182 = vmatprep.subr.bf16.mxu0 0
  %183 = vmatpush1.bf16.msra.mxu0 0
  %184 = vmatprep.subr.bf16.mxu0 0
  %185 = vmatpush1.bf16.msra.mxu0 0
  %186 = vmatprep.subr.bf16.mxu0 0
  %187 = vmatpush1.bf16.msra.mxu0 0
  %188 = vmatprep.mubr.bf16.mxu0 0
  %189 = vmatmul.mubr.bf16.gmra.mrb[0].mxu0 %v154
  %v190 = vpop.f32.mrb[0].mxu0
  %v191 = vadd.f32 %v129, %v190
  %v192 = vpop.f32.mrb[0].mxu0
  %v193 = vpop.f32.mrb[0].mxu0
  %v194 = vadd.f32 %v132, %v193
  %v195 = vpop.f32.mrb[0].mxu0
  %196 = vdwg.mxu0
  %v198 = vlaneseq
  %v199 = vshrl.u32 %v198, 7
  %v200 = vsub.s32 0, %v199
  %v201 = vrot.slane %v60, %v200
  %v203 = vadd.f32 %v191, %v201
  %v204 = vadd.f32 %v194, %v201
  %v205 = vmax.f32 %v203, 0.0
  %v206 = vmax.f32 %v204, 0.0
  %v207 = vpack.c.bf16 %v206, %v205
  %v209 = vlaneseq
  %v210 = vshrl.u32 %v209, 7
  %v211 = vsub.s32 0, %v210
  %v212 = vrot.slane %v65, %v211
  %v218 = vunpack.c.l.b16 %v61
  %v219 = vunpack.c.l.b16 %v62
  %v220 = vunpack.c.l.b16 %v63
  %v221 = vunpack.c.l.b16 %v64
  %v222 = vpack.c.b16 %v219, %v218
  %v223 = vpack.c.b16 %v221, %v220
  %v227 = vsel %vm152, %v207, 0
  %229 = vmatprep.subr.bf16.mxu0 0
  %230 = vmatpush1.bf16.msra.mxu0 %v222
  %231 = vmatprep.subr.bf16.mxu0 0
  %232 = vmatpush1.bf16.msra.mxu0 %v223
  %233 = vmatprep.subr.bf16.mxu0 0
  %234 = vmatpush1.bf16.msra.mxu0 0
  %235 = vmatprep.subr.bf16.mxu0 0
  %236 = vmatpush1.bf16.msra.mxu0 0
  %237 = vmatprep.subr.bf16.mxu0 0
  %238 = vmatpush1.bf16.msra.mxu0 0
  %239 = vmatprep.subr.bf16.mxu0 0
  %240 = vmatpush1.bf16.msra.mxu0 0
  %241 = vmatprep.subr.bf16.mxu0 0
  %242 = vmatpush1.bf16.msra.mxu0 0
  %243 = vmatprep.subr.bf16.mxu0 0
  %244 = vmatpush1.bf16.msra.mxu0 0
  %245 = vmatprep.subr.bf16.mxu0 0
  %246 = vmatpush1.bf16.msra.mxu0 0
  %247 = vmatprep.subr.bf16.mxu0 0
  %248 = vmatpush1.bf16.msra.mxu0 0
  %249 = vmatprep.subr.bf16.mxu0 0
  %250 = vmatpush1.bf16.msra.mxu0 0
  %251 = vmatprep.subr.bf16.mxu0 0
  %252 = vmatpush1.bf16.msra.mxu0 0
  %253 = vmatprep.subr.bf16.mxu0 0
  %254 = vmatpush1.bf16.msra.mxu0 0
  %255 = vmatprep.subr.bf16.mxu0 0
  %256 = vmatpush1.bf16.msra.mxu0 0
  %257 = vmatprep.subr.bf16.mxu0 0
  %258 = vmatpush1.bf16.msra.mxu0 0
  %259 = vmatprep.subr.bf16.mxu0 0
  %260 = vmatpush1.bf16.msra.mxu0 0
  %261 = vmatprep.mubr.bf16.mxu0 0
  %262 = vmatmul.mubr.bf16.gmra.mrb[0].mxu0 %v227
  %v263 = vpop.f32.mrb[0].mxu0
  %v264 = vadd.f32 %v212, %v263
  %v265 = vpop.f32.mrb[0].mxu0
  %v266 = vpop.f32.mrb[0].mxu0
  %v267 = vadd.f32 %v212, %v266
  %v268 = vpop.f32.mrb[0].mxu0
  %269 = vdwg.mxu0
  %v270 = vmax.f32 %v264, 0.0
  %v271 = vmax.f32 %v267, 0.0
  %v272 = vpack.c.bf16 %v271, %v270
  %vm273 = vcmask 130048
  %v275 = vsel %vm273, %v80, 0
  %277 = vmatprep.subr.bf16.mxu0 0
  %278 = vmatpush1.bf16.msra.mxu0 %v272
  %279 = vmatprep.subr.bf16.mxu0 0
  %280 = vmatpush1.bf16.msra.mxu0 0
  %281 = vmatprep.subr.bf16.mxu0 0
  %282 = vmatpush1.bf16.msra.mxu0 0
  %283 = vmatprep.subr.bf16.mxu0 0
  %284 = vmatpush1.bf16.msra.mxu0 0
  %285 = vmatprep.subr.bf16.mxu0 0
  %286 = vmatpush1.bf16.msra.mxu0 0
  %287 = vmatprep.subr.bf16.mxu0 0
  %288 = vmatpush1.bf16.msra.mxu0 0
  %289 = vmatprep.subr.bf16.mxu0 0
  %290 = vmatpush1.bf16.msra.mxu0 0
  %291 = vmatprep.subr.bf16.mxu0 0
  %292 = vmatpush1.bf16.msra.mxu0 0
  %293 = vmatprep.subr.bf16.mxu0 0
  %294 = vmatpush1.bf16.msra.mxu0 0
  %295 = vmatprep.subr.bf16.mxu0 0
  %296 = vmatpush1.bf16.msra.mxu0 0
  %297 = vmatprep.subr.bf16.mxu0 0
  %298 = vmatpush1.bf16.msra.mxu0 0
  %299 = vmatprep.subr.bf16.mxu0 0
  %300 = vmatpush1.bf16.msra.mxu0 0
  %301 = vmatprep.subr.bf16.mxu0 0
  %302 = vmatpush1.bf16.msra.mxu0 0
  %303 = vmatprep.subr.bf16.mxu0 0
  %304 = vmatpush1.bf16.msra.mxu0 0
  %305 = vmatprep.subr.bf16.mxu0 0
  %306 = vmatpush1.bf16.msra.mxu0 0
  %307 = vmatprep.subr.bf16.mxu0 0
  %308 = vmatpush1.bf16.msra.mxu0 0
  %309 = vmatprep.mubr.bf16.mxu0 0
  %310 = vmatmul.mubr.bf16.gmra.mrb[0].mxu0 %v275
  %v311 = vpop.f32.mrb[0].mxu0
  %v312 = vadd.f32 0.0, %v311
  %v313 = vpop.f32.mrb[0].mxu0
  %v314 = vpop.f32.mrb[0].mxu0
  %v315 = vpop.f32.mrb[0].mxu0
  %316 = vdwg.mxu0
  %v317 = vmul.f32 %v312, 0.125
  %v318 = vpack.c.bf16 %v317, %v317
  %v320 = vlaneseq
  %v321 = vshrl.u32 %v320, 7
  %v322 = vsub.s32 0, %v321
  %v323 = vrot.slane %v70, %v322
  %v329 = vunpack.c.l.b16 %v66
  %v330 = vunpack.c.l.b16 %v67
  %v331 = vunpack.c.l.b16 %v68
  %v332 = vunpack.c.l.b16 %v69
  %v333 = vpack.c.b16 %v330, %v329
  %v334 = vpack.c.b16 %v332, %v331
  %v338 = vsel %vm152, %v318, 0
  %340 = vmatprep.subr.bf16.mxu0 0
  %341 = vmatpush1.bf16.msra.mxu0 %v333
  %342 = vmatprep.subr.bf16.mxu0 0
  %343 = vmatpush1.bf16.msra.mxu0 %v334
  %344 = vmatprep.subr.bf16.mxu0 0
  %345 = vmatpush1.bf16.msra.mxu0 0
  %346 = vmatprep.subr.bf16.mxu0 0
  %347 = vmatpush1.bf16.msra.mxu0 0
  %348 = vmatprep.subr.bf16.mxu0 0
  %349 = vmatpush1.bf16.msra.mxu0 0
  %350 = vmatprep.subr.bf16.mxu0 0
  %351 = vmatpush1.bf16.msra.mxu0 0
  %352 = vmatprep.subr.bf16.mxu0 0
  %353 = vmatpush1.bf16.msra.mxu0 0
  %354 = vmatprep.subr.bf16.mxu0 0
  %355 = vmatpush1.bf16.msra.mxu0 0
  %356 = vmatprep.subr.bf16.mxu0 0
  %357 = vmatpush1.bf16.msra.mxu0 0
  %358 = vmatprep.subr.bf16.mxu0 0
  %359 = vmatpush1.bf16.msra.mxu0 0
  %360 = vmatprep.subr.bf16.mxu0 0
  %361 = vmatpush1.bf16.msra.mxu0 0
  %362 = vmatprep.subr.bf16.mxu0 0
  %363 = vmatpush1.bf16.msra.mxu0 0
  %364 = vmatprep.subr.bf16.mxu0 0
  %365 = vmatpush1.bf16.msra.mxu0 0
  %366 = vmatprep.subr.bf16.mxu0 0
  %367 = vmatpush1.bf16.msra.mxu0 0
  %368 = vmatprep.subr.bf16.mxu0 0
  %369 = vmatpush1.bf16.msra.mxu0 0
  %370 = vmatprep.subr.bf16.mxu0 0
  %371 = vmatpush1.bf16.msra.mxu0 0
  %372 = vmatprep.mubr.bf16.mxu0 0
  %373 = vmatmul.mubr.bf16.gmra.mrb[0].mxu0 %v338
  %v374 = vpop.f32.mrb[0].mxu0
  %v375 = vadd.f32 %v323, %v374
  %v376 = vpop.f32.mrb[0].mxu0
  %v377 = vpop.f32.mrb[0].mxu0
  %v378 = vpop.f32.mrb[0].mxu0
  %379 = vdwg.mxu0
  %v381 = vlaneseq
  %v382 = vshrl.u32 %v381, 7
  %v383 = vsub.s32 0, %v382
  %v384 = vrot.slane %v75, %v383
  %v390 = vunpack.c.l.b16 %v71
  %v391 = vunpack.c.l.b16 %v72
  %v392 = vunpack.c.l.b16 %v73
  %v393 = vunpack.c.l.b16 %v74
  %v394 = vpack.c.b16 %v391, %v390
  %v395 = vpack.c.b16 %v393, %v392
  %398 = vmatprep.subr.bf16.mxu0 0
  %399 = vmatpush1.bf16.msra.mxu0 %v394
  %400 = vmatprep.subr.bf16.mxu0 0
  %401 = vmatpush1.bf16.msra.mxu0 %v395
  %402 = vmatprep.subr.bf16.mxu0 0
  %403 = vmatpush1.bf16.msra.mxu0 0
  %404 = vmatprep.subr.bf16.mxu0 0
  %405 = vmatpush1.bf16.msra.mxu0 0
  %406 = vmatprep.subr.bf16.mxu0 0
  %407 = vmatpush1.bf16.msra.mxu0 0
  %408 = vmatprep.subr.bf16.mxu0 0
  %409 = vmatpush1.bf16.msra.mxu0 0
  %410 = vmatprep.subr.bf16.mxu0 0
  %411 = vmatpush1.bf16.msra.mxu0 0
  %412 = vmatprep.subr.bf16.mxu0 0
  %413 = vmatpush1.bf16.msra.mxu0 0
  %414 = vmatprep.subr.bf16.mxu0 0
  %415 = vmatpush1.bf16.msra.mxu0 0
  %416 = vmatprep.subr.bf16.mxu0 0
  %417 = vmatpush1.bf16.msra.mxu0 0
  %418 = vmatprep.subr.bf16.mxu0 0
  %419 = vmatpush1.bf16.msra.mxu0 0
  %420 = vmatprep.subr.bf16.mxu0 0
  %421 = vmatpush1.bf16.msra.mxu0 0
  %422 = vmatprep.subr.bf16.mxu0 0
  %423 = vmatpush1.bf16.msra.mxu0 0
  %424 = vmatprep.subr.bf16.mxu0 0
  %425 = vmatpush1.bf16.msra.mxu0 0
  %426 = vmatprep.subr.bf16.mxu0 0
  %427 = vmatpush1.bf16.msra.mxu0 0
  %428 = vmatprep.subr.bf16.mxu0 0
  %429 = vmatpush1.bf16.msra.mxu0 0
  %430 = vmatprep.mubr.bf16.mxu0 0
  %431 = vmatmul.mubr.bf16.gmra.mrb[0].mxu0 %v338
  %v432 = vpop.f32.mrb[0].mxu0
  %v433 = vadd.f32 %v384, %v432
  %v434 = vpop.f32.mrb[0].mxu0
  %v435 = vpop.f32.mrb[0].mxu0
  %v436 = vpop.f32.mrb[0].mxu0
  %437 = vdwg.mxu0
  %v438 = vsub.f32 0.0, %v433
  %v439 = vmul.f32 %v438, 1.442695
  %v440 = vpow.pop %v439
  %v441 = vadd.f32 %v440, 1.0
  %v442 = vrcp.pop %v441
  %v443 = vmul.f32 0.9, %v442
  %v444 = vadd.f32 %v443, 0.1
  %v445 = vld [vmem:[%s2] sm:$0xf]
  %v446 = vld [vmem:[%s2 + $0x4] sm:$0xf]
  %v447 = vld [vmem:[%s3] sm:$0xf]
  %v448 = vld [vmem:[%s3 + $0x4] sm:$0xf]
  %v449 = vld [vmem:[%s5] sm:$0x1]
  %v452 = vunpack.c.l.b16 %v447
  %v453 = vunpack.c.l.b16 %v448
  %v454 = vpack.c.b16 %v453, %v452
  %v456 = vsel %vm86, %v454, 0
  %458 = vmatprep.subr.bf16.mxu0 0
  %459 = vmatpush1.bf16.msra.mxu0 %v92
  %460 = vmatprep.subr.bf16.mxu0 0
  %461 = vmatpush1.bf16.msra.mxu0 0
  %462 = vmatprep.subr.bf16.mxu0 0
  %463 = vmatpush1.bf16.msra.mxu0 0
  %464 = vmatprep.subr.bf16.mxu0 0
  %465 = vmatpush1.bf16.msra.mxu0 0
  %466 = vmatprep.subr.bf16.mxu0 0
  %467 = vmatpush1.bf16.msra.mxu0 0
  %468 = vmatprep.subr.bf16.mxu0 0
  %469 = vmatpush1.bf16.msra.mxu0 0
  %470 = vmatprep.subr.bf16.mxu0 0
  %471 = vmatpush1.bf16.msra.mxu0 0
  %472 = vmatprep.subr.bf16.mxu0 0
  %473 = vmatpush1.bf16.msra.mxu0 0
  %474 = vmatprep.subr.bf16.mxu0 0
  %475 = vmatpush1.bf16.msra.mxu0 0
  %476 = vmatprep.subr.bf16.mxu0 0
  %477 = vmatpush1.bf16.msra.mxu0 0
  %478 = vmatprep.subr.bf16.mxu0 0
  %479 = vmatpush1.bf16.msra.mxu0 0
  %480 = vmatprep.subr.bf16.mxu0 0
  %481 = vmatpush1.bf16.msra.mxu0 0
  %482 = vmatprep.subr.bf16.mxu0 0
  %483 = vmatpush1.bf16.msra.mxu0 0
  %484 = vmatprep.subr.bf16.mxu0 0
  %485 = vmatpush1.bf16.msra.mxu0 0
  %486 = vmatprep.subr.bf16.mxu0 0
  %487 = vmatpush1.bf16.msra.mxu0 0
  %488 = vmatprep.subr.bf16.mxu0 0
  %489 = vmatpush1.bf16.msra.mxu0 0
  %490 = vmatprep.mubr.bf16.mxu0 0
  %491 = vmatmul.mubr.bf16.gmra.mrb[0].mxu0 %v456
  %v492 = vpop.f32.mrb[0].mxu0
  %v493 = vadd.f32 0.0, %v492
  %v494 = vpop.f32.mrb[0].mxu0
  %v495 = vpop.f32.mrb[0].mxu0
  %v496 = vadd.f32 0.0, %v495
  %v497 = vpop.f32.mrb[0].mxu0
  %498 = vdwg.mxu0
  %v501 = vunpack.c.l.b16 %v445
  %v502 = vunpack.c.l.b16 %v446
  %v503 = vpack.c.b16 %v502, %v501
  %v505 = vsel %vm152, %v503, 0
  %507 = vmatprep.subr.bf16.mxu0 0
  %508 = vmatpush1.bf16.msra.mxu0 %v148
  %509 = vmatprep.subr.bf16.mxu0 0
  %510 = vmatpush1.bf16.msra.mxu0 %v149
  %511 = vmatprep.subr.bf16.mxu0 0
  %512 = vmatpush1.bf16.msra.mxu0 0
  %513 = vmatprep.subr.bf16.mxu0 0
  %514 = vmatpush1.bf16.msra.mxu0 0
  %515 = vmatprep.subr.bf16.mxu0 0
  %516 = vmatpush1.bf16.msra.mxu0 0
  %517 = vmatprep.subr.bf16.mxu0 0
  %518 = vmatpush1.bf16.msra.mxu0 0
  %519 = vmatprep.subr.bf16.mxu0 0
  %520 = vmatpush1.bf16.msra.mxu0 0
  %521 = vmatprep.subr.bf16.mxu0 0
  %522 = vmatpush1.bf16.msra.mxu0 0
  %523 = vmatprep.subr.bf16.mxu0 0
  %524 = vmatpush1.bf16.msra.mxu0 0
  %525 = vmatprep.subr.bf16.mxu0 0
  %526 = vmatpush1.bf16.msra.mxu0 0
  %527 = vmatprep.subr.bf16.mxu0 0
  %528 = vmatpush1.bf16.msra.mxu0 0
  %529 = vmatprep.subr.bf16.mxu0 0
  %530 = vmatpush1.bf16.msra.mxu0 0
  %531 = vmatprep.subr.bf16.mxu0 0
  %532 = vmatpush1.bf16.msra.mxu0 0
  %533 = vmatprep.subr.bf16.mxu0 0
  %534 = vmatpush1.bf16.msra.mxu0 0
  %535 = vmatprep.subr.bf16.mxu0 0
  %536 = vmatpush1.bf16.msra.mxu0 0
  %537 = vmatprep.subr.bf16.mxu0 0
  %538 = vmatpush1.bf16.msra.mxu0 0
  %539 = vmatprep.mubr.bf16.mxu0 0
  %540 = vmatmul.mubr.bf16.gmra.mrb[0].mxu0 %v505
  %v541 = vpop.f32.mrb[0].mxu0
  %v542 = vadd.f32 %v493, %v541
  %v543 = vpop.f32.mrb[0].mxu0
  %v544 = vpop.f32.mrb[0].mxu0
  %v545 = vadd.f32 %v496, %v544
  %v546 = vpop.f32.mrb[0].mxu0
  %547 = vdwg.mxu0
  %v548 = vadd.f32 %v542, %v201
  %v549 = vadd.f32 %v545, %v201
  %v550 = vmax.f32 %v548, 0.0
  %v551 = vmax.f32 %v549, 0.0
  %v552 = vpack.c.bf16 %v551, %v550
  %v554 = vsel %vm152, %v552, 0
  %556 = vmatprep.subr.bf16.mxu0 0
  %557 = vmatpush1.bf16.msra.mxu0 %v222
  %558 = vmatprep.subr.bf16.mxu0 0
  %559 = vmatpush1.bf16.msra.mxu0 %v223
  %560 = vmatprep.subr.bf16.mxu0 0
  %561 = vmatpush1.bf16.msra.mxu0 0
  %562 = vmatprep.subr.bf16.mxu0 0
  %563 = vmatpush1.bf16.msra.mxu0 0
  %564 = vmatprep.subr.bf16.mxu0 0
  %565 = vmatpush1.bf16.msra.mxu0 0
  %566 = vmatprep.subr.bf16.mxu0 0
  %567 = vmatpush1.bf16.msra.mxu0 0
  %568 = vmatprep.subr.bf16.mxu0 0
  %569 = vmatpush1.bf16.msra.mxu0 0
  %570 = vmatprep.subr.bf16.mxu0 0
  %571 = vmatpush1.bf16.msra.mxu0 0
  %572 = vmatprep.subr.bf16.mxu0 0
  %573 = vmatpush1.bf16.msra.mxu0 0
  %574 = vmatprep.subr.bf16.mxu0 0
  %575 = vmatpush1.bf16.msra.mxu0 0
  %576 = vmatprep.subr.bf16.mxu0 0
  %577 = vmatpush1.bf16.msra.mxu0 0
  %578 = vmatprep.subr.bf16.mxu0 0
  %579 = vmatpush1.bf16.msra.mxu0 0
  %580 = vmatprep.subr.bf16.mxu0 0
  %581 = vmatpush1.bf16.msra.mxu0 0
  %582 = vmatprep.subr.bf16.mxu0 0
  %583 = vmatpush1.bf16.msra.mxu0 0
  %584 = vmatprep.subr.bf16.mxu0 0
  %585 = vmatpush1.bf16.msra.mxu0 0
  %586 = vmatprep.subr.bf16.mxu0 0
  %587 = vmatpush1.bf16.msra.mxu0 0
  %588 = vmatprep.mubr.bf16.mxu0 0
  %589 = vmatmul.mubr.bf16.gmra.mrb[0].mxu0 %v554
  %v590 = vpop.f32.mrb[0].mxu0
  %v591 = vadd.f32 %v212, %v590
  %v592 = vpop.f32.mrb[0].mxu0
  %v593 = vpop.f32.mrb[0].mxu0
  %v594 = vadd.f32 %v212, %v593
  %v595 = vpop.f32.mrb[0].mxu0
  %596 = vdwg.mxu0
  %v597 = vmax.f32 %v591, 0.0
  %v598 = vmax.f32 %v594, 0.0
  %v599 = vpack.c.bf16 %v598, %v597
  %v601 = vsel %vm273, %v449, 0
  %603 = vmatprep.subr.bf16.mxu0 0
  %604 = vmatpush1.bf16.msra.mxu0 %v599
  %605 = vmatprep.subr.bf16.mxu0 0
  %606 = vmatpush1.bf16.msra.mxu0 0
  %607 = vmatprep.subr.bf16.mxu0 0
  %608 = vmatpush1.bf16.msra.mxu0 0
  %609 = vmatprep.subr.bf16.mxu0 0
  %610 = vmatpush1.bf16.msra.mxu0 0
  %611 = vmatprep.subr.bf16.mxu0 0
  %612 = vmatpush1.bf16.msra.mxu0 0
  %613 = vmatprep.subr.bf16.mxu0 0
  %614 = vmatpush1.bf16.msra.mxu0 0
  %615 = vmatprep.subr.bf16.mxu0 0
  %616 = vmatpush1.bf16.msra.mxu0 0
  %617 = vmatprep.subr.bf16.mxu0 0
  %618 = vmatpush1.bf16.msra.mxu0 0
  %619 = vmatprep.subr.bf16.mxu0 0
  %620 = vmatpush1.bf16.msra.mxu0 0
  %621 = vmatprep.subr.bf16.mxu0 0
  %622 = vmatpush1.bf16.msra.mxu0 0
  %623 = vmatprep.subr.bf16.mxu0 0
  %624 = vmatpush1.bf16.msra.mxu0 0
  %625 = vmatprep.subr.bf16.mxu0 0
  %626 = vmatpush1.bf16.msra.mxu0 0
  %627 = vmatprep.subr.bf16.mxu0 0
  %628 = vmatpush1.bf16.msra.mxu0 0
  %629 = vmatprep.subr.bf16.mxu0 0
  %630 = vmatpush1.bf16.msra.mxu0 0
  %631 = vmatprep.subr.bf16.mxu0 0
  %632 = vmatpush1.bf16.msra.mxu0 0
  %633 = vmatprep.subr.bf16.mxu0 0
  %634 = vmatpush1.bf16.msra.mxu0 0
  %635 = vmatprep.mubr.bf16.mxu0 0
  %636 = vmatmul.mubr.bf16.gmra.mrb[0].mxu0 %v601
  %v637 = vpop.f32.mrb[0].mxu0
  %v638 = vadd.f32 0.0, %v637
  %v639 = vpop.f32.mrb[0].mxu0
  %v640 = vpop.f32.mrb[0].mxu0
  %v641 = vpop.f32.mrb[0].mxu0
  %642 = vdwg.mxu0
  %v643 = vmul.f32 %v638, 0.125
  %v644 = vpack.c.bf16 %v643, %v643
  %v646 = vsel %vm152, %v644, 0
  %648 = vmatprep.subr.bf16.mxu0 0
  %649 = vmatpush1.bf16.msra.mxu0 %v333
  %650 = vmatprep.subr.bf16.mxu0 0
  %651 = vmatpush1.bf16.msra.mxu0 %v334
  %652 = vmatprep.subr.bf16.mxu0 0
  %653 = vmatpush1.bf16.msra.mxu0 0
  %654 = vmatprep.subr.bf16.mxu0 0
  %655 = vmatpush1.bf16.msra.mxu0 0
  %656 = vmatprep.subr.bf16.mxu0 0
  %657 = vmatpush1.bf16.msra.mxu0 0
  %658 = vmatprep.subr.bf16.mxu0 0
  %659 = vmatpush1.bf16.msra.mxu0 0
  %660 = vmatprep.subr.bf16.mxu0 0
  %661 = vmatpush1.bf16.msra.mxu0 0
  %662 = vmatprep.subr.bf16.mxu0 0
  %663 = vmatpush1.bf16.msra.mxu0 0
  %664 = vmatprep.subr.bf16.mxu0 0
  %665 = vmatpush1.bf16.msra.mxu0 0
  %666 = vmatprep.subr.bf16.mxu0 0
  %667 = vmatpush1.bf16.msra.mxu0 0
  %668 = vmatprep.subr.bf16.mxu0 0
  %669 = vmatpush1.bf16.msra.mxu0 0
  %670 = vmatprep.subr.bf16.mxu0 0
  %671 = vmatpush1.bf16.msra.mxu0 0
  %672 = vmatprep.subr.bf16.mxu0 0
  %673 = vmatpush1.bf16.msra.mxu0 0
  %674 = vmatprep.subr.bf16.mxu0 0
  %675 = vmatpush1.bf16.msra.mxu0 0
  %676 = vmatprep.subr.bf16.mxu0 0
  %677 = vmatpush1.bf16.msra.mxu0 0
  %678 = vmatprep.subr.bf16.mxu0 0
  %679 = vmatpush1.bf16.msra.mxu0 0
  %680 = vmatprep.mubr.bf16.mxu0 0
  %681 = vmatmul.mubr.bf16.gmra.mrb[0].mxu0 %v646
  %v682 = vpop.f32.mrb[0].mxu0
  %v683 = vadd.f32 %v323, %v682
  %v684 = vpop.f32.mrb[0].mxu0
  %v685 = vpop.f32.mrb[0].mxu0
  %v686 = vpop.f32.mrb[0].mxu0
  %687 = vdwg.mxu0
  %688 = vmatprep.subr.bf16.mxu0 0
  %689 = vmatpush1.bf16.msra.mxu0 %v394
  %690 = vmatprep.subr.bf16.mxu0 0
  %691 = vmatpush1.bf16.msra.mxu0 %v395
  %692 = vmatprep.subr.bf16.mxu0 0
  %693 = vmatpush1.bf16.msra.mxu0 0
  %694 = vmatprep.subr.bf16.mxu0 0
  %695 = vmatpush1.bf16.msra.mxu0 0
  %696 = vmatprep.subr.bf16.mxu0 0
  %697 = vmatpush1.bf16.msra.mxu0 0
  %698 = vmatprep.subr.bf16.mxu0 0
  %699 = vmatpush1.bf16.msra.mxu0 0
  %700 = vmatprep.subr.bf16.mxu0 0
  %701 = vmatpush1.bf16.msra.mxu0 0
  %702 = vmatprep.subr.bf16.mxu0 0
  %703 = vmatpush1.bf16.msra.mxu0 0
  %704 = vmatprep.subr.bf16.mxu0 0
  %705 = vmatpush1.bf16.msra.mxu0 0
  %706 = vmatprep.subr.bf16.mxu0 0
  %707 = vmatpush1.bf16.msra.mxu0 0
  %708 = vmatprep.subr.bf16.mxu0 0
  %709 = vmatpush1.bf16.msra.mxu0 0
  %710 = vmatprep.subr.bf16.mxu0 0
  %711 = vmatpush1.bf16.msra.mxu0 0
  %712 = vmatprep.subr.bf16.mxu0 0
  %713 = vmatpush1.bf16.msra.mxu0 0
  %714 = vmatprep.subr.bf16.mxu0 0
  %715 = vmatpush1.bf16.msra.mxu0 0
  %716 = vmatprep.subr.bf16.mxu0 0
  %717 = vmatpush1.bf16.msra.mxu0 0
  %718 = vmatprep.subr.bf16.mxu0 0
  %719 = vmatpush1.bf16.msra.mxu0 0
  %720 = vmatprep.mubr.bf16.mxu0 0
  %721 = vmatmul.mubr.bf16.gmra.mrb[0].mxu0 %v646
  %v722 = vpop.f32.mrb[0].mxu0
  %v723 = vadd.f32 %v384, %v722
  %v724 = vpop.f32.mrb[0].mxu0
  %v725 = vpop.f32.mrb[0].mxu0
  %v726 = vpop.f32.mrb[0].mxu0
  %727 = vdwg.mxu0
  %v728 = vsub.f32 0.0, %v723
  %v729 = vmul.f32 %v728, 1.442695
  %v730 = vpow.pop %v729
  %v731 = vadd.f32 %v730, 1.0
  %v732 = vrcp.pop %v731
  %v733 = vmul.f32 0.9, %v732
  %v734 = vadd.f32 %v733, 0.1
  %vm735 = vcmask 254976
  %736 = vst.msk [vmem:[%s15] sm:$0x3] %vm735, %v375
  %737 = vst.msk [vmem:[%s16] sm:$0x3] %vm735, %v444
  %738 = vst.msk [vmem:[%s17] sm:$0x3] %vm735, %v683
  %739 = vst.msk [vmem:[%s18] sm:$0x3] %vm735, %v734
  // Predicated region
  $region62: #{set_np_forward.4} parent=0 // pred_check
    _
  $region63: #{set_np_forward.4} parent=0 // pred_check_branch
    %741 = sbr.rel (0) target = $region65
  $region64: #{set_np_forward.4} parent=0 // pred_region
    _
  $region65: #{set_np_forward.4} parent=0 // pred_fallthru
    _
  // Predicated region
  $region66: #{set_np_forward.4} parent=0 // pred_check
    _
  $region67: #{set_np_forward.4} parent=0 // pred_check_branch
    %743 = sbr.rel (0) target = $region69
  $region68: #{set_np_forward.4} parent=0 // pred_region
    _
  $region69: #{set_np_forward.4} parent=0 // pred_fallthru
    _
  // Predicated region
  $region70: #{set_np_forward.4} parent=0 // pred_check
    _
  $region71: #{set_np_forward.4} parent=0 // pred_check_branch
    %745 = sbr.rel (0) target = $region73
  $region72: #{set_np_forward.4} parent=0 // pred_region
    _
  $region73: #{set_np_forward.4} parent=0 // pred_fallthru
    _
  // Predicated region
  $region74: #{set_np_forward.4} parent=0 // pred_check
    _
  $region75: #{set_np_forward.4} parent=0 // pred_check_branch
    %747 = sbr.rel (0) target = $region77
  $region76: #{set_np_forward.4} parent=0 // pred_region
    _
  $region77: #{set_np_forward.4} parent=0 // pred_fallthru
    _
  // Predicated region
  $region78: #{set_np_forward.4} parent=0 // pred_check
    _
  $region79: #{set_np_forward.4} parent=0 // pred_check_branch
    %749 = sbr.rel (0) target = $region81
  $region80: #{set_np_forward.4} parent=0 // pred_region
    _
  $region81: #{set_np_forward.4} parent=0 // pred_fallthru
    _
  // Predicated region
  $region82: #{set_np_forward.4} parent=0 // pred_check
    _
  $region83: #{set_np_forward.4} parent=0 // pred_check_branch
    %751 = sbr.rel (0) target = $region85
  $region84: #{set_np_forward.4} parent=0 // pred_region
    _
  $region85: #{set_np_forward.4} parent=0 // pred_fallthru
    _
  // Predicated region
  $region86: #{set_np_forward.4} parent=0 // pred_check
    _
  $region87: #{set_np_forward.4} parent=0 // pred_check_branch
    %753 = sbr.rel (0) target = $region89
  $region88: #{set_np_forward.4} parent=0 // pred_region
    _
  $region89: #{set_np_forward.4} parent=0 // pred_fallthru
    _
  // Predicated region
  $region90: #{set_np_forward.4} parent=0 // pred_check
    _
  $region91: #{set_np_forward.4} parent=0 // pred_check_branch
    %755 = sbr.rel (0) target = $region93
  $region92: #{set_np_forward.4} parent=0 // pred_region
    _
  $region93: #{set_np_forward.4} parent=0 // pred_fallthru
    _

// kernel: set_np_forward.5
$region0: #{set_np_forward.5}
  #allocation0 [shape = 'u32[]', space=smem, size = 0x4, offset = 0x4, fixed_abs, tag = 'smem constant byte address 0x4 - core index']
  #allocation1 [shape = 'u32[144,128]{1,0:T(1,128)}', space=vmem, size = 0x12000, scoped, tag = 'internal scratch']
  %s0 = inlined_call_operand.vmem [shape: bf16[16,32], index: 0, kind: input, shape index: {}]
  %s1 = inlined_call_operand.vmem [shape: bf16[16,8], index: 1, kind: input, shape index: {}]
  %s2 = inlined_call_operand.vmem [shape: bf16[16,32], index: 2, kind: input, shape index: {}]
  %s3 = inlined_call_operand.vmem [shape: bf16[2,32], index: 3, kind: input, shape index: {}]
  %s4 = inlined_call_operand.vmem [shape: f32[4,1,32], index: 4, kind: input, shape index: {}]
  %s5 = inlined_call_operand.vmem [shape: f32[16,16], index: 5, kind: input, shape index: {}]
  %s6 = inlined_call_operand.vmem [shape: bf16[16,2], index: 6, kind: input, shape index: {}]
  %s7 = inlined_call_operand.vmem [shape: bf16[32,32], index: 7, kind: input, shape index: {}]
  %s8 = inlined_call_operand.vmem [shape: bf16[8,32], index: 8, kind: input, shape index: {}]
  %s9 = inlined_call_operand.vmem [shape: f32[1,32], index: 9, kind: input, shape index: {}]
  %s10 = inlined_call_operand.vmem [shape: bf16[32,32], index: 10, kind: input, shape index: {}]
  %s11 = inlined_call_operand.vmem [shape: f32[1,32], index: 11, kind: input, shape index: {}]
  %s12 = inlined_call_operand.vmem [shape: bf16[32,32], index: 12, kind: input, shape index: {}]
  %s13 = inlined_call_operand.vmem [shape: f32[1,32], index: 13, kind: input, shape index: {}]
  %s14 = inlined_call_operand.vmem [shape: bf16[32,32], index: 14, kind: input, shape index: {}]
  %s15 = inlined_call_operand.vmem [shape: f32[1,32], index: 15, kind: input, shape index: {}]
  %s16 = inlined_call_operand.vmem [shape: bf16[32,32], index: 16, kind: input, shape index: {}]
  %s17 = inlined_call_operand.vmem [shape: f32[1,32], index: 17, kind: input, shape index: {}]
  %s18 = inlined_call_operand.vmem [shape: bf16[32,32], index: 18, kind: input, shape index: {}]
  %s19 = inlined_call_operand.vmem [shape: f32[1,32], index: 19, kind: input, shape index: {}]
  %s20 = inlined_call_operand.vmem [shape: bf16[32,32], index: 20, kind: input, shape index: {}]
  %s21 = inlined_call_operand.vmem [shape: bf16[32,32], index: 21, kind: input, shape index: {}]
  %s22 = inlined_call_operand.vmem [shape: f32[1,32], index: 22, kind: input, shape index: {}]
  %s23 = inlined_call_operand.vmem [shape: bf16[32,32], index: 23, kind: input, shape index: {}]
  %s24 = inlined_call_operand.vmem [shape: f32[1,32], index: 24, kind: input, shape index: {}]
  %s25 = inlined_call_operand.vmem [shape: bf16[32,2], index: 25, kind: input, shape index: {}]
  %s26 = inlined_call_operand.vmem [shape: f32[1,2], index: 26, kind: input, shape index: {}]
  %s27 = inlined_call_operand.vmem [shape: f32[16,2], index: 27, kind: output, shape index: {}]
  %s28 = sld [smem:[#allocation0]]
  $region118: #{set_np_forward.5} parent=0
    _
  %s30 = ssub.s32 1, %s28
  %s31 = scalar_select 0, %s30, %s28
  // Predicated region
  $region2: #{set_np_forward.5} parent=0 // pred_check
    _
  $region3: #{set_np_forward.5} parent=0 // pred_check_branch
    %33 = sbr.rel (0) target = $region5
  $region4: #{set_np_forward.5} parent=0 // pred_region
    _
  $region5: #{set_np_forward.5} parent=0 // pred_fallthru
    _
  // Predicated region
  $region6: #{set_np_forward.5} parent=0 // pred_check
    _
  $region7: #{set_np_forward.5} parent=0 // pred_check_branch
    %35 = sbr.rel (0) target = $region9
  $region8: #{set_np_forward.5} parent=0 // pred_region
    _
  $region9: #{set_np_forward.5} parent=0 // pred_fallthru
    _
  // Predicated region
  $region10: #{set_np_forward.5} parent=0 // pred_check
    _
  $region11: #{set_np_forward.5} parent=0 // pred_check_branch
    %37 = sbr.rel (0) target = $region13
  $region12: #{set_np_forward.5} parent=0 // pred_region
    _
  $region13: #{set_np_forward.5} parent=0 // pred_fallthru
    _
  // Predicated region
  $region14: #{set_np_forward.5} parent=0 // pred_check
    _
  $region15: #{set_np_forward.5} parent=0 // pred_check_branch
    %39 = sbr.rel (0) target = $region17
  $region16: #{set_np_forward.5} parent=0 // pred_region
    _
  $region17: #{set_np_forward.5} parent=0 // pred_fallthru
    _
  // Predicated region
  $region18: #{set_np_forward.5} parent=0 // pred_check
    _
  $region19: #{set_np_forward.5} parent=0 // pred_check_branch
    %41 = sbr.rel (0) target = $region21
  $region20: #{set_np_forward.5} parent=0 // pred_region
    _
  $region21: #{set_np_forward.5} parent=0 // pred_fallthru
    _
  // Predicated region
  $region22: #{set_np_forward.5} parent=0 // pred_check
    _
  $region23: #{set_np_forward.5} parent=0 // pred_check_branch
    %43 = sbr.rel (0) target = $region25
  $region24: #{set_np_forward.5} parent=0 // pred_region
    _
  $region25: #{set_np_forward.5} parent=0 // pred_fallthru
    _
  // Predicated region
  $region26: #{set_np_forward.5} parent=0 // pred_check
    _
  $region27: #{set_np_forward.5} parent=0 // pred_check_branch
    %45 = sbr.rel (0) target = $region29
  $region28: #{set_np_forward.5} parent=0 // pred_region
    _
  $region29: #{set_np_forward.5} parent=0 // pred_fallthru
    _
  // Predicated region
  $region30: #{set_np_forward.5} parent=0 // pred_check
    _
  $region31: #{set_np_forward.5} parent=0 // pred_check_branch
    %47 = sbr.rel (0) target = $region33
  $region32: #{set_np_forward.5} parent=0 // pred_region
    _
  $region33: #{set_np_forward.5} parent=0 // pred_fallthru
    _
  // Predicated region
  $region34: #{set_np_forward.5} parent=0 // pred_check
    _
  $region35: #{set_np_forward.5} parent=0 // pred_check_branch
    %49 = sbr.rel (0) target = $region37
  $region36: #{set_np_forward.5} parent=0 // pred_region
    _
  $region37: #{set_np_forward.5} parent=0 // pred_fallthru
    _
  // Predicated region
  $region38: #{set_np_forward.5} parent=0 // pred_check
    _
  $region39: #{set_np_forward.5} parent=0 // pred_check_branch
    %51 = sbr.rel (0) target = $region41
  $region40: #{set_np_forward.5} parent=0 // pred_region
    _
  $region41: #{set_np_forward.5} parent=0 // pred_fallthru
    _
  // Predicated region
  $region42: #{set_np_forward.5} parent=0 // pred_check
    _
  $region43: #{set_np_forward.5} parent=0 // pred_check_branch
    %53 = sbr.rel (0) target = $region45
  $region44: #{set_np_forward.5} parent=0 // pred_region
    _
  $region45: #{set_np_forward.5} parent=0 // pred_fallthru
    _
  // Predicated region
  $region46: #{set_np_forward.5} parent=0 // pred_check
    _
  $region47: #{set_np_forward.5} parent=0 // pred_check_branch
    %55 = sbr.rel (0) target = $region49
  $region48: #{set_np_forward.5} parent=0 // pred_region
    _
  $region49: #{set_np_forward.5} parent=0 // pred_fallthru
    _
  // Predicated region
  $region50: #{set_np_forward.5} parent=0 // pred_check
    _
  $region51: #{set_np_forward.5} parent=0 // pred_check_branch
    %57 = sbr.rel (0) target = $region53
  $region52: #{set_np_forward.5} parent=0 // pred_region
    _
  $region53: #{set_np_forward.5} parent=0 // pred_fallthru
    _
  // Predicated region
  $region54: #{set_np_forward.5} parent=0 // pred_check
    _
  $region55: #{set_np_forward.5} parent=0 // pred_check_branch
    %59 = sbr.rel (0) target = $region57
  $region56: #{set_np_forward.5} parent=0 // pred_region
    _
  $region57: #{set_np_forward.5} parent=0 // pred_fallthru
    _
  // Predicated region
  $region58: #{set_np_forward.5} parent=0 // pred_check
    _
  $region59: #{set_np_forward.5} parent=0 // pred_check_branch
    %61 = sbr.rel (0) target = $region61
  $region60: #{set_np_forward.5} parent=0 // pred_region
    _
  $region61: #{set_np_forward.5} parent=0 // pred_fallthru
    _
  // Predicated region
  $region62: #{set_np_forward.5} parent=0 // pred_check
    _
  $region63: #{set_np_forward.5} parent=0 // pred_check_branch
    %63 = sbr.rel (0) target = $region65
  $region64: #{set_np_forward.5} parent=0 // pred_region
    _
  $region65: #{set_np_forward.5} parent=0 // pred_fallthru
    _
  // Predicated region
  $region66: #{set_np_forward.5} parent=0 // pred_check
    _
  $region67: #{set_np_forward.5} parent=0 // pred_check_branch
    %65 = sbr.rel (0) target = $region69
  $region68: #{set_np_forward.5} parent=0 // pred_region
    _
  $region69: #{set_np_forward.5} parent=0 // pred_fallthru
    _
  // Predicated region
  $region70: #{set_np_forward.5} parent=0 // pred_check
    _
  $region71: #{set_np_forward.5} parent=0 // pred_check_branch
    %67 = sbr.rel (0) target = $region73
  $region72: #{set_np_forward.5} parent=0 // pred_region
    _
  $region73: #{set_np_forward.5} parent=0 // pred_fallthru
    _
  // Predicated region
  $region74: #{set_np_forward.5} parent=0 // pred_check
    _
  $region75: #{set_np_forward.5} parent=0 // pred_check_branch
    %69 = sbr.rel (0) target = $region77
  $region76: #{set_np_forward.5} parent=0 // pred_region
    _
  $region77: #{set_np_forward.5} parent=0 // pred_fallthru
    _
  // Predicated region
  $region78: #{set_np_forward.5} parent=0 // pred_check
    _
  $region79: #{set_np_forward.5} parent=0 // pred_check_branch
    %71 = sbr.rel (0) target = $region81
  $region80: #{set_np_forward.5} parent=0 // pred_region
    _
  $region81: #{set_np_forward.5} parent=0 // pred_fallthru
    _
  // Predicated region
  $region82: #{set_np_forward.5} parent=0 // pred_check
    _
  $region83: #{set_np_forward.5} parent=0 // pred_check_branch
    %73 = sbr.rel (0) target = $region85
  $region84: #{set_np_forward.5} parent=0 // pred_region
    _
  $region85: #{set_np_forward.5} parent=0 // pred_fallthru
    _
  // Predicated region
  $region86: #{set_np_forward.5} parent=0 // pred_check
    _
  $region87: #{set_np_forward.5} parent=0 // pred_check_branch
    %75 = sbr.rel (0) target = $region89
  $region88: #{set_np_forward.5} parent=0 // pred_region
    _
  $region89: #{set_np_forward.5} parent=0 // pred_fallthru
    _
  // Predicated region
  $region90: #{set_np_forward.5} parent=0 // pred_check
    _
  $region91: #{set_np_forward.5} parent=0 // pred_check_branch
    %77 = sbr.rel (0) target = $region93
  $region92: #{set_np_forward.5} parent=0 // pred_region
    _
  $region93: #{set_np_forward.5} parent=0 // pred_fallthru
    _
  // Predicated region
  $region94: #{set_np_forward.5} parent=0 // pred_check
    _
  $region95: #{set_np_forward.5} parent=0 // pred_check_branch
    %79 = sbr.rel (0) target = $region97
  $region96: #{set_np_forward.5} parent=0 // pred_region
    _
  $region97: #{set_np_forward.5} parent=0 // pred_fallthru
    _
  // Predicated region
  $region98: #{set_np_forward.5} parent=0 // pred_check
    _
  $region99: #{set_np_forward.5} parent=0 // pred_check_branch
    %81 = sbr.rel (0) target = $region101
  $region100: #{set_np_forward.5} parent=0 // pred_region
    _
  $region101: #{set_np_forward.5} parent=0 // pred_fallthru
    _
  // Predicated region
  $region102: #{set_np_forward.5} parent=0 // pred_check
    _
  $region103: #{set_np_forward.5} parent=0 // pred_check_branch
    %83 = sbr.rel (0) target = $region105
  $region104: #{set_np_forward.5} parent=0 // pred_region
    _
  $region105: #{set_np_forward.5} parent=0 // pred_fallthru
    _
  // Predicated region
  $region106: #{set_np_forward.5} parent=0 // pred_check
    _
  $region107: #{set_np_forward.5} parent=0 // pred_check_branch
    %85 = sbr.rel (0) target = $region109
  $region108: #{set_np_forward.5} parent=0 // pred_region
    _
  $region109: #{set_np_forward.5} parent=0 // pred_fallthru
    _
  %v87 = vld [vmem:[%s0] sm:$0xf]
  %v88 = vld [vmem:[%s0 + $0x4] sm:$0xf]
  %v89 = vld [vmem:[%s1] sm:$0xf]
  %v90 = vld [vmem:[%s1 + $0x4] sm:$0xf]
  %v91 = vld [vmem:[%s2] sm:$0xf]
  %v92 = vld [vmem:[%s2 + $0x4] sm:$0xf]
  %v93 = vld [vmem:[%s7] sm:$0xf]
  %v94 = vld [vmem:[%s7 + $0x4] sm:$0xf]
  %v95 = vld [vmem:[%s7 + $0x8] sm:$0xf]
  %v96 = vld [vmem:[%s7 + $0xc] sm:$0xf]
  %v97 = vld [vmem:[%s8] sm:$0xf]
  %v100 = vunpack.c.l.b16 %v89
  %v101 = vunpack.c.l.b16 %v90
  %v102 = vpack.c.b16 %v101, %v100
  %vm103 = vcmask 64512
  %v105 = vsel %vm103, %v102, 0
  %vm107 = vcmask 1043456
  %v109 = vsel %vm107, %v97, 0
  %111 = vmatprep.subr.bf16.mxu0 0
  %112 = vmatpush1.bf16.msra.mxu0 %v109
  %113 = vmatprep.subr.bf16.mxu0 0
  %114 = vmatpush1.bf16.msra.mxu0 0
  %115 = vmatprep.subr.bf16.mxu0 0
  %116 = vmatpush1.bf16.msra.mxu0 0
  %117 = vmatprep.subr.bf16.mxu0 0
  %118 = vmatpush1.bf16.msra.mxu0 0
  %119 = vmatprep.subr.bf16.mxu0 0
  %120 = vmatpush1.bf16.msra.mxu0 0
  %121 = vmatprep.subr.bf16.mxu0 0
  %122 = vmatpush1.bf16.msra.mxu0 0
  %123 = vmatprep.subr.bf16.mxu0 0
  %124 = vmatpush1.bf16.msra.mxu0 0
  %125 = vmatprep.subr.bf16.mxu0 0
  %126 = vmatpush1.bf16.msra.mxu0 0
  %127 = vmatprep.subr.bf16.mxu0 0
  %128 = vmatpush1.bf16.msra.mxu0 0
  %129 = vmatprep.subr.bf16.mxu0 0
  %130 = vmatpush1.bf16.msra.mxu0 0
  %131 = vmatprep.subr.bf16.mxu0 0
  %132 = vmatpush1.bf16.msra.mxu0 0
  %133 = vmatprep.subr.bf16.mxu0 0
  %134 = vmatpush1.bf16.msra.mxu0 0
  %135 = vmatprep.subr.bf16.mxu0 0
  %136 = vmatpush1.bf16.msra.mxu0 0
  %137 = vmatprep.subr.bf16.mxu0 0
  %138 = vmatpush1.bf16.msra.mxu0 0
  %139 = vmatprep.subr.bf16.mxu0 0
  %140 = vmatpush1.bf16.msra.mxu0 0
  %141 = vmatprep.subr.bf16.mxu0 0
  %142 = vmatpush1.bf16.msra.mxu0 0
  %143 = vmatprep.mubr.bf16.mxu0 0
  %144 = vmatmul.mubr.bf16.gmra.mrb[0].mxu0 %v105
  %v145 = vpop.f32.mrb[0].mxu0
  %v146 = vadd.f32 0.0, %v145
  %v147 = vpop.f32.mrb[0].mxu0
  %v148 = vpop.f32.mrb[0].mxu0
  %v149 = vadd.f32 0.0, %v148
  %v150 = vpop.f32.mrb[0].mxu0
  %151 = vdwg.mxu0
  %v154 = vunpack.c.l.b16 %v87
  %v155 = vunpack.c.l.b16 %v88
  %v156 = vpack.c.b16 %v155, %v154
  %v161 = vunpack.c.l.b16 %v93
  %v162 = vunpack.c.l.b16 %v94
  %v163 = vunpack.c.l.b16 %v95
  %v164 = vunpack.c.l.b16 %v96
  %v165 = vpack.c.b16 %v162, %v161
  %v166 = vpack.c.b16 %v164, %v163
  %vm169 = vcmask 261120
  %v171 = vsel %vm169, %v156, 0
  %173 = vmatprep.subr.bf16.mxu0 0
  %174 = vmatpush1.bf16.msra.mxu0 %v165
  %175 = vmatprep.subr.bf16.mxu0 0
  %176 = vmatpush1.bf16.msra.mxu0 %v166
  %177 = vmatprep.subr.bf16.mxu0 0
  %178 = vmatpush1.bf16.msra.mxu0 0
  %179 = vmatprep.subr.bf16.mxu0 0
  %180 = vmatpush1.bf16.msra.mxu0 0
  %181 = vmatprep.subr.bf16.mxu0 0
  %182 = vmatpush1.bf16.msra.mxu0 0
  %183 = vmatprep.subr.bf16.mxu0 0
  %184 = vmatpush1.bf16.msra.mxu0 0
  %185 = vmatprep.subr.bf16.mxu0 0
  %186 = vmatpush1.bf16.msra.mxu0 0
  %187 = vmatprep.subr.bf16.mxu0 0
  %188 = vmatpush1.bf16.msra.mxu0 0
  %189 = vmatprep.subr.bf16.mxu0 0
  %190 = vmatpush1.bf16.msra.mxu0 0
  %191 = vmatprep.subr.bf16.mxu0 0
  %192 = vmatpush1.bf16.msra.mxu0 0
  %193 = vmatprep.subr.bf16.mxu0 0
  %194 = vmatpush1.bf16.msra.mxu0 0
  %195 = vmatprep.subr.bf16.mxu0 0
  %196 = vmatpush1.bf16.msra.mxu0 0
  %197 = vmatprep.subr.bf16.mxu0 0
  %198 = vmatpush1.bf16.msra.mxu0 0
  %199 = vmatprep.subr.bf16.mxu0 0
  %200 = vmatpush1.bf16.msra.mxu0 0
  %201 = vmatprep.subr.bf16.mxu0 0
  %202 = vmatpush1.bf16.msra.mxu0 0
  %203 = vmatprep.subr.bf16.mxu0 0
  %204 = vmatpush1.bf16.msra.mxu0 0
  %205 = vmatprep.mubr.bf16.mxu0 0
  %206 = vmatmul.mubr.bf16.gmra.mrb[0].mxu0 %v171
  %v207 = vpop.f32.mrb[0].mxu0
  %v208 = vadd.f32 %v146, %v207
  %v209 = vpop.f32.mrb[0].mxu0
  %v210 = vpop.f32.mrb[0].mxu0
  %v211 = vadd.f32 %v149, %v210
  %v212 = vpop.f32.mrb[0].mxu0
  %213 = vdwg.mxu0
  %v214 = vld [vmem:[%s9] sm:$0x1]
  %v216 = vlaneseq
  %v217 = vshrl.u32 %v216, 7
  %v218 = vsub.s32 0, %v217
  %v219 = vrot.slane %v214, %v218
  %v221 = vadd.f32 %v208, %v219
  %v222 = vadd.f32 %v211, %v219
  %v223 = vmax.f32 %v221, 0.0
  %v224 = vmax.f32 %v222, 0.0
  %v225 = vpack.c.bf16 %v224, %v223
  %v226 = vld [vmem:[%s10] sm:$0xf]
  %v227 = vld [vmem:[%s10 + $0x4] sm:$0xf]
  %v228 = vld [vmem:[%s10 + $0x8] sm:$0xf]
  %v229 = vld [vmem:[%s10 + $0xc] sm:$0xf]
  %v230 = vld [vmem:[%s11] sm:$0x1]
  %v232 = vlaneseq
  %v233 = vshrl.u32 %v232, 7
  %v234 = vsub.s32 0, %v233
  %v235 = vrot.slane %v230, %v234
  %v241 = vunpack.c.l.b16 %v226
  %v242 = vunpack.c.l.b16 %v227
  %v243 = vunpack.c.l.b16 %v228
  %v244 = vunpack.c.l.b16 %v229
  %v245 = vpack.c.b16 %v242, %v241
  %v246 = vpack.c.b16 %v244, %v243
  %v250 = vsel %vm169, %v225, 0
  %252 = vmatprep.subr.bf16.mxu0 0
  %253 = vmatpush1.bf16.msra.mxu0 %v245
  %254 = vmatprep.subr.bf16.mxu0 0
  %255 = vmatpush1.bf16.msra.mxu0 %v246
  %256 = vmatprep.subr.bf16.mxu0 0
  %257 = vmatpush1.bf16.msra.mxu0 0
  %258 = vmatprep.subr.bf16.mxu0 0
  %259 = vmatpush1.bf16.msra.mxu0 0
  %260 = vmatprep.subr.bf16.mxu0 0
  %261 = vmatpush1.bf16.msra.mxu0 0
  %262 = vmatprep.subr.bf16.mxu0 0
  %263 = vmatpush1.bf16.msra.mxu0 0
  %264 = vmatprep.subr.bf16.mxu0 0
  %265 = vmatpush1.bf16.msra.mxu0 0
  %266 = vmatprep.subr.bf16.mxu0 0
  %267 = vmatpush1.bf16.msra.mxu0 0
  %268 = vmatprep.subr.bf16.mxu0 0
  %269 = vmatpush1.bf16.msra.mxu0 0
  %270 = vmatprep.subr.bf16.mxu0 0
  %271 = vmatpush1.bf16.msra.mxu0 0
  %272 = vmatprep.subr.bf16.mxu0 0
  %273 = vmatpush1.bf16.msra.mxu0 0
  %274 = vmatprep.subr.bf16.mxu0 0
  %275 = vmatpush1.bf16.msra.mxu0 0
  %276 = vmatprep.subr.bf16.mxu0 0
  %277 = vmatpush1.bf16.msra.mxu0 0
  %278 = vmatprep.subr.bf16.mxu0 0
  %279 = vmatpush1.bf16.msra.mxu0 0
  %280 = vmatprep.subr.bf16.mxu0 0
  %281 = vmatpush1.bf16.msra.mxu0 0
  %282 = vmatprep.subr.bf16.mxu0 0
  %283 = vmatpush1.bf16.msra.mxu0 0
  %284 = vmatprep.mubr.bf16.mxu0 0
  %285 = vmatmul.mubr.bf16.gmra.mrb[0].mxu0 %v250
  %v286 = vpop.f32.mrb[0].mxu0
  %v287 = vadd.f32 %v235, %v286
  %v288 = vpop.f32.mrb[0].mxu0
  %v289 = vpop.f32.mrb[0].mxu0
  %v290 = vadd.f32 %v235, %v289
  %v291 = vpop.f32.mrb[0].mxu0
  %292 = vdwg.mxu0
  %v293 = vmax.f32 %v287, 0.0
  %v294 = vmax.f32 %v290, 0.0
  %v295 = vld [vmem:[%s12] sm:$0xf]
  %v296 = vld [vmem:[%s12 + $0x4] sm:$0xf]
  %v297 = vld [vmem:[%s12 + $0x8] sm:$0xf]
  %v298 = vld [vmem:[%s12 + $0xc] sm:$0xf]
  %v299 = vld [vmem:[%s13] sm:$0x1]
  %v301 = vlaneseq
  %v302 = vshrl.u32 %v301, 7
  %v303 = vsub.s32 0, %v302
  %v304 = vrot.slane %v299, %v303
  %v308 = vunpack.c.l.b16 %v91
  %v309 = vunpack.c.l.b16 %v92
  %v310 = vpack.c.b16 %v309, %v308
  %v315 = vunpack.c.l.b16 %v295
  %v316 = vunpack.c.l.b16 %v296
  %v317 = vunpack.c.l.b16 %v297
  %v318 = vunpack.c.l.b16 %v298
  %v319 = vpack.c.b16 %v316, %v315
  %v320 = vpack.c.b16 %v318, %v317
  %v324 = vsel %vm169, %v310, 0
  %326 = vmatprep.subr.bf16.mxu0 0
  %327 = vmatpush1.bf16.msra.mxu0 %v319
  %328 = vmatprep.subr.bf16.mxu0 0
  %329 = vmatpush1.bf16.msra.mxu0 %v320
  %330 = vmatprep.subr.bf16.mxu0 0
  %331 = vmatpush1.bf16.msra.mxu0 0
  %332 = vmatprep.subr.bf16.mxu0 0
  %333 = vmatpush1.bf16.msra.mxu0 0
  %334 = vmatprep.subr.bf16.mxu0 0
  %335 = vmatpush1.bf16.msra.mxu0 0
  %336 = vmatprep.subr.bf16.mxu0 0
  %337 = vmatpush1.bf16.msra.mxu0 0
  %338 = vmatprep.subr.bf16.mxu0 0
  %339 = vmatpush1.bf16.msra.mxu0 0
  %340 = vmatprep.subr.bf16.mxu0 0
  %341 = vmatpush1.bf16.msra.mxu0 0
  %342 = vmatprep.subr.bf16.mxu0 0
  %343 = vmatpush1.bf16.msra.mxu0 0
  %344 = vmatprep.subr.bf16.mxu0 0
  %345 = vmatpush1.bf16.msra.mxu0 0
  %346 = vmatprep.subr.bf16.mxu0 0
  %347 = vmatpush1.bf16.msra.mxu0 0
  %348 = vmatprep.subr.bf16.mxu0 0
  %349 = vmatpush1.bf16.msra.mxu0 0
  %350 = vmatprep.subr.bf16.mxu0 0
  %351 = vmatpush1.bf16.msra.mxu0 0
  %352 = vmatprep.subr.bf16.mxu0 0
  %353 = vmatpush1.bf16.msra.mxu0 0
  %354 = vmatprep.subr.bf16.mxu0 0
  %355 = vmatpush1.bf16.msra.mxu0 0
  %356 = vmatprep.subr.bf16.mxu0 0
  %357 = vmatpush1.bf16.msra.mxu0 0
  %358 = vmatprep.mubr.bf16.mxu0 0
  %359 = vmatmul.mubr.bf16.gmra.mrb[0].mxu0 %v324
  %v360 = vpop.f32.mrb[0].mxu0
  %v361 = vadd.f32 %v304, %v360
  %v362 = vpop.f32.mrb[0].mxu0
  %v363 = vpop.f32.mrb[0].mxu0
  %v364 = vadd.f32 %v304, %v363
  %v365 = vpop.f32.mrb[0].mxu0
  %366 = vdwg.mxu0
  %v367 = vld [vmem:[%s14] sm:$0xf]
  %v368 = vld [vmem:[%s14 + $0x4] sm:$0xf]
  %v369 = vld [vmem:[%s14 + $0x8] sm:$0xf]
  %v370 = vld [vmem:[%s14 + $0xc] sm:$0xf]
  %v371 = vld [vmem:[%s15] sm:$0x1]
  %v373 = vlaneseq
  %v374 = vshrl.u32 %v373, 7
  %v375 = vsub.s32 0, %v374
  %v376 = vrot.slane %v371, %v375
  %v382 = vunpack.c.l.b16 %v367
  %v383 = vunpack.c.l.b16 %v368
  %v384 = vunpack.c.l.b16 %v369
  %v385 = vunpack.c.l.b16 %v370
  %v386 = vpack.c.b16 %v383, %v382
  %v387 = vpack.c.b16 %v385, %v384
  %390 = vmatprep.subr.bf16.mxu0 0
  %391 = vmatpush1.bf16.msra.mxu0 %v386
  %392 = vmatprep.subr.bf16.mxu0 0
  %393 = vmatpush1.bf16.msra.mxu0 %v387
  %394 = vmatprep.subr.bf16.mxu0 0
  %395 = vmatpush1.bf16.msra.mxu0 0
  %396 = vmatprep.subr.bf16.mxu0 0
  %397 = vmatpush1.bf16.msra.mxu0 0
  %398 = vmatprep.subr.bf16.mxu0 0
  %399 = vmatpush1.bf16.msra.mxu0 0
  %400 = vmatprep.subr.bf16.mxu0 0
  %401 = vmatpush1.bf16.msra.mxu0 0
  %402 = vmatprep.subr.bf16.mxu0 0
  %403 = vmatpush1.bf16.msra.mxu0 0
  %404 = vmatprep.subr.bf16.mxu0 0
  %405 = vmatpush1.bf16.msra.mxu0 0
  %406 = vmatprep.subr.bf16.mxu0 0
  %407 = vmatpush1.bf16.msra.mxu0 0
  %408 = vmatprep.subr.bf16.mxu0 0
  %409 = vmatpush1.bf16.msra.mxu0 0
  %410 = vmatprep.subr.bf16.mxu0 0
  %411 = vmatpush1.bf16.msra.mxu0 0
  %412 = vmatprep.subr.bf16.mxu0 0
  %413 = vmatpush1.bf16.msra.mxu0 0
  %414 = vmatprep.subr.bf16.mxu0 0
  %415 = vmatpush1.bf16.msra.mxu0 0
  %416 = vmatprep.subr.bf16.mxu0 0
  %417 = vmatpush1.bf16.msra.mxu0 0
  %418 = vmatprep.subr.bf16.mxu0 0
  %419 = vmatpush1.bf16.msra.mxu0 0
  %420 = vmatprep.subr.bf16.mxu0 0
  %421 = vmatpush1.bf16.msra.mxu0 0
  %422 = vmatprep.mubr.bf16.mxu0 0
  %423 = vmatmul.mubr.bf16.gmra.mrb[0].mxu0 %v171
  %v424 = vpop.f32.mrb[0].mxu0
  %v425 = vadd.f32 %v376, %v424
  %v426 = vpop.f32.mrb[0].mxu0
  %v427 = vpop.f32.mrb[0].mxu0
  %v428 = vadd.f32 %v376, %v427
  %v429 = vpop.f32.mrb[0].mxu0
  %430 = vdwg.mxu0
  %v431 = vpack.c.bf16 %v428, %v425
  %v432 = vpack.c.bf16 %v294, %v293
  %v433 = vld [vmem:[%s16] sm:$0xf]
  %v434 = vld [vmem:[%s16 + $0x4] sm:$0xf]
  %v435 = vld [vmem:[%s16 + $0x8] sm:$0xf]
  %v436 = vld [vmem:[%s16 + $0xc] sm:$0xf]
  %v437 = vld [vmem:[%s17] sm:$0x1]
  %v439 = vlaneseq
  %v440 = vshrl.u32 %v439, 7
  %v441 = vsub.s32 0, %v440
  %v442 = vrot.slane %v437, %v441
  %v448 = vunpack.c.l.b16 %v433
  %v449 = vunpack.c.l.b16 %v434
  %v450 = vunpack.c.l.b16 %v435
  %v451 = vunpack.c.l.b16 %v436
  %v452 = vpack.c.b16 %v449, %v448
  %v453 = vpack.c.b16 %v451, %v450
  %v457 = vsel %vm169, %v432, 0
  %459 = vmatprep.subr.bf16.mxu0 0
  %460 = vmatpush1.bf16.msra.mxu0 %v452
  %461 = vmatprep.subr.bf16.mxu0 0
  %462 = vmatpush1.bf16.msra.mxu0 %v453
  %463 = vmatprep.subr.bf16.mxu0 0
  %464 = vmatpush1.bf16.msra.mxu0 0
  %465 = vmatprep.subr.bf16.mxu0 0
  %466 = vmatpush1.bf16.msra.mxu0 0
  %467 = vmatprep.subr.bf16.mxu0 0
  %468 = vmatpush1.bf16.msra.mxu0 0
  %469 = vmatprep.subr.bf16.mxu0 0
  %470 = vmatpush1.bf16.msra.mxu0 0
  %471 = vmatprep.subr.bf16.mxu0 0
  %472 = vmatpush1.bf16.msra.mxu0 0
  %473 = vmatprep.subr.bf16.mxu0 0
  %474 = vmatpush1.bf16.msra.mxu0 0
  %475 = vmatprep.subr.bf16.mxu0 0
  %476 = vmatpush1.bf16.msra.mxu0 0
  %477 = vmatprep.subr.bf16.mxu0 0
  %478 = vmatpush1.bf16.msra.mxu0 0
  %479 = vmatprep.subr.bf16.mxu0 0
  %480 = vmatpush1.bf16.msra.mxu0 0
  %481 = vmatprep.subr.bf16.mxu0 0
  %482 = vmatpush1.bf16.msra.mxu0 0
  %483 = vmatprep.subr.bf16.mxu0 0
  %484 = vmatpush1.bf16.msra.mxu0 0
  %485 = vmatprep.subr.bf16.mxu0 0
  %486 = vmatpush1.bf16.msra.mxu0 0
  %487 = vmatprep.subr.bf16.mxu0 0
  %488 = vmatpush1.bf16.msra.mxu0 0
  %489 = vmatprep.subr.bf16.mxu0 0
  %490 = vmatpush1.bf16.msra.mxu0 0
  %491 = vmatprep.mubr.bf16.mxu0 0
  %492 = vmatmul.mubr.bf16.gmra.mrb[0].mxu0 %v457
  %v493 = vpop.f32.mrb[0].mxu0
  %v494 = vadd.f32 %v442, %v493
  %v495 = vpop.f32.mrb[0].mxu0
  %v496 = vpop.f32.mrb[0].mxu0
  %v497 = vadd.f32 %v442, %v496
  %v498 = vpop.f32.mrb[0].mxu0
  %499 = vdwg.mxu0
  %v500 = vpack.c.bf16 %v497, %v494
  %v501 = vld [vmem:[%s5] sm:$0xff]
  %v502 = vld [vmem:[%s5 + $0x8] sm:$0xff]
  %v503 = vld [vmem:[%s4] sm:$0x1]
  %v505 = vlaneseq
  %v506 = vshrl.u32 %v505, 7
  %v507 = vsub.s32 0, %v506
  %v508 = vrot.slane %v503, %v507
  %v510 = vmul.f32 %v361, %v508
  %v511 = vmul.f32 %v364, %v508
  %v512 = vpack.c.bf16 %v511, %v510
  %v514 = vsel %vm169, %v512, 0
  %v517 = vsel %vm169, %v431, 0
  %519 = vmatprep.subr.bf16.mxu0 0
  %520 = vmatpush1.bf16.xpose.msra.mxu0 %v517
  %521 = vmatprep.subr.bf16.mxu0 0
  %522 = vmatpush1.bf16.xpose.msra.mxu0 0
  %523 = vmatprep.subr.bf16.mxu0 0
  %524 = vmatpush1.bf16.xpose.msra.mxu0 0
  %525 = vmatprep.subr.bf16.mxu0 0
  %526 = vmatpush1.bf16.xpose.msra.mxu0 0
  %527 = vmatprep.subr.bf16.mxu0 0
  %528 = vmatpush1.bf16.xpose.msra.mxu0 0
  %529 = vmatprep.subr.bf16.mxu0 0
  %530 = vmatpush1.bf16.xpose.msra.mxu0 0
  %531 = vmatprep.subr.bf16.mxu0 0
  %532 = vmatpush1.bf16.xpose.msra.mxu0 0
  %533 = vmatprep.subr.bf16.mxu0 0
  %534 = vmatpush1.bf16.xpose.msra.mxu0 0
  %535 = vmatprep.subr.bf16.mxu0 0
  %536 = vmatpush1.bf16.xpose.msra.mxu0 0
  %537 = vmatprep.subr.bf16.mxu0 0
  %538 = vmatpush1.bf16.xpose.msra.mxu0 0
  %539 = vmatprep.subr.bf16.mxu0 0
  %540 = vmatpush1.bf16.xpose.msra.mxu0 0
  %541 = vmatprep.subr.bf16.mxu0 0
  %542 = vmatpush1.bf16.xpose.msra.mxu0 0
  %543 = vmatprep.subr.bf16.mxu0 0
  %544 = vmatpush1.bf16.xpose.msra.mxu0 0
  %545 = vmatprep.subr.bf16.mxu0 0
  %546 = vmatpush1.bf16.xpose.msra.mxu0 0
  %547 = vmatprep.subr.bf16.mxu0 0
  %548 = vmatpush1.bf16.xpose.msra.mxu0 0
  %549 = vmatprep.subr.bf16.mxu0 0
  %550 = vmatpush1.bf16.xpose.msra.mxu0 0
  %551 = vmatprep.mubr.bf16.mxu0 0
  %552 = vmatmul.mubr.bf16.gmra.mrb[0].mxu0 %v514
  %v553 = vpop.f32.mrb[0].mxu0
  %v554 = vadd.f32 0.0, %v553
  %v555 = vpop.f32.mrb[0].mxu0
  %v556 = vpop.f32.mrb[0].mxu0
  %v557 = vadd.f32 0.0, %v556
  %v558 = vpop.f32.mrb[0].mxu0
  %559 = vdwg.mxu0
  %v560 = vmul.f32 %v554, 0.35355338
  %v561 = vmul.f32 %v557, 0.35355338
  %v562 = vadd.f32 %v560, %v501
  %v563 = vadd.f32 %v561, %v502
  %vm564 = vcmask 130048
  %v565 = vsel %vm564, %v562, -inf
  %566 = vmax.xlane.f32.xlu0 %v565
  %v567 = vpop.xlane.xlu0 %566
  %v568 = vsel %vm564, %v563, -inf
  %569 = vmax.xlane.f32.xlu0 %v568
  %v570 = vpop.xlane.xlu0 %569
  %v571 = vsub.f32 %v562, %v567
  %v572 = vsub.f32 %v563, %v570
  %v573 = vmul.f32 %v571, 1.442695
  %v574 = vpow.pop %v573
  %v575 = vmul.f32 %v572, 1.442695
  %v576 = vpow.pop %v575
  %v577 = vsel %vm564, %v574, 0.0
  %578 = vadd.xlane.f32.xlu0 %v577
  %v579 = vpop.xlane.xlu0 %578
  %v580 = vsel %vm564, %v576, 0.0
  %581 = vadd.xlane.f32.xlu0 %v580
  %v582 = vpop.xlane.xlu0 %581
  %v583 = vrcp.pop %v579
  %v584 = vrcp.pop %v582
  %v585 = vmul.f32 %v574, %v583
  %v586 = vmul.f32 %v576, %v584
  %v587 = vpack.c.bf16 %v586, %v585
  %v589 = vsel %vm564, %v587, 0
  %591 = vmatprep.subr.bf16.mxu0 0
  %592 = vmatpush1.bf16.msra.mxu0 %v500
  %593 = vmatprep.subr.bf16.mxu0 0
  %594 = vmatpush1.bf16.msra.mxu0 0
  %595 = vmatprep.subr.bf16.mxu0 0
  %596 = vmatpush1.bf16.msra.mxu0 0
  %597 = vmatprep.subr.bf16.mxu0 0
  %598 = vmatpush1.bf16.msra.mxu0 0
  %599 = vmatprep.subr.bf16.mxu0 0
  %600 = vmatpush1.bf16.msra.mxu0 0
  %601 = vmatprep.subr.bf16.mxu0 0
  %602 = vmatpush1.bf16.msra.mxu0 0
  %603 = vmatprep.subr.bf16.mxu0 0
  %604 = vmatpush1.bf16.msra.mxu0 0
  %605 = vmatprep.subr.bf16.mxu0 0
  %606 = vmatpush1.bf16.msra.mxu0 0
  %607 = vmatprep.subr.bf16.mxu0 0
  %608 = vmatpush1.bf16.msra.mxu0 0
  %609 = vmatprep.subr.bf16.mxu0 0
  %610 = vmatpush1.bf16.msra.mxu0 0
  %611 = vmatprep.subr.bf16.mxu0 0
  %612 = vmatpush1.bf16.msra.mxu0 0
  %613 = vmatprep.subr.bf16.mxu0 0
  %614 = vmatpush1.bf16.msra.mxu0 0
  %615 = vmatprep.subr.bf16.mxu0 0
  %616 = vmatpush1.bf16.msra.mxu0 0
  %617 = vmatprep.subr.bf16.mxu0 0
  %618 = vmatpush1.bf16.msra.mxu0 0
  %619 = vmatprep.subr.bf16.mxu0 0
  %620 = vmatpush1.bf16.msra.mxu0 0
  %621 = vmatprep.subr.bf16.mxu0 0
  %622 = vmatpush1.bf16.msra.mxu0 0
  %623 = vmatprep.mubr.bf16.mxu0 0
  %624 = vmatmul.mubr.bf16.gmra.mrb[0].mxu0 %v589
  %v625 = vpop.f32.mrb[0].mxu0
  %v626 = vadd.f32 0.0, %v625
  %v627 = vpop.f32.mrb[0].mxu0
  %v628 = vpop.f32.mrb[0].mxu0
  %v629 = vadd.f32 0.0, %v628
  %v630 = vpop.f32.mrb[0].mxu0
  %631 = vdwg.mxu0
  %v632 = vmul.f32 %v626, %v508
  %v633 = vmul.f32 %v629, %v508
  %v634 = vadd.f32 %v632, 0.0
  %v635 = vadd.f32 %v633, 0.0
  %s636 = scalar_lea.vmem %s4, 1
  %v637 = vld [vmem:[%s636] sm:$0x1]
  %v639 = vlaneseq
  %v640 = vshrl.u32 %v639, 7
  %v641 = vsub.s32 0, %v640
  %v642 = vrot.slane %v637, %v641
  %v644 = vmul.f32 %v361, %v642
  %v645 = vmul.f32 %v364, %v642
  %v646 = vpack.c.bf16 %v645, %v644
  %v648 = vsel %vm169, %v646, 0
  %650 = vmatprep.subr.bf16.mxu0 0
  %651 = vmatpush1.bf16.xpose.msra.mxu0 %v517
  %652 = vmatprep.subr.bf16.mxu0 0
  %653 = vmatpush1.bf16.xpose.msra.mxu0 0
  %654 = vmatprep.subr.bf16.mxu0 0
  %655 = vmatpush1.bf16.xpose.msra.mxu0 0
  %656 = vmatprep.subr.bf16.mxu0 0
  %657 = vmatpush1.bf16.xpose.msra.mxu0 0
  %658 = vmatprep.subr.bf16.mxu0 0
  %659 = vmatpush1.bf16.xpose.msra.mxu0 0
  %660 = vmatprep.subr.bf16.mxu0 0
  %661 = vmatpush1.bf16.xpose.msra.mxu0 0
  %662 = vmatprep.subr.bf16.mxu0 0
  %663 = vmatpush1.bf16.xpose.msra.mxu0 0
  %664 = vmatprep.subr.bf16.mxu0 0
  %665 = vmatpush1.bf16.xpose.msra.mxu0 0
  %666 = vmatprep.subr.bf16.mxu0 0
  %667 = vmatpush1.bf16.xpose.msra.mxu0 0
  %668 = vmatprep.subr.bf16.mxu0 0
  %669 = vmatpush1.bf16.xpose.msra.mxu0 0
  %670 = vmatprep.subr.bf16.mxu0 0
  %671 = vmatpush1.bf16.xpose.msra.mxu0 0
  %672 = vmatprep.subr.bf16.mxu0 0
  %673 = vmatpush1.bf16.xpose.msra.mxu0 0
  %674 = vmatprep.subr.bf16.mxu0 0
  %675 = vmatpush1.bf16.xpose.msra.mxu0 0
  %676 = vmatprep.subr.bf16.mxu0 0
  %677 = vmatpush1.bf16.xpose.msra.mxu0 0
  %678 = vmatprep.subr.bf16.mxu0 0
  %679 = vmatpush1.bf16.xpose.msra.mxu0 0
  %680 = vmatprep.subr.bf16.mxu0 0
  %681 = vmatpush1.bf16.xpose.msra.mxu0 0
  %682 = vmatprep.mubr.bf16.mxu0 0
  %683 = vmatmul.mubr.bf16.gmra.mrb[0].mxu0 %v648
  %v684 = vpop.f32.mrb[0].mxu0
  %v685 = vadd.f32 0.0, %v684
  %v686 = vpop.f32.mrb[0].mxu0
  %v687 = vpop.f32.mrb[0].mxu0
  %v688 = vadd.f32 0.0, %v687
  %v689 = vpop.f32.mrb[0].mxu0
  %690 = vdwg.mxu0
  %v691 = vmul.f32 %v685, 0.35355338
  %v692 = vmul.f32 %v688, 0.35355338
  %v693 = vadd.f32 %v691, %v501
  %v694 = vadd.f32 %v692, %v502
  %v695 = vsel %vm564, %v693, -inf
  %696 = vmax.xlane.f32.xlu0 %v695
  %v697 = vpop.xlane.xlu0 %696
  %v698 = vsel %vm564, %v694, -inf
  %699 = vmax.xlane.f32.xlu0 %v698
  %v700 = vpop.xlane.xlu0 %699
  %v701 = vsub.f32 %v693, %v697
  %v702 = vsub.f32 %v694, %v700
  %v703 = vmul.f32 %v701, 1.442695
  %v704 = vpow.pop %v703
  %v705 = vmul.f32 %v702, 1.442695
  %v706 = vpow.pop %v705
  %v707 = vsel %vm564, %v704, 0.0
  %708 = vadd.xlane.f32.xlu0 %v707
  %v709 = vpop.xlane.xlu0 %708
  %v710 = vsel %vm564, %v706, 0.0
  %711 = vadd.xlane.f32.xlu0 %v710
  %v712 = vpop.xlane.xlu0 %711
  %v713 = vrcp.pop %v709
  %v714 = vrcp.pop %v712
  %v715 = vmul.f32 %v704, %v713
  %v716 = vmul.f32 %v706, %v714
  %v717 = vpack.c.bf16 %v716, %v715
  %v719 = vsel %vm564, %v717, 0
  %721 = vmatprep.subr.bf16.mxu0 0
  %722 = vmatpush1.bf16.msra.mxu0 %v500
  %723 = vmatprep.subr.bf16.mxu0 0
  %724 = vmatpush1.bf16.msra.mxu0 0
  %725 = vmatprep.subr.bf16.mxu0 0
  %726 = vmatpush1.bf16.msra.mxu0 0
  %727 = vmatprep.subr.bf16.mxu0 0
  %728 = vmatpush1.bf16.msra.mxu0 0
  %729 = vmatprep.subr.bf16.mxu0 0
  %730 = vmatpush1.bf16.msra.mxu0 0
  %731 = vmatprep.subr.bf16.mxu0 0
  %732 = vmatpush1.bf16.msra.mxu0 0
  %733 = vmatprep.subr.bf16.mxu0 0
  %734 = vmatpush1.bf16.msra.mxu0 0
  %735 = vmatprep.subr.bf16.mxu0 0
  %736 = vmatpush1.bf16.msra.mxu0 0
  %737 = vmatprep.subr.bf16.mxu0 0
  %738 = vmatpush1.bf16.msra.mxu0 0
  %739 = vmatprep.subr.bf16.mxu0 0
  %740 = vmatpush1.bf16.msra.mxu0 0
  %741 = vmatprep.subr.bf16.mxu0 0
  %742 = vmatpush1.bf16.msra.mxu0 0
  %743 = vmatprep.subr.bf16.mxu0 0
  %744 = vmatpush1.bf16.msra.mxu0 0
  %745 = vmatprep.subr.bf16.mxu0 0
  %746 = vmatpush1.bf16.msra.mxu0 0
  %747 = vmatprep.subr.bf16.mxu0 0
  %748 = vmatpush1.bf16.msra.mxu0 0
  %749 = vmatprep.subr.bf16.mxu0 0
  %750 = vmatpush1.bf16.msra.mxu0 0
  %751 = vmatprep.subr.bf16.mxu0 0
  %752 = vmatpush1.bf16.msra.mxu0 0
  %753 = vmatprep.mubr.bf16.mxu0 0
  %754 = vmatmul.mubr.bf16.gmra.mrb[0].mxu0 %v719
  %v755 = vpop.f32.mrb[0].mxu0
  %v756 = vadd.f32 0.0, %v755
  %v757 = vpop.f32.mrb[0].mxu0
  %v758 = vpop.f32.mrb[0].mxu0
  %v759 = vadd.f32 0.0, %v758
  %v760 = vpop.f32.mrb[0].mxu0
  %761 = vdwg.mxu0
  %v762 = vmul.f32 %v756, %v642
  %v763 = vmul.f32 %v759, %v642
  %v764 = vadd.f32 %v634, %v762
  %v765 = vadd.f32 %v635, %v763
  %s766 = scalar_lea.vmem %s4, 2
  %v767 = vld [vmem:[%s766] sm:$0x1]
  %v769 = vlaneseq
  %v770 = vshrl.u32 %v769, 7
  %v771 = vsub.s32 0, %v770
  %v772 = vrot.slane %v767, %v771
  %v774 = vmul.f32 %v361, %v772
  %v775 = vmul.f32 %v364, %v772
  %v776 = vpack.c.bf16 %v775, %v774
  %v778 = vsel %vm169, %v776, 0
  %780 = vmatprep.subr.bf16.mxu0 0
  %781 = vmatpush1.bf16.xpose.msra.mxu0 %v517
  %782 = vmatprep.subr.bf16.mxu0 0
  %783 = vmatpush1.bf16.xpose.msra.mxu0 0
  %784 = vmatprep.subr.bf16.mxu0 0
  %785 = vmatpush1.bf16.xpose.msra.mxu0 0
  %786 = vmatprep.subr.bf16.mxu0 0
  %787 = vmatpush1.bf16.xpose.msra.mxu0 0
  %788 = vmatprep.subr.bf16.mxu0 0
  %789 = vmatpush1.bf16.xpose.msra.mxu0 0
  %790 = vmatprep.subr.bf16.mxu0 0
  %791 = vmatpush1.bf16.xpose.msra.mxu0 0
  %792 = vmatprep.subr.bf16.mxu0 0
  %793 = vmatpush1.bf16.xpose.msra.mxu0 0
  %794 = vmatprep.subr.bf16.mxu0 0
  %795 = vmatpush1.bf16.xpose.msra.mxu0 0
  %796 = vmatprep.subr.bf16.mxu0 0
  %797 = vmatpush1.bf16.xpose.msra.mxu0 0
  %798 = vmatprep.subr.bf16.mxu0 0
  %799 = vmatpush1.bf16.xpose.msra.mxu0 0
  %800 = vmatprep.subr.bf16.mxu0 0
  %801 = vmatpush1.bf16.xpose.msra.mxu0 0
  %802 = vmatprep.subr.bf16.mxu0 0
  %803 = vmatpush1.bf16.xpose.msra.mxu0 0
  %804 = vmatprep.subr.bf16.mxu0 0
  %805 = vmatpush1.bf16.xpose.msra.mxu0 0
  %806 = vmatprep.subr.bf16.mxu0 0
  %807 = vmatpush1.bf16.xpose.msra.mxu0 0
  %808 = vmatprep.subr.bf16.mxu0 0
  %809 = vmatpush1.bf16.xpose.msra.mxu0 0
  %810 = vmatprep.subr.bf16.mxu0 0
  %811 = vmatpush1.bf16.xpose.msra.mxu0 0
  %812 = vmatprep.mubr.bf16.mxu0 0
  %813 = vmatmul.mubr.bf16.gmra.mrb[0].mxu0 %v778
  %v814 = vpop.f32.mrb[0].mxu0
  %v815 = vadd.f32 0.0, %v814
  %v816 = vpop.f32.mrb[0].mxu0
  %v817 = vpop.f32.mrb[0].mxu0
  %v818 = vadd.f32 0.0, %v817
  %v819 = vpop.f32.mrb[0].mxu0
  %820 = vdwg.mxu0
  %v821 = vmul.f32 %v815, 0.35355338
  %v822 = vmul.f32 %v818, 0.35355338
  %v823 = vadd.f32 %v821, %v501
  %v824 = vadd.f32 %v822, %v502
  %v825 = vsel %vm564, %v823, -inf
  %826 = vmax.xlane.f32.xlu0 %v825
  %v827 = vpop.xlane.xlu0 %826
  %v828 = vsel %vm564, %v824, -inf
  %829 = vmax.xlane.f32.xlu0 %v828
  %v830 = vpop.xlane.xlu0 %829
  %v831 = vsub.f32 %v823, %v827
  %v832 = vsub.f32 %v824, %v830
  %v833 = vmul.f32 %v831, 1.442695
  %v834 = vpow.pop %v833
  %v835 = vmul.f32 %v832, 1.442695
  %v836 = vpow.pop %v835
  %v837 = vsel %vm564, %v834, 0.0
  %838 = vadd.xlane.f32.xlu0 %v837
  %v839 = vpop.xlane.xlu0 %838
  %v840 = vsel %vm564, %v836, 0.0
  %841 = vadd.xlane.f32.xlu0 %v840
  %v842 = vpop.xlane.xlu0 %841
  %v843 = vrcp.pop %v839
  %v844 = vrcp.pop %v842
  %v845 = vmul.f32 %v834, %v843
  %v846 = vmul.f32 %v836, %v844
  %v847 = vpack.c.bf16 %v846, %v845
  %v849 = vsel %vm564, %v847, 0
  %851 = vmatprep.subr.bf16.mxu0 0
  %852 = vmatpush1.bf16.msra.mxu0 %v500
  %853 = vmatprep.subr.bf16.mxu0 0
  %854 = vmatpush1.bf16.msra.mxu0 0
  %855 = vmatprep.subr.bf16.mxu0 0
  %856 = vmatpush1.bf16.msra.mxu0 0
  %857 = vmatprep.subr.bf16.mxu0 0
  %858 = vmatpush1.bf16.msra.mxu0 0
  %859 = vmatprep.subr.bf16.mxu0 0
  %860 = vmatpush1.bf16.msra.mxu0 0
  %861 = vmatprep.subr.bf16.mxu0 0
  %862 = vmatpush1.bf16.msra.mxu0 0
  %863 = vmatprep.subr.bf16.mxu0 0
  %864 = vmatpush1.bf16.msra.mxu0 0
  %865 = vmatprep.subr.bf16.mxu0 0
  %866 = vmatpush1.bf16.msra.mxu0 0
  %867 = vmatprep.subr.bf16.mxu0 0
  %868 = vmatpush1.bf16.msra.mxu0 0
  %869 = vmatprep.subr.bf16.mxu0 0
  %870 = vmatpush1.bf16.msra.mxu0 0
  %871 = vmatprep.subr.bf16.mxu0 0
  %872 = vmatpush1.bf16.msra.mxu0 0
  %873 = vmatprep.subr.bf16.mxu0 0
  %874 = vmatpush1.bf16.msra.mxu0 0
  %875 = vmatprep.subr.bf16.mxu0 0
  %876 = vmatpush1.bf16.msra.mxu0 0
  %877 = vmatprep.subr.bf16.mxu0 0
  %878 = vmatpush1.bf16.msra.mxu0 0
  %879 = vmatprep.subr.bf16.mxu0 0
  %880 = vmatpush1.bf16.msra.mxu0 0
  %881 = vmatprep.subr.bf16.mxu0 0
  %882 = vmatpush1.bf16.msra.mxu0 0
  %883 = vmatprep.mubr.bf16.mxu0 0
  %884 = vmatmul.mubr.bf16.gmra.mrb[0].mxu0 %v849
  %v885 = vpop.f32.mrb[0].mxu0
  %v886 = vadd.f32 0.0, %v885
  %v887 = vpop.f32.mrb[0].mxu0
  %v888 = vpop.f32.mrb[0].mxu0
  %v889 = vadd.f32 0.0, %v888
  %v890 = vpop.f32.mrb[0].mxu0
  %891 = vdwg.mxu0
  %v892 = vmul.f32 %v886, %v772
  %v893 = vmul.f32 %v889, %v772
  %v894 = vadd.f32 %v764, %v892
  %v895 = vadd.f32 %v765, %v893
  %s896 = scalar_lea.vmem %s4, 3
  %v897 = vld [vmem:[%s896] sm:$0x1]
  %v899 = vlaneseq
  %v900 = vshrl.u32 %v899, 7
  %v901 = vsub.s32 0, %v900
  %v902 = vrot.slane %v897, %v901
  %v904 = vmul.f32 %v361, %v902
  %v905 = vmul.f32 %v364, %v902
  %v906 = vpack.c.bf16 %v905, %v904
  %v908 = vsel %vm169, %v906, 0
  %910 = vmatprep.subr.bf16.mxu0 0
  %911 = vmatpush1.bf16.xpose.msra.mxu0 %v517
  %912 = vmatprep.subr.bf16.mxu0 0
  %913 = vmatpush1.bf16.xpose.msra.mxu0 0
  %914 = vmatprep.subr.bf16.mxu0 0
  %915 = vmatpush1.bf16.xpose.msra.mxu0 0
  %916 = vmatprep.subr.bf16.mxu0 0
  %917 = vmatpush1.bf16.xpose.msra.mxu0 0
  %918 = vmatprep.subr.bf16.mxu0 0
  %919 = vmatpush1.bf16.xpose.msra.mxu0 0
  %920 = vmatprep.subr.bf16.mxu0 0
  %921 = vmatpush1.bf16.xpose.msra.mxu0 0
  %922 = vmatprep.subr.bf16.mxu0 0
  %923 = vmatpush1.bf16.xpose.msra.mxu0 0
  %924 = vmatprep.subr.bf16.mxu0 0
  %925 = vmatpush1.bf16.xpose.msra.mxu0 0
  %926 = vmatprep.subr.bf16.mxu0 0
  %927 = vmatpush1.bf16.xpose.msra.mxu0 0
  %928 = vmatprep.subr.bf16.mxu0 0
  %929 = vmatpush1.bf16.xpose.msra.mxu0 0
  %930 = vmatprep.subr.bf16.mxu0 0
  %931 = vmatpush1.bf16.xpose.msra.mxu0 0
  %932 = vmatprep.subr.bf16.mxu0 0
  %933 = vmatpush1.bf16.xpose.msra.mxu0 0
  %934 = vmatprep.subr.bf16.mxu0 0
  %935 = vmatpush1.bf16.xpose.msra.mxu0 0
  %936 = vmatprep.subr.bf16.mxu0 0
  %937 = vmatpush1.bf16.xpose.msra.mxu0 0
  %938 = vmatprep.subr.bf16.mxu0 0
  %939 = vmatpush1.bf16.xpose.msra.mxu0 0
  %940 = vmatprep.subr.bf16.mxu0 0
  %941 = vmatpush1.bf16.xpose.msra.mxu0 0
  %942 = vmatprep.mubr.bf16.mxu0 0
  %943 = vmatmul.mubr.bf16.gmra.mrb[0].mxu0 %v908
  %v944 = vpop.f32.mrb[0].mxu0
  %v945 = vadd.f32 0.0, %v944
  %v946 = vpop.f32.mrb[0].mxu0
  %v947 = vpop.f32.mrb[0].mxu0
  %v948 = vadd.f32 0.0, %v947
  %v949 = vpop.f32.mrb[0].mxu0
  %950 = vdwg.mxu0
  %v951 = vmul.f32 %v945, 0.35355338
  %v952 = vmul.f32 %v948, 0.35355338
  %v953 = vadd.f32 %v951, %v501
  %v954 = vadd.f32 %v952, %v502
  %v955 = vsel %vm564, %v953, -inf
  %956 = vmax.xlane.f32.xlu0 %v955
  %v957 = vpop.xlane.xlu0 %956
  %v958 = vsel %vm564, %v954, -inf
  %959 = vmax.xlane.f32.xlu0 %v958
  %v960 = vpop.xlane.xlu0 %959
  %v961 = vsub.f32 %v953, %v957
  %v962 = vsub.f32 %v954, %v960
  %v963 = vmul.f32 %v961, 1.442695
  %v964 = vpow.pop %v963
  %v965 = vmul.f32 %v962, 1.442695
  %v966 = vpow.pop %v965
  %v967 = vsel %vm564, %v964, 0.0
  %968 = vadd.xlane.f32.xlu0 %v967
  %v969 = vpop.xlane.xlu0 %968
  %v970 = vsel %vm564, %v966, 0.0
  %971 = vadd.xlane.f32.xlu0 %v970
  %v972 = vpop.xlane.xlu0 %971
  %v973 = vrcp.pop %v969
  %v974 = vrcp.pop %v972
  %v975 = vmul.f32 %v964, %v973
  %v976 = vmul.f32 %v966, %v974
  %v977 = vpack.c.bf16 %v976, %v975
  %v979 = vsel %vm564, %v977, 0
  %981 = vmatprep.subr.bf16.mxu0 0
  %982 = vmatpush1.bf16.msra.mxu0 %v500
  %983 = vmatprep.subr.bf16.mxu0 0
  %984 = vmatpush1.bf16.msra.mxu0 0
  %985 = vmatprep.subr.bf16.mxu0 0
  %986 = vmatpush1.bf16.msra.mxu0 0
  %987 = vmatprep.subr.bf16.mxu0 0
  %988 = vmatpush1.bf16.msra.mxu0 0
  %989 = vmatprep.subr.bf16.mxu0 0
  %990 = vmatpush1.bf16.msra.mxu0 0
  %991 = vmatprep.subr.bf16.mxu0 0
  %992 = vmatpush1.bf16.msra.mxu0 0
  %993 = vmatprep.subr.bf16.mxu0 0
  %994 = vmatpush1.bf16.msra.mxu0 0
  %995 = vmatprep.subr.bf16.mxu0 0
  %996 = vmatpush1.bf16.msra.mxu0 0
  %997 = vmatprep.subr.bf16.mxu0 0
  %998 = vmatpush1.bf16.msra.mxu0 0
  %999 = vmatprep.subr.bf16.mxu0 0
  %1000 = vmatpush1.bf16.msra.mxu0 0
  %1001 = vmatprep.subr.bf16.mxu0 0
  %1002 = vmatpush1.bf16.msra.mxu0 0
  %1003 = vmatprep.subr.bf16.mxu0 0
  %1004 = vmatpush1.bf16.msra.mxu0 0
  %1005 = vmatprep.subr.bf16.mxu0 0
  %1006 = vmatpush1.bf16.msra.mxu0 0
  %1007 = vmatprep.subr.bf16.mxu0 0
  %1008 = vmatpush1.bf16.msra.mxu0 0
  %1009 = vmatprep.subr.bf16.mxu0 0
  %1010 = vmatpush1.bf16.msra.mxu0 0
  %1011 = vmatprep.subr.bf16.mxu0 0
  %1012 = vmatpush1.bf16.msra.mxu0 0
  %1013 = vmatprep.mubr.bf16.mxu0 0
  %1014 = vmatmul.mubr.bf16.gmra.mrb[0].mxu0 %v979
  %v1015 = vpop.f32.mrb[0].mxu0
  %v1016 = vadd.f32 0.0, %v1015
  %v1017 = vpop.f32.mrb[0].mxu0
  %v1018 = vpop.f32.mrb[0].mxu0
  %v1019 = vadd.f32 0.0, %v1018
  %v1020 = vpop.f32.mrb[0].mxu0
  %1021 = vdwg.mxu0
  %v1022 = vmul.f32 %v1016, %v902
  %v1023 = vmul.f32 %v1019, %v902
  %v1024 = vadd.f32 %v894, %v1022
  %v1025 = vadd.f32 %v895, %v1023
  %v1026 = vpack.c.bf16 %v1025, %v1024
  %v1027 = vld [vmem:[%s18] sm:$0xf]
  %v1028 = vld [vmem:[%s18 + $0x4] sm:$0xf]
  %v1029 = vld [vmem:[%s18 + $0x8] sm:$0xf]
  %v1030 = vld [vmem:[%s18 + $0xc] sm:$0xf]
  %v1031 = vld [vmem:[%s19] sm:$0x1]
  %v1033 = vlaneseq
  %v1034 = vshrl.u32 %v1033, 7
  %v1035 = vsub.s32 0, %v1034
  %v1036 = vrot.slane %v1031, %v1035
  %v1042 = vunpack.c.l.b16 %v1027
  %v1043 = vunpack.c.l.b16 %v1028
  %v1044 = vunpack.c.l.b16 %v1029
  %v1045 = vunpack.c.l.b16 %v1030
  %v1046 = vpack.c.b16 %v1043, %v1042
  %v1047 = vpack.c.b16 %v1045, %v1044
  %v1051 = vsel %vm169, %v1026, 0
  %1053 = vmatprep.subr.bf16.mxu0 0
  %1054 = vmatpush1.bf16.msra.mxu0 %v1046
  %1055 = vmatprep.subr.bf16.mxu0 0
  %1056 = vmatpush1.bf16.msra.mxu0 %v1047
  %1057 = vmatprep.subr.bf16.mxu0 0
  %1058 = vmatpush1.bf16.msra.mxu0 0
  %1059 = vmatprep.subr.bf16.mxu0 0
  %1060 = vmatpush1.bf16.msra.mxu0 0
  %1061 = vmatprep.subr.bf16.mxu0 0
  %1062 = vmatpush1.bf16.msra.mxu0 0
  %1063 = vmatprep.subr.bf16.mxu0 0
  %1064 = vmatpush1.bf16.msra.mxu0 0
  %1065 = vmatprep.subr.bf16.mxu0 0
  %1066 = vmatpush1.bf16.msra.mxu0 0
  %1067 = vmatprep.subr.bf16.mxu0 0
  %1068 = vmatpush1.bf16.msra.mxu0 0
  %1069 = vmatprep.subr.bf16.mxu0 0
  %1070 = vmatpush1.bf16.msra.mxu0 0
  %1071 = vmatprep.subr.bf16.mxu0 0
  %1072 = vmatpush1.bf16.msra.mxu0 0
  %1073 = vmatprep.subr.bf16.mxu0 0
  %1074 = vmatpush1.bf16.msra.mxu0 0
  %1075 = vmatprep.subr.bf16.mxu0 0
  %1076 = vmatpush1.bf16.msra.mxu0 0
  %1077 = vmatprep.subr.bf16.mxu0 0
  %1078 = vmatpush1.bf16.msra.mxu0 0
  %1079 = vmatprep.subr.bf16.mxu0 0
  %1080 = vmatpush1.bf16.msra.mxu0 0
  %1081 = vmatprep.subr.bf16.mxu0 0
  %1082 = vmatpush1.bf16.msra.mxu0 0
  %1083 = vmatprep.subr.bf16.mxu0 0
  %1084 = vmatpush1.bf16.msra.mxu0 0
  %1085 = vmatprep.mubr.bf16.mxu0 0
  %1086 = vmatmul.mubr.bf16.gmra.mrb[0].mxu0 %v1051
  %v1087 = vpop.f32.mrb[0].mxu0
  %v1088 = vadd.f32 %v1036, %v1087
  %v1089 = vpop.f32.mrb[0].mxu0
  %v1090 = vpop.f32.mrb[0].mxu0
  %v1091 = vadd.f32 %v1036, %v1090
  %v1092 = vpop.f32.mrb[0].mxu0
  %1093 = vdwg.mxu0
  %v1094 = vld [vmem:[%s6] sm:$0xf]
  %v1095 = vld [vmem:[%s6 + $0x4] sm:$0xf]
  %v1096 = vld [vmem:[%s3] sm:$0x1]
  %v1099 = vunpack.c.l.b16 %v1094
  %v1100 = vunpack.c.l.b16 %v1095
  %v1101 = vpack.c.b16 %v1100, %v1099
  %vm1102 = vcmask 15360
  %v1104 = vsel %vm1102, %v1101, 0
  %vm1106 = vcmask 1040384
  %v1108 = vsel %vm1106, %v1096, 0
  %1110 = vmatprep.subr.bf16.mxu0 0
  %1111 = vmatpush1.bf16.msra.mxu0 %v1108
  %1112 = vmatprep.subr.bf16.mxu0 0
  %1113 = vmatpush1.bf16.msra.mxu0 0
  %1114 = vmatprep.subr.bf16.mxu0 0
  %1115 = vmatpush1.bf16.msra.mxu0 0
  %1116 = vmatprep.subr.bf16.mxu0 0
  %1117 = vmatpush1.bf16.msra.mxu0 0
  %1118 = vmatprep.subr.bf16.mxu0 0
  %1119 = vmatpush1.bf16.msra.mxu0 0
  %1120 = vmatprep.subr.bf16.mxu0 0
  %1121 = vmatpush1.bf16.msra.mxu0 0
  %1122 = vmatprep.subr.bf16.mxu0 0
  %1123 = vmatpush1.bf16.msra.mxu0 0
  %1124 = vmatprep.subr.bf16.mxu0 0
  %1125 = vmatpush1.bf16.msra.mxu0 0
  %1126 = vmatprep.subr.bf16.mxu0 0
  %1127 = vmatpush1.bf16.msra.mxu0 0
  %1128 = vmatprep.subr.bf16.mxu0 0
  %1129 = vmatpush1.bf16.msra.mxu0 0
  %1130 = vmatprep.subr.bf16.mxu0 0
  %1131 = vmatpush1.bf16.msra.mxu0 0
  %1132 = vmatprep.subr.bf16.mxu0 0
  %1133 = vmatpush1.bf16.msra.mxu0 0
  %1134 = vmatprep.subr.bf16.mxu0 0
  %1135 = vmatpush1.bf16.msra.mxu0 0
  %1136 = vmatprep.subr.bf16.mxu0 0
  %1137 = vmatpush1.bf16.msra.mxu0 0
  %1138 = vmatprep.subr.bf16.mxu0 0
  %1139 = vmatpush1.bf16.msra.mxu0 0
  %1140 = vmatprep.subr.bf16.mxu0 0
  %1141 = vmatpush1.bf16.msra.mxu0 0
  %1142 = vmatprep.mubr.bf16.mxu0 0
  %1143 = vmatmul.mubr.bf16.gmra.mrb[0].mxu0 %v1104
  %v1144 = vpop.f32.mrb[0].mxu0
  %v1145 = vadd.f32 0.0, %v1144
  %v1146 = vpop.f32.mrb[0].mxu0
  %v1147 = vpop.f32.mrb[0].mxu0
  %v1148 = vadd.f32 0.0, %v1147
  %v1149 = vpop.f32.mrb[0].mxu0
  %1150 = vdwg.mxu0
  %v1151 = vld [vmem:[%s20] sm:$0xf]
  %v1152 = vld [vmem:[%s20 + $0x4] sm:$0xf]
  %v1153 = vld [vmem:[%s20 + $0x8] sm:$0xf]
  %v1154 = vld [vmem:[%s20 + $0xc] sm:$0xf]
  %v1155 = vpack.c.bf16 %v1091, %v1088
  %v1156 = vld [vmem:[%s21] sm:$0xf]
  %v1157 = vld [vmem:[%s21 + $0x4] sm:$0xf]
  %v1158 = vld [vmem:[%s21 + $0x8] sm:$0xf]
  %v1159 = vld [vmem:[%s21 + $0xc] sm:$0xf]
  %v1164 = vunpack.c.l.b16 %v1156
  %v1165 = vunpack.c.l.b16 %v1157
  %v1166 = vunpack.c.l.b16 %v1158
  %v1167 = vunpack.c.l.b16 %v1159
  %v1168 = vpack.c.b16 %v1165, %v1164
  %v1169 = vpack.c.b16 %v1167, %v1166
  %v1173 = vsel %vm169, %v1155, 0
  %1175 = vmatprep.subr.bf16.mxu0 0
  %1176 = vmatpush1.bf16.msra.mxu0 %v1168
  %1177 = vmatprep.subr.bf16.mxu0 0
  %1178 = vmatpush1.bf16.msra.mxu0 %v1169
  %1179 = vmatprep.subr.bf16.mxu0 0
  %1180 = vmatpush1.bf16.msra.mxu0 0
  %1181 = vmatprep.subr.bf16.mxu0 0
  %1182 = vmatpush1.bf16.msra.mxu0 0
  %1183 = vmatprep.subr.bf16.mxu0 0
  %1184 = vmatpush1.bf16.msra.mxu0 0
  %1185 = vmatprep.subr.bf16.mxu0 0
  %1186 = vmatpush1.bf16.msra.mxu0 0
  %1187 = vmatprep.subr.bf16.mxu0 0
  %1188 = vmatpush1.bf16.msra.mxu0 0
  %1189 = vmatprep.subr.bf16.mxu0 0
  %1190 = vmatpush1.bf16.msra.mxu0 0
  %1191 = vmatprep.subr.bf16.mxu0 0
  %1192 = vmatpush1.bf16.msra.mxu0 0
  %1193 = vmatprep.subr.bf16.mxu0 0
  %1194 = vmatpush1.bf16.msra.mxu0 0
  %1195 = vmatprep.subr.bf16.mxu0 0
  %1196 = vmatpush1.bf16.msra.mxu0 0
  %1197 = vmatprep.subr.bf16.mxu0 0
  %1198 = vmatpush1.bf16.msra.mxu0 0
  %1199 = vmatprep.subr.bf16.mxu0 0
  %1200 = vmatpush1.bf16.msra.mxu0 0
  %1201 = vmatprep.subr.bf16.mxu0 0
  %1202 = vmatpush1.bf16.msra.mxu0 0
  %1203 = vmatprep.subr.bf16.mxu0 0
  %1204 = vmatpush1.bf16.msra.mxu0 0
  %1205 = vmatprep.subr.bf16.mxu0 0
  %1206 = vmatpush1.bf16.msra.mxu0 0
  %1207 = vmatprep.mubr.bf16.mxu0 0
  %1208 = vmatmul.mubr.bf16.gmra.mrb[0].mxu0 %v1173
  %v1209 = vpop.f32.mrb[0].mxu0
  %v1210 = vadd.f32 0.0, %v1209
  %v1211 = vpop.f32.mrb[0].mxu0
  %v1212 = vpop.f32.mrb[0].mxu0
  %v1213 = vadd.f32 0.0, %v1212
  %v1214 = vpop.f32.mrb[0].mxu0
  %1215 = vdwg.mxu0
  %v1220 = vunpack.c.l.b16 %v1151
  %v1221 = vunpack.c.l.b16 %v1152
  %v1222 = vunpack.c.l.b16 %v1153
  %v1223 = vunpack.c.l.b16 %v1154
  %v1224 = vpack.c.b16 %v1221, %v1220
  %v1225 = vpack.c.b16 %v1223, %v1222
  %1228 = vmatprep.subr.bf16.mxu0 0
  %1229 = vmatpush1.bf16.msra.mxu0 %v1224
  %1230 = vmatprep.subr.bf16.mxu0 0
  %1231 = vmatpush1.bf16.msra.mxu0 %v1225
  %1232 = vmatprep.subr.bf16.mxu0 0
  %1233 = vmatpush1.bf16.msra.mxu0 0
  %1234 = vmatprep.subr.bf16.mxu0 0
  %1235 = vmatpush1.bf16.msra.mxu0 0
  %1236 = vmatprep.subr.bf16.mxu0 0
  %1237 = vmatpush1.bf16.msra.mxu0 0
  %1238 = vmatprep.subr.bf16.mxu0 0
  %1239 = vmatpush1.bf16.msra.mxu0 0
  %1240 = vmatprep.subr.bf16.mxu0 0
  %1241 = vmatpush1.bf16.msra.mxu0 0
  %1242 = vmatprep.subr.bf16.mxu0 0
  %1243 = vmatpush1.bf16.msra.mxu0 0
  %1244 = vmatprep.subr.bf16.mxu0 0
  %1245 = vmatpush1.bf16.msra.mxu0 0
  %1246 = vmatprep.subr.bf16.mxu0 0
  %1247 = vmatpush1.bf16.msra.mxu0 0
  %1248 = vmatprep.subr.bf16.mxu0 0
  %1249 = vmatpush1.bf16.msra.mxu0 0
  %1250 = vmatprep.subr.bf16.mxu0 0
  %1251 = vmatpush1.bf16.msra.mxu0 0
  %1252 = vmatprep.subr.bf16.mxu0 0
  %1253 = vmatpush1.bf16.msra.mxu0 0
  %1254 = vmatprep.subr.bf16.mxu0 0
  %1255 = vmatpush1.bf16.msra.mxu0 0
  %1256 = vmatprep.subr.bf16.mxu0 0
  %1257 = vmatpush1.bf16.msra.mxu0 0
  %1258 = vmatprep.subr.bf16.mxu0 0
  %1259 = vmatpush1.bf16.msra.mxu0 0
  %1260 = vmatprep.mubr.bf16.mxu0 0
  %1261 = vmatmul.mubr.bf16.gmra.mrb[0].mxu0 %v324
  %v1262 = vpop.f32.mrb[0].mxu0
  %v1263 = vadd.f32 %v1210, %v1262
  %v1264 = vpop.f32.mrb[0].mxu0
  %v1265 = vpop.f32.mrb[0].mxu0
  %v1266 = vadd.f32 %v1213, %v1265
  %v1267 = vpop.f32.mrb[0].mxu0
  %1268 = vdwg.mxu0
  %v1269 = vadd.f32 %v1263, %v1145
  %v1270 = vadd.f32 %v1266, %v1148
  %v1271 = vld [vmem:[%s22] sm:$0x1]
  %v1273 = vlaneseq
  %v1274 = vshrl.u32 %v1273, 7
  %v1275 = vsub.s32 0, %v1274
  %v1276 = vrot.slane %v1271, %v1275
  %v1278 = vadd.f32 %v1269, %v1276
  %v1279 = vadd.f32 %v1270, %v1276
  %v1280 = vmax.f32 %v1278, 0.0
  %v1281 = vmax.f32 %v1279, 0.0
  %v1282 = vpack.c.bf16 %v1281, %v1280
  %v1283 = vld [vmem:[%s23] sm:$0xf]
  %v1284 = vld [vmem:[%s23 + $0x4] sm:$0xf]
  %v1285 = vld [vmem:[%s23 + $0x8] sm:$0xf]
  %v1286 = vld [vmem:[%s23 + $0xc] sm:$0xf]
  %v1287 = vld [vmem:[%s24] sm:$0x1]
  %v1289 = vlaneseq
  %v1290 = vshrl.u32 %v1289, 7
  %v1291 = vsub.s32 0, %v1290
  %v1292 = vrot.slane %v1287, %v1291
  %v1298 = vunpack.c.l.b16 %v1283
  %v1299 = vunpack.c.l.b16 %v1284
  %v1300 = vunpack.c.l.b16 %v1285
  %v1301 = vunpack.c.l.b16 %v1286
  %v1302 = vpack.c.b16 %v1299, %v1298
  %v1303 = vpack.c.b16 %v1301, %v1300
  %v1307 = vsel %vm169, %v1282, 0
  %1309 = vmatprep.subr.bf16.mxu0 0
  %1310 = vmatpush1.bf16.msra.mxu0 %v1302
  %1311 = vmatprep.subr.bf16.mxu0 0
  %1312 = vmatpush1.bf16.msra.mxu0 %v1303
  %1313 = vmatprep.subr.bf16.mxu0 0
  %1314 = vmatpush1.bf16.msra.mxu0 0
  %1315 = vmatprep.subr.bf16.mxu0 0
  %1316 = vmatpush1.bf16.msra.mxu0 0
  %1317 = vmatprep.subr.bf16.mxu0 0
  %1318 = vmatpush1.bf16.msra.mxu0 0
  %1319 = vmatprep.subr.bf16.mxu0 0
  %1320 = vmatpush1.bf16.msra.mxu0 0
  %1321 = vmatprep.subr.bf16.mxu0 0
  %1322 = vmatpush1.bf16.msra.mxu0 0
  %1323 = vmatprep.subr.bf16.mxu0 0
  %1324 = vmatpush1.bf16.msra.mxu0 0
  %1325 = vmatprep.subr.bf16.mxu0 0
  %1326 = vmatpush1.bf16.msra.mxu0 0
  %1327 = vmatprep.subr.bf16.mxu0 0
  %1328 = vmatpush1.bf16.msra.mxu0 0
  %1329 = vmatprep.subr.bf16.mxu0 0
  %1330 = vmatpush1.bf16.msra.mxu0 0
  %1331 = vmatprep.subr.bf16.mxu0 0
  %1332 = vmatpush1.bf16.msra.mxu0 0
  %1333 = vmatprep.subr.bf16.mxu0 0
  %1334 = vmatpush1.bf16.msra.mxu0 0
  %1335 = vmatprep.subr.bf16.mxu0 0
  %1336 = vmatpush1.bf16.msra.mxu0 0
  %1337 = vmatprep.subr.bf16.mxu0 0
  %1338 = vmatpush1.bf16.msra.mxu0 0
  %1339 = vmatprep.subr.bf16.mxu0 0
  %1340 = vmatpush1.bf16.msra.mxu0 0
  %1341 = vmatprep.mubr.bf16.mxu0 0
  %1342 = vmatmul.mubr.bf16.gmra.mrb[0].mxu0 %v1307
  %v1343 = vpop.f32.mrb[0].mxu0
  %v1344 = vadd.f32 %v1292, %v1343
  %v1345 = vpop.f32.mrb[0].mxu0
  %v1346 = vpop.f32.mrb[0].mxu0
  %v1347 = vadd.f32 %v1292, %v1346
  %v1348 = vpop.f32.mrb[0].mxu0
  %1349 = vdwg.mxu0
  %v1350 = vmax.f32 %v1344, 0.0
  %v1351 = vmax.f32 %v1347, 0.0
  %v1352 = vpack.c.bf16 %v1351, %v1350
  %v1353 = vld [vmem:[%s25] sm:$0xf]
  %v1354 = vld [vmem:[%s25 + $0x4] sm:$0xf]
  %v1355 = vld [vmem:[%s25 + $0x8] sm:$0xf]
  %v1356 = vld [vmem:[%s25 + $0xc] sm:$0xf]
  %v1357 = vld [vmem:[%s26] sm:$0x1]
  %v1359 = vlaneseq
  %v1360 = vshrl.u32 %v1359, 7
  %v1361 = vsub.s32 0, %v1360
  %v1362 = vrot.slane %v1357, %v1361
  %v1368 = vunpack.c.l.b16 %v1353
  %v1369 = vunpack.c.l.b16 %v1354
  %v1370 = vunpack.c.l.b16 %v1355
  %v1371 = vunpack.c.l.b16 %v1356
  %v1372 = vpack.c.b16 %v1369, %v1368
  %v1373 = vpack.c.b16 %v1371, %v1370
  %v1377 = vsel %vm169, %v1352, 0
  %1379 = vmatprep.subr.bf16.mxu0 0
  %1380 = vmatpush1.bf16.msra.mxu0 %v1372
  %1381 = vmatprep.subr.bf16.mxu0 0
  %1382 = vmatpush1.bf16.msra.mxu0 %v1373
  %1383 = vmatprep.subr.bf16.mxu0 0
  %1384 = vmatpush1.bf16.msra.mxu0 0
  %1385 = vmatprep.subr.bf16.mxu0 0
  %1386 = vmatpush1.bf16.msra.mxu0 0
  %1387 = vmatprep.subr.bf16.mxu0 0
  %1388 = vmatpush1.bf16.msra.mxu0 0
  %1389 = vmatprep.subr.bf16.mxu0 0
  %1390 = vmatpush1.bf16.msra.mxu0 0
  %1391 = vmatprep.subr.bf16.mxu0 0
  %1392 = vmatpush1.bf16.msra.mxu0 0
  %1393 = vmatprep.subr.bf16.mxu0 0
  %1394 = vmatpush1.bf16.msra.mxu0 0
  %1395 = vmatprep.subr.bf16.mxu0 0
  %1396 = vmatpush1.bf16.msra.mxu0 0
  %1397 = vmatprep.subr.bf16.mxu0 0
  %1398 = vmatpush1.bf16.msra.mxu0 0
  %1399 = vmatprep.subr.bf16.mxu0 0
  %1400 = vmatpush1.bf16.msra.mxu0 0
  %1401 = vmatprep.subr.bf16.mxu0 0
  %1402 = vmatpush1.bf16.msra.mxu0 0
  %1403 = vmatprep.subr.bf16.mxu0 0
  %1404 = vmatpush1.bf16.msra.mxu0 0
  %1405 = vmatprep.subr.bf16.mxu0 0
  %1406 = vmatpush1.bf16.msra.mxu0 0
  %1407 = vmatprep.subr.bf16.mxu0 0
  %1408 = vmatpush1.bf16.msra.mxu0 0
  %1409 = vmatprep.subr.bf16.mxu0 0
  %1410 = vmatpush1.bf16.msra.mxu0 0
  %1411 = vmatprep.mubr.bf16.mxu0 0
  %1412 = vmatmul.mubr.bf16.gmra.mrb[0].mxu0 %v1377
  %v1413 = vpop.f32.mrb[0].mxu0
  %v1414 = vadd.f32 %v1362, %v1413
  %v1415 = vpop.f32.mrb[0].mxu0
  %v1416 = vpop.f32.mrb[0].mxu0
  %v1417 = vadd.f32 %v1362, %v1416
  %v1418 = vpop.f32.mrb[0].mxu0
  %1419 = vdwg.mxu0
  %1420 = vst.msk [vmem:[%s27] sm:$0xff] %vm1102, %v1414
  %1421 = vst.msk [vmem:[%s27 + $0x8] sm:$0xff] %vm1102, %v1417
  // Predicated region
  $region110: #{set_np_forward.5} parent=0 // pred_check
    _
  $region111: #{set_np_forward.5} parent=0 // pred_check_branch
    %1423 = sbr.rel (0) target = $region113
  $region112: #{set_np_forward.5} parent=0 // pred_region
    _
  $region113: #{set_np_forward.5} parent=0 // pred_fallthru
    _
  // Predicated region
  $region114: #{set_np_forward.5} parent=0 // pred_check
    _
  $region115: #{set_np_forward.5} parent=0 // pred_check_branch
    %1425 = sbr.rel (0) target = $region117
  $region116: #{set_np_forward.5} parent=0 // pred_region
    _
  $region117: #{set_np_forward.5} parent=0 // pred_fallthru
    _

</llo_original>
